<compile_context>
chip_gen: v7x
topology: tpu7x:2x2x1
jax: 0.10.0
libtpu: 0.0.40
codegen_flags: <defaults>
</compile_context>

<pallas_src>
import functools
import math

import jax
import jax.numpy as jnp
from jax.experimental import pallas as pl
from jax.experimental.pallas import tpu as pltpu


# ------------------------------ fused kernel ------------------------------

def _decoder_kernel(
    # per-block inputs
    ids_ref, enc_ref, smask_ref, xmask_ref,
    # embeddings
    pos_ref, emb_ref,
    # self-attention (fused QKV, Q pre-scaled) + first LayerNorm
    sa_wqkv_ref, sa_bqkv_ref, sa_wo_ref, sa_bo_ref, ln_g_ref, ln_b_ref,
    # cross-attention: per-layer Q, all-layer fused KV, per-layer out proj
    ca_wq_ref, ca_bq_ref, ca_wkv_ref, ca_bkv_ref, ca_wo_ref, ca_bo_ref,
    # stacked per-layer LayerNorms
    ln2_g_ref, ln2_b_ref, ln3_g_ref, ln3_b_ref,
    # stacked per-layer FFN
    w1_ref, b1_ref, w2_ref, b2_ref,
    # classifier (lane-padded)
    cls_w_ref, cls_b_ref,
    # output
    out_ref,
    *, n_heads, n_layers, eps):
  vocab, hid = emb_ref.shape
  hd = hid // n_heads
  rows = ids_ref.shape[0]

  # ---- embedding: one-hot(token ids) @ emb_table + pos_emb (single vcmp) ----
  cls_iota = jax.lax.broadcasted_iota(jnp.int32, (rows, vocab), 1)
  onehot = (cls_iota == ids_ref[...]).astype(jnp.float32)
  x = jnp.dot(onehot, emb_ref[...], preferred_element_type=jnp.float32) + pos_ref[...]

  smask = smask_ref[...]   # (rows, rows)     additive: 0 keep / -1e10 masked
  xmask = xmask_ref[...]   # (rows, enc_rows) additive

  def attention(qsrc, q_off, kvsrc, k_off, v_off, mask_add, wo, bo):
    """Multi-head attention; heads accumulate directly through row slices of
    Wo (no lane concat).  Softmax scale already folded into Q weights."""
    acc = None
    for h in range(n_heads):
      qh = qsrc[:, q_off + h * hd:q_off + (h + 1) * hd]
      kh = kvsrc[:, k_off + h * hd:k_off + (h + 1) * hd]
      vh = kvsrc[:, v_off + h * hd:v_off + (h + 1) * hd]
      e = jax.lax.dot_general(qh, kh, (((1,), (1,)), ((), ())),
                              preferred_element_type=jnp.float32) + mask_add
      e = e - jnp.max(e, axis=-1, keepdims=True)
      p = jnp.exp(e)
      p = p * pl.reciprocal(jnp.sum(p, axis=-1, keepdims=True), approx=True)
      head = jnp.dot(p, vh, preferred_element_type=jnp.float32)          # (rows, hd)
      term = jnp.dot(head, wo[h * hd:(h + 1) * hd, :],                    # sublane-aligned slice
                     preferred_element_type=jnp.float32)
      acc = term if acc is None else acc + term
    return acc + bo

  def add_ln(y, skip, g, b):
    z = y + skip
    mean = jnp.mean(z, axis=-1, keepdims=True)
    var = jnp.mean(jnp.square(z - mean), axis=-1, keepdims=True)
    return (z - mean) * jax.lax.rsqrt(var + eps) * g + b

  # ---- self-attention (fused QKV) + residual + LayerNorm ----
  skip = x
  qkv = jnp.dot(x, sa_wqkv_ref[...], preferred_element_type=jnp.float32) + sa_bqkv_ref[...]
  y = attention(qkv, 0, qkv, hid, 2 * hid, smask, sa_wo_ref[...], sa_bo_ref[...])
  x = add_ln(y, skip, ln_g_ref[...], ln_b_ref[...])

  # ---- cross-attn K/V projection for ALL layers (loop-invariant, one wide matmul) ----
  enc = enc_ref[...]
  kv_all = (jnp.dot(enc, ca_wkv_ref[...], preferred_element_type=jnp.float32)
            + ca_bkv_ref[...])                                           # (enc_rows, n_layers*2*D)

  # ---- TransformerDecoder stack: cross-attn + FFN ----
  for l in range(n_layers):
    skip = x
    q = jnp.dot(x, ca_wq_ref[l], preferred_element_type=jnp.float32) + ca_bq_ref[l]
    y = attention(q, 0, kv_all, l * 2 * hid, l * 2 * hid + hid, xmask,
                  ca_wo_ref[l], ca_bo_ref[l])
    x = add_ln(y, skip, ln2_g_ref[l], ln2_b_ref[l])

    skip = x
    hdn = jnp.maximum(
        jnp.dot(x, w1_ref[l], preferred_element_type=jnp.float32) + b1_ref[l], 0.0)
    y = jnp.dot(hdn, w2_ref[l], preferred_element_type=jnp.float32) + b2_ref[l]
    x = add_ln(y, skip, ln3_g_ref[l], ln3_b_ref[l])

  # ---- classifier (lane-padded to a multiple of 128 -> unmasked stores) ----
  out_ref[...] = (jnp.dot(x, cls_w_ref[...], preferred_element_type=jnp.float32)
                  + cls_b_ref[...]).astype(out_ref.dtype)


# ------------------------- wrapper / weight packing -------------------------

def pack_params(params, *, n_heads):
  """Pack PyTorch-layout params into fused / layer-stacked / pre-scaled arrays."""
  sa = params["self_attn"]
  layers = params["layers"]
  hid = params["phrase_emb"].shape[1]
  inv_scale = 1.0 / math.sqrt(hid // n_heads)
  n_classes = params["cls_w"].shape[1]
  c_pad = ((n_classes + 127) // 128) * 128
  stack = lambda f: jnp.stack([f(lp) for lp in layers], axis=0)
  return dict(
      emb=params["phrase_emb"],
      pos=params["pos_emb"],
      # softmax 1/sqrt(head_dim) folded into the Q projection (weights + bias)
      sa_wqkv=jnp.concatenate([sa["wq"] * inv_scale, sa["wk"], sa["wv"]], axis=1),
      sa_bqkv=jnp.concatenate([sa["bq"] * inv_scale, sa["bk"], sa["bv"]], axis=0)[None, :],
      sa_wo=sa["wo"], sa_bo=sa["bo"][None, :],
      ln_g=params["ln_g"][None, :], ln_b=params["ln_b"][None, :],
      ca_wq=stack(lambda lp: lp["enc_attn"]["wq"] * inv_scale),
      ca_bq=stack(lambda lp: (lp["enc_attn"]["bq"] * inv_scale)[None, :]),
      # all layers' cross-attn K/V projections fused into one (D, n_layers*2*D) matmul
      ca_wkv=jnp.concatenate(
          [jnp.concatenate([lp["enc_attn"]["wk"], lp["enc_attn"]["wv"]], axis=1)
           for lp in layers], axis=1),
      ca_bkv=jnp.concatenate(
          [jnp.concatenate([lp["enc_attn"]["bk"], lp["enc_attn"]["bv"]], axis=0)
           for lp in layers], axis=0)[None, :],
      ca_wo=stack(lambda lp: lp["enc_attn"]["wo"]),
      ca_bo=stack(lambda lp: lp["enc_attn"]["bo"][None, :]),
      ln2_g=stack(lambda lp: lp["ln2_g"][None, :]),
      ln2_b=stack(lambda lp: lp["ln2_b"][None, :]),
      ln3_g=stack(lambda lp: lp["ln3_g"][None, :]),
      ln3_b=stack(lambda lp: lp["ln3_b"][None, :]),
      w1=stack(lambda lp: lp["w1"]), b1=stack(lambda lp: lp["b1"][None, :]),
      w2=stack(lambda lp: lp["w2"]), b2=stack(lambda lp: lp["b2"][None, :]),
      # classifier padded to a lane-dense output width (sliced back in the wrapper)
      cls_w=jnp.pad(params["cls_w"], ((0, 0), (0, c_pad - n_classes))),
      cls_b=jnp.pad(params["cls_b"], (0, c_pad - n_classes))[None, :],
  )


def _use_batch_grid():
  """Batch on the grid only pays off on megacore chips (v7x: 2 TensorCores)."""
  try:
    kind = jax.devices()[0].device_kind.lower()
  except Exception:
    return False
  return ("v7" in kind) or ("7x" in kind)


def decoder_forward(packed, phrase_ids, enc_out, phrase_mask, seq_mask, *,
                    n_heads, fold_batch=True):
  B, L = phrase_ids.shape
  S = enc_out.shape[1]
  D = packed["emb"].shape[1]
  C = packed["emb"].shape[0]          # num_classes == vocab_len
  C_pad = packed["cls_w"].shape[1]
  n_layers = packed["ca_wq"].shape[0]

  neg = jnp.float32(-1e10)
  # additive key masks: 0 = attend, -1e10 = masked (matches masked_fill(mask==0, -1e10))
  p_key = jnp.where(phrase_mask.reshape(B, L) == 0, neg, jnp.float32(0.0))   # (B, L)
  s_key = jnp.where(seq_mask.reshape(B, S) == 0, neg, jnp.float32(0.0))      # (B, S)

  if fold_batch:
    # v5e/v6e: single TensorCore -> fold batch onto the sublane axis,
    # one grid step, block-diagonal batch masks in attention.
    n_blocks, rows, enc_rows = 1, B * L, B * S
    ids = phrase_ids.reshape(1, rows, 1).astype(jnp.int32)
    enc = enc_out.reshape(1, enc_rows, D)
    pos = jnp.tile(packed["pos"][:L], (B, 1))                                # (B*L, D)
    bq = jnp.repeat(jnp.arange(B), L)
    bk = jnp.repeat(jnp.arange(B), L)
    bs = jnp.repeat(jnp.arange(B), S)
    blk_self = jnp.where(bq[:, None] == bk[None, :], jnp.float32(0.0), neg)
    blk_cross = jnp.where(bq[:, None] == bs[None, :], jnp.float32(0.0), neg)
    self_add = (blk_self + p_key.reshape(-1)[None, :]).reshape(1, rows, rows)
    cross_add = (blk_cross + s_key.reshape(-1)[None, :]).reshape(1, rows, enc_rows)
  else:
    # v7x: batch on a "parallel" grid axis -> shards across the two TensorCores.
    n_blocks, rows, enc_rows = B, L, S
    ids = phrase_ids.reshape(B, L, 1).astype(jnp.int32)
    enc = enc_out
    pos = packed["pos"][:L]
    self_add = jnp.broadcast_to(p_key[:, None, :], (B, L, L))
    cross_add = jnp.broadcast_to(s_key[:, None, :], (B, L, S))

  vmem = pl.BlockSpec(memory_space=pltpu.MemorySpace.VMEM)   # whole array, loaded once

  kernel = functools.partial(_decoder_kernel, n_heads=n_heads,
                             n_layers=n_layers, eps=1e-5)

  out = pl.pallas_call(
      kernel,
      out_shape=jax.ShapeDtypeStruct((n_blocks, rows, C_pad), jnp.float32),
      grid=(n_blocks,),
      in_specs=[
          pl.BlockSpec((None, rows, 1), lambda b: (b, 0, 0)),         # token ids
          pl.BlockSpec((None, enc_rows, D), lambda b: (b, 0, 0)),     # enc_out
          pl.BlockSpec((None, rows, rows), lambda b: (b, 0, 0)),      # self additive mask
          pl.BlockSpec((None, rows, enc_rows), lambda b: (b, 0, 0)),  # cross additive mask
      ] + [vmem] * 24,                                                # all weights in VMEM
      out_specs=pl.BlockSpec((None, rows, C_pad), lambda b: (b, 0, 0)),
      compiler_params=pltpu.CompilerParams(dimension_semantics=("parallel",)),
  )(
      ids, enc, self_add, cross_add,
      pos, packed["emb"],
      packed["sa_wqkv"], packed["sa_bqkv"], packed["sa_wo"], packed["sa_bo"],
      packed["ln_g"], packed["ln_b"],
      packed["ca_wq"], packed["ca_bq"], packed["ca_wkv"], packed["ca_bkv"],
      packed["ca_wo"], packed["ca_bo"],
      packed["ln2_g"], packed["ln2_b"], packed["ln3_g"], packed["ln3_b"],
      packed["w1"], packed["b1"], packed["w2"], packed["b2"],
      packed["cls_w"], packed["cls_b"],
  )
  return out[:, :, :C].reshape(B, L, C)


# ------------------------------ params / init ------------------------------

def init_params(key, *, num_hid, num_ff, num_layers, num_classes, max_len):
  keys = iter(jax.random.split(key, 64))

  def dense(din, dout):
    w = jax.random.normal(next(keys), (din, dout), jnp.float32) * 0.02
    return w, jnp.zeros((dout,), jnp.float32)

  def mha():
    wq, bq = dense(num_hid, num_hid)
    wk, bk = dense(num_hid, num_hid)
    wv, bv = dense(num_hid, num_hid)
    wo, bo = dense(num_hid, num_hid)
    return dict(wq=wq, bq=bq, wk=wk, bk=bk, wv=wv, bv=bv, wo=wo, bo=bo)

  params = dict(
      phrase_emb=jax.random.normal(next(keys), (num_classes, num_hid), jnp.float32) * 0.02,
      pos_emb=jax.random.normal(next(keys), (max_len, num_hid), jnp.float32) * 0.02,
      self_attn=mha(),
      ln_g=jnp.ones((num_hid,), jnp.float32),
      ln_b=jnp.zeros((num_hid,), jnp.float32),
      layers=[],
  )
  for _ in range(num_layers):
    w1, b1 = dense(num_hid, num_ff)
    w2, b2 = dense(num_ff, num_hid)
    params["layers"].append(dict(
        enc_attn=mha(),
        ln2_g=jnp.ones((num_hid,), jnp.float32), ln2_b=jnp.zeros((num_hid,), jnp.float32),
        ln3_g=jnp.ones((num_hid,), jnp.float32), ln3_b=jnp.zeros((num_hid,), jnp.float32),
        w1=w1, b1=b1, w2=w2, b2=b2,
    ))
  cw, cb = dense(num_hid, num_classes)
  params["cls_w"], params["cls_b"] = cw, cb
  return params


# --------------------------- pure-JAX reference ---------------------------

def _ref_ln(x, g, b, eps=1e-5):
  mean = jnp.mean(x, axis=-1, keepdims=True)
  var = jnp.mean(jnp.square(x - mean), axis=-1, keepdims=True)
  return (x - mean) / jnp.sqrt(var + eps) * g + b


def _ref_mha(query, key, value, mask, p, n_heads):
  B, Lq, D = query.shape
  Lk = key.shape[1]
  Hd = D // n_heads
  q = (query @ p["wq"] + p["bq"]).reshape(B, Lq, n_heads, Hd).transpose(0, 2, 1, 3)
  k = (key @ p["wk"] + p["bk"]).reshape(B, Lk, n_heads, Hd).transpose(0, 2, 1, 3)
  v = (value @ p["wv"] + p["bv"]).reshape(B, Lk, n_heads, Hd).transpose(0, 2, 1, 3)
  energy = jnp.einsum("bhqd,bhkd->bhqk", q, k) / math.sqrt(Hd)
  energy = jnp.where(mask == 0, -1e10, energy)
  attn = jax.nn.softmax(energy, axis=-1)
  ctx = jnp.einsum("bhqk,bhkd->bhqd", attn, v).transpose(0, 2, 1, 3).reshape(B, Lq, D)
  return ctx @ p["wo"] + p["bo"]


def ref_forward(params, phrase_ids, enc_out, phrase_mask, seq_mask, n_heads):
  L = phrase_ids.shape[1]
  x = jnp.take(params["phrase_emb"], phrase_ids, axis=0) + params["pos_emb"][:L][None]
  x = _ref_ln(_ref_mha(x, x, x, phrase_mask, params["self_attn"], n_heads) + x,
              params["ln_g"], params["ln_b"])
  for lp in params["layers"]:
    x = _ref_ln(_ref_mha(x, enc_out, enc_out, seq_mask, lp["enc_attn"], n_heads) + x,
                lp["ln2_g"], lp["ln2_b"])
    h = jax.nn.relu(x @ lp["w1"] + lp["b1"]) @ lp["w2"] + lp["b2"]
    x = _ref_ln(h + x, lp["ln3_g"], lp["ln3_b"])
  return x @ params["cls_w"] + params["cls_b"]


# ----------------------------------- main -----------------------------------

if __name__ == "__main__":
  NUM_HID, NUM_HEAD, NUM_FF = 32, 4, 64
  NUM_LAYERS, NUM_CLASSES, MAX_PHRASE_LEN = 2, 16, 8
  B, L, S = 2, 8, 16   # batch, phrase length, encoder sequence length

  root = jax.random.PRNGKey(0)
  k_param, k_ids, k_enc = jax.random.split(root, 3)

  params = init_params(k_param, num_hid=NUM_HID, num_ff=NUM_FF,
                       num_layers=NUM_LAYERS, num_classes=NUM_CLASSES,
                       max_len=MAX_PHRASE_LEN)
  packed = pack_params(params, n_heads=NUM_HEAD)

  phrase_ids = jax.random.randint(k_ids, (B, L), 0, NUM_CLASSES, dtype=jnp.int32)
  enc_out = jax.random.normal(k_enc, (B, S, NUM_HID), jnp.float32)
  # padding masks, shape [B, 1, 1, len]; 1 = attend, 0 = masked (masked_fill(mask==0, -1e10))
  phrase_mask = jnp.ones((B, 1, 1, L), jnp.float32).at[:, :, :, L - 2:].set(0.0)
  seq_mask = jnp.ones((B, 1, 1, S), jnp.float32).at[1, :, :, S - 4:].set(0.0)

  # v7x: batch on the parallel grid (2 TCs).  v5e/v6e: fold batch into the kernel.
  fold_batch = not _use_batch_grid()
  fwd = jax.jit(functools.partial(decoder_forward, n_heads=NUM_HEAD,
                                  fold_batch=fold_batch))
  out = jax.block_until_ready(fwd(packed, phrase_ids, enc_out, phrase_mask, seq_mask))

  ref = ref_forward(params, phrase_ids, enc_out, phrase_mask, seq_mask, NUM_HEAD)
  assert out.shape == (B, L, NUM_CLASSES), out.shape
  assert jnp.allclose(out, ref, atol=1e-2, rtol=1e-2), float(jnp.max(jnp.abs(out - ref)))
  print("KERNEL_OK")
</pallas_src>

<mosaic_0001>
module attributes {stable_mosaic.version = 11 : i64} {
  func.func @_decoder_kernel(%arg0: i32, %arg1: memref<1x16x1xi32, #tpu.memory_space<vmem>>, %arg2: memref<1x32x32xf32, #tpu.memory_space<vmem>>, %arg3: memref<1x16x16xf32, #tpu.memory_space<vmem>>, %arg4: memref<1x16x32xf32, #tpu.memory_space<vmem>>, %arg5: memref<16x32xf32, #tpu.memory_space<vmem>>, %arg6: memref<16x32xf32, #tpu.memory_space<vmem>>, %arg7: memref<32x96xf32, #tpu.memory_space<vmem>>, %arg8: memref<1x96xf32, #tpu.memory_space<vmem>>, %arg9: memref<32x32xf32, #tpu.memory_space<vmem>>, %arg10: memref<1x32xf32, #tpu.memory_space<vmem>>, %arg11: memref<1x32xf32, #tpu.memory_space<vmem>>, %arg12: memref<1x32xf32, #tpu.memory_space<vmem>>, %arg13: memref<2x32x32xf32, #tpu.memory_space<vmem>>, %arg14: memref<2x1x32xf32, #tpu.memory_space<vmem>>, %arg15: memref<32x128xf32, #tpu.memory_space<vmem>>, %arg16: memref<1x128xf32, #tpu.memory_space<vmem>>, %arg17: memref<2x32x32xf32, #tpu.memory_space<vmem>>, %arg18: memref<2x1x32xf32, #tpu.memory_space<vmem>>, %arg19: memref<2x1x32xf32, #tpu.memory_space<vmem>>, %arg20: memref<2x1x32xf32, #tpu.memory_space<vmem>>, %arg21: memref<2x1x32xf32, #tpu.memory_space<vmem>>, %arg22: memref<2x1x32xf32, #tpu.memory_space<vmem>>, %arg23: memref<2x32x64xf32, #tpu.memory_space<vmem>>, %arg24: memref<2x1x64xf32, #tpu.memory_space<vmem>>, %arg25: memref<2x64x32xf32, #tpu.memory_space<vmem>>, %arg26: memref<2x1x32xf32, #tpu.memory_space<vmem>>, %arg27: memref<32x128xf32, #tpu.memory_space<vmem>>, %arg28: memref<1x128xf32, #tpu.memory_space<vmem>>, %arg29: memref<1x16x128xf32, #tpu.memory_space<vmem>>) attributes {dimension_semantics = [#tpu.dimension_semantics<parallel>], iteration_bounds = array<i64: 1>, scalar_prefetch = 0 : i64, scratch_operands = 0 : i64, tpu.core_type = #tpu.core_type<tc>, window_params = [{transform_indices = @transform_0, window_bounds = array<i64: 1, 16, 1>}, {transform_indices = @transform_1, window_bounds = array<i64: 1, 32, 32>}, {transform_indices = @transform_2, window_bounds = array<i64: 1, 16, 16>}, {transform_indices = @transform_3, window_bounds = array<i64: 1, 16, 32>}, {pipeline_mode = #tpu.pipeline_mode<synchronous>, transform_indices = @transform_4, window_bounds = array<i64: 16, 32>}, {pipeline_mode = #tpu.pipeline_mode<synchronous>, transform_indices = @transform_5, window_bounds = array<i64: 16, 32>}, {pipeline_mode = #tpu.pipeline_mode<synchronous>, transform_indices = @transform_6, window_bounds = array<i64: 32, 96>}, {pipeline_mode = #tpu.pipeline_mode<synchronous>, transform_indices = @transform_7, window_bounds = array<i64: 1, 96>}, {pipeline_mode = #tpu.pipeline_mode<synchronous>, transform_indices = @transform_8, window_bounds = array<i64: 32, 32>}, {pipeline_mode = #tpu.pipeline_mode<synchronous>, transform_indices = @transform_9, window_bounds = array<i64: 1, 32>}, {pipeline_mode = #tpu.pipeline_mode<synchronous>, transform_indices = @transform_10, window_bounds = array<i64: 1, 32>}, {pipeline_mode = #tpu.pipeline_mode<synchronous>, transform_indices = @transform_11, window_bounds = array<i64: 1, 32>}, {pipeline_mode = #tpu.pipeline_mode<synchronous>, transform_indices = @transform_12, window_bounds = array<i64: 2, 32, 32>}, {pipeline_mode = #tpu.pipeline_mode<synchronous>, transform_indices = @transform_13, window_bounds = array<i64: 2, 1, 32>}, {pipeline_mode = #tpu.pipeline_mode<synchronous>, transform_indices = @transform_14, window_bounds = array<i64: 32, 128>}, {pipeline_mode = #tpu.pipeline_mode<synchronous>, transform_indices = @transform_15, window_bounds = array<i64: 1, 128>}, {pipeline_mode = #tpu.pipeline_mode<synchronous>, transform_indices = @transform_16, window_bounds = array<i64: 2, 32, 32>}, {pipeline_mode = #tpu.pipeline_mode<synchronous>, transform_indices = @transform_17, window_bounds = array<i64: 2, 1, 32>}, {pipeline_mode = #tpu.pipeline_mode<synchronous>, transform_indices = @transform_18, window_bounds = array<i64: 2, 1, 32>}, {pipeline_mode = #tpu.pipeline_mode<synchronous>, transform_indices = @transform_19, window_bounds = array<i64: 2, 1, 32>}, {pipeline_mode = #tpu.pipeline_mode<synchronous>, transform_indices = @transform_20, window_bounds = array<i64: 2, 1, 32>}, {pipeline_mode = #tpu.pipeline_mode<synchronous>, transform_indices = @transform_21, window_bounds = array<i64: 2, 1, 32>}, {pipeline_mode = #tpu.pipeline_mode<synchronous>, transform_indices = @transform_22, window_bounds = array<i64: 2, 32, 64>}, {pipeline_mode = #tpu.pipeline_mode<synchronous>, transform_indices = @transform_23, window_bounds = array<i64: 2, 1, 64>}, {pipeline_mode = #tpu.pipeline_mode<synchronous>, transform_indices = @transform_24, window_bounds = array<i64: 2, 64, 32>}, {pipeline_mode = #tpu.pipeline_mode<synchronous>, transform_indices = @transform_25, window_bounds = array<i64: 2, 1, 32>}, {pipeline_mode = #tpu.pipeline_mode<synchronous>, transform_indices = @transform_26, window_bounds = array<i64: 32, 128>}, {pipeline_mode = #tpu.pipeline_mode<synchronous>, transform_indices = @transform_27, window_bounds = array<i64: 1, 128>}, {transform_indices = @transform_28, window_bounds = array<i64: 1, 16, 128>}]} {
    %0 = tpu.iota {dimensions = array<i32: 1>} : vector<16x16xi32>
    %c0 = arith.constant 0 : index
    %c0_0 = arith.constant 0 : index
    %c0_1 = arith.constant 0 : index
    %1 = vector.load %arg1[%c0, %c0_0, %c0_1] : memref<1x16x1xi32, #tpu.memory_space<vmem>>, vector<1x16x1xi32>
    %2 = vector.shape_cast %1 : vector<1x16x1xi32> to vector<16x1xi32>
    %3 = vector.broadcast %2 : vector<16x1xi32> to vector<16x16xi32>
    %4 = arith.cmpi eq, %0, %3 : vector<16x16xi32>
    %5 = arith.extui %4 : vector<16x16xi1> to vector<16x16xi32>
    %6 = arith.sitofp %5 : vector<16x16xi32> to vector<16x16xf32>
    %c0_2 = arith.constant 0 : index
    %c0_3 = arith.constant 0 : index
    %7 = vector.load %arg6[%c0_2, %c0_3] : memref<16x32xf32, #tpu.memory_space<vmem>>, vector<16x32xf32>
    %cst = arith.constant dense<0.000000e+00> : vector<16x32xf32>
    %8 = tpu.matmul %6, %7, %cst {dimension_numbers = #tpu.dot_dimension_numbers<[1], [0], [0], [1], [0, 0, 1, 1], [], []>} : vector<16x16xf32>, vector<16x32xf32>, vector<16x32xf32> -> vector<16x32xf32>
    %c0_4 = arith.constant 0 : index
    %c0_5 = arith.constant 0 : index
    %9 = vector.load %arg5[%c0_4, %c0_5] : memref<16x32xf32, #tpu.memory_space<vmem>>, vector<16x32xf32>
    %10 = arith.addf %8, %9 : vector<16x32xf32>
    %c0_6 = arith.constant 0 : index
    %c0_7 = arith.constant 0 : index
    %c0_8 = arith.constant 0 : index
    %11 = vector.load %arg3[%c0_6, %c0_7, %c0_8] : memref<1x16x16xf32, #tpu.memory_space<vmem>>, vector<1x16x16xf32>
    %12 = vector.shape_cast %11 : vector<1x16x16xf32> to vector<16x16xf32>
    %c0_9 = arith.constant 0 : index
    %c0_10 = arith.constant 0 : index
    %c0_11 = arith.constant 0 : index
    %13 = vector.load %arg4[%c0_9, %c0_10, %c0_11] : memref<1x16x32xf32, #tpu.memory_space<vmem>>, vector<1x16x32xf32>
    %14 = vector.shape_cast %13 : vector<1x16x32xf32> to vector<16x32xf32>
    %c0_12 = arith.constant 0 : index
    %c0_13 = arith.constant 0 : index
    %15 = vector.load %arg7[%c0_12, %c0_13] : memref<32x96xf32, #tpu.memory_space<vmem>>, vector<32x96xf32>
    %cst_14 = arith.constant dense<0.000000e+00> : vector<16x96xf32>
    %16 = tpu.matmul %10, %15, %cst_14 {dimension_numbers = #tpu.dot_dimension_numbers<[1], [0], [0], [1], [0, 0, 1, 1], [], []>} : vector<16x32xf32>, vector<32x96xf32>, vector<16x96xf32> -> vector<16x96xf32>
    %c0_15 = arith.constant 0 : index
    %c0_16 = arith.constant 0 : index
    %17 = vector.load %arg8[%c0_15, %c0_16] : memref<1x96xf32, #tpu.memory_space<vmem>>, vector<1x96xf32>
    %18 = vector.broadcast %17 : vector<1x96xf32> to vector<16x96xf32>
    %19 = arith.addf %16, %18 : vector<16x96xf32>
    %c0_17 = arith.constant 0 : index
    %c0_18 = arith.constant 0 : index
    %20 = vector.load %arg9[%c0_17, %c0_18] : memref<32x32xf32, #tpu.memory_space<vmem>>, vector<32x32xf32>
    %c0_19 = arith.constant 0 : index
    %c0_20 = arith.constant 0 : index
    %21 = vector.load %arg10[%c0_19, %c0_20] : memref<1x32xf32, #tpu.memory_space<vmem>>, vector<1x32xf32>
    %22 = vector.extract_strided_slice %19 {offsets = [0, 0], sizes = [16, 8], strides = [1, 1]} : vector<16x96xf32> to vector<16x8xf32>
    %23 = vector.extract_strided_slice %19 {offsets = [0, 32], sizes = [16, 8], strides = [1, 1]} : vector<16x96xf32> to vector<16x8xf32>
    %24 = vector.extract_strided_slice %19 {offsets = [0, 64], sizes = [16, 8], strides = [1, 1]} : vector<16x96xf32> to vector<16x8xf32>
    %cst_21 = arith.constant dense<0.000000e+00> : vector<16x16xf32>
    %25 = tpu.matmul %22, %23, %cst_21 {dimension_numbers = #tpu.dot_dimension_numbers<[1], [1], [0], [0], [0, 0, 1, 0], [], []>} : vector<16x8xf32>, vector<16x8xf32>, vector<16x16xf32> -> vector<16x16xf32>
    %26 = arith.addf %25, %12 : vector<16x16xf32>
    %cst_22 = arith.constant dense<0xFF800000> : vector<16xf32>
    %27 = vector.multi_reduction <maximumf>, %26, %cst_22 [1] : vector<16x16xf32> to vector<16xf32>
    %28 = vector.shape_cast %27 : vector<16xf32> to vector<16x1xf32>
    %29 = vector.broadcast %28 : vector<16x1xf32> to vector<16x16xf32>
    %30 = arith.subf %26, %29 : vector<16x16xf32>
    %31 = math.exp %30 : vector<16x16xf32>
    %cst_23 = arith.constant dense<0.000000e+00> : vector<16xf32>
    %32 = vector.multi_reduction <add>, %31, %cst_23 [1] : vector<16x16xf32> to vector<16xf32>
    %33 = vector.shape_cast %32 : vector<16xf32> to vector<16x1xf32>
    %34 = tpu.reciprocal %33 {approx = true} : vector<16x1xf32> -> vector<16x1xf32>
    %35 = vector.broadcast %34 : vector<16x1xf32> to vector<16x16xf32>
    %36 = arith.mulf %31, %35 : vector<16x16xf32>
    %cst_24 = arith.constant dense<0.000000e+00> : vector<16x8xf32>
    %37 = tpu.matmul %36, %24, %cst_24 {dimension_numbers = #tpu.dot_dimension_numbers<[1], [0], [0], [1], [0, 0, 1, 1], [], []>} : vector<16x16xf32>, vector<16x8xf32>, vector<16x8xf32> -> vector<16x8xf32>
    %38 = vector.extract_strided_slice %20 {offsets = [0, 0], sizes = [8, 32], strides = [1, 1]} : vector<32x32xf32> to vector<8x32xf32>
    %cst_25 = arith.constant dense<0.000000e+00> : vector<16x32xf32>
    %39 = tpu.matmul %37, %38, %cst_25 {dimension_numbers = #tpu.dot_dimension_numbers<[1], [0], [0], [1], [0, 0, 1, 1], [], []>} : vector<16x8xf32>, vector<8x32xf32>, vector<16x32xf32> -> vector<16x32xf32>
    %40 = vector.extract_strided_slice %19 {offsets = [0, 8], sizes = [16, 8], strides = [1, 1]} : vector<16x96xf32> to vector<16x8xf32>
    %41 = vector.extract_strided_slice %19 {offsets = [0, 40], sizes = [16, 8], strides = [1, 1]} : vector<16x96xf32> to vector<16x8xf32>
    %42 = vector.extract_strided_slice %19 {offsets = [0, 72], sizes = [16, 8], strides = [1, 1]} : vector<16x96xf32> to vector<16x8xf32>
    %cst_26 = arith.constant dense<0.000000e+00> : vector<16x16xf32>
    %43 = tpu.matmul %40, %41, %cst_26 {dimension_numbers = #tpu.dot_dimension_numbers<[1], [1], [0], [0], [0, 0, 1, 0], [], []>} : vector<16x8xf32>, vector<16x8xf32>, vector<16x16xf32> -> vector<16x16xf32>
    %44 = arith.addf %43, %12 : vector<16x16xf32>
    %cst_27 = arith.constant dense<0xFF800000> : vector<16xf32>
    %45 = vector.multi_reduction <maximumf>, %44, %cst_27 [1] : vector<16x16xf32> to vector<16xf32>
    %46 = vector.shape_cast %45 : vector<16xf32> to vector<16x1xf32>
    %47 = vector.broadcast %46 : vector<16x1xf32> to vector<16x16xf32>
    %48 = arith.subf %44, %47 : vector<16x16xf32>
    %49 = math.exp %48 : vector<16x16xf32>
    %cst_28 = arith.constant dense<0.000000e+00> : vector<16xf32>
    %50 = vector.multi_reduction <add>, %49, %cst_28 [1] : vector<16x16xf32> to vector<16xf32>
    %51 = vector.shape_cast %50 : vector<16xf32> to vector<16x1xf32>
    %52 = tpu.reciprocal %51 {approx = true} : vector<16x1xf32> -> vector<16x1xf32>
    %53 = vector.broadcast %52 : vector<16x1xf32> to vector<16x16xf32>
    %54 = arith.mulf %49, %53 : vector<16x16xf32>
    %cst_29 = arith.constant dense<0.000000e+00> : vector<16x8xf32>
    %55 = tpu.matmul %54, %42, %cst_29 {dimension_numbers = #tpu.dot_dimension_numbers<[1], [0], [0], [1], [0, 0, 1, 1], [], []>} : vector<16x16xf32>, vector<16x8xf32>, vector<16x8xf32> -> vector<16x8xf32>
    %56 = vector.extract_strided_slice %20 {offsets = [8, 0], sizes = [8, 32], strides = [1, 1]} : vector<32x32xf32> to vector<8x32xf32>
    %cst_30 = arith.constant dense<0.000000e+00> : vector<16x32xf32>
    %57 = tpu.matmul %55, %56, %cst_30 {dimension_numbers = #tpu.dot_dimension_numbers<[1], [0], [0], [1], [0, 0, 1, 1], [], []>} : vector<16x8xf32>, vector<8x32xf32>, vector<16x32xf32> -> vector<16x32xf32>
    %58 = arith.addf %39, %57 : vector<16x32xf32>
    %59 = vector.extract_strided_slice %19 {offsets = [0, 16], sizes = [16, 8], strides = [1, 1]} : vector<16x96xf32> to vector<16x8xf32>
    %60 = vector.extract_strided_slice %19 {offsets = [0, 48], sizes = [16, 8], strides = [1, 1]} : vector<16x96xf32> to vector<16x8xf32>
    %61 = vector.extract_strided_slice %19 {offsets = [0, 80], sizes = [16, 8], strides = [1, 1]} : vector<16x96xf32> to vector<16x8xf32>
    %cst_31 = arith.constant dense<0.000000e+00> : vector<16x16xf32>
    %62 = tpu.matmul %59, %60, %cst_31 {dimension_numbers = #tpu.dot_dimension_numbers<[1], [1], [0], [0], [0, 0, 1, 0], [], []>} : vector<16x8xf32>, vector<16x8xf32>, vector<16x16xf32> -> vector<16x16xf32>
    %63 = arith.addf %62, %12 : vector<16x16xf32>
    %cst_32 = arith.constant dense<0xFF800000> : vector<16xf32>
    %64 = vector.multi_reduction <maximumf>, %63, %cst_32 [1] : vector<16x16xf32> to vector<16xf32>
    %65 = vector.shape_cast %64 : vector<16xf32> to vector<16x1xf32>
    %66 = vector.broadcast %65 : vector<16x1xf32> to vector<16x16xf32>
    %67 = arith.subf %63, %66 : vector<16x16xf32>
    %68 = math.exp %67 : vector<16x16xf32>
    %cst_33 = arith.constant dense<0.000000e+00> : vector<16xf32>
    %69 = vector.multi_reduction <add>, %68, %cst_33 [1] : vector<16x16xf32> to vector<16xf32>
    %70 = vector.shape_cast %69 : vector<16xf32> to vector<16x1xf32>
    %71 = tpu.reciprocal %70 {approx = true} : vector<16x1xf32> -> vector<16x1xf32>
    %72 = vector.broadcast %71 : vector<16x1xf32> to vector<16x16xf32>
    %73 = arith.mulf %68, %72 : vector<16x16xf32>
    %cst_34 = arith.constant dense<0.000000e+00> : vector<16x8xf32>
    %74 = tpu.matmul %73, %61, %cst_34 {dimension_numbers = #tpu.dot_dimension_numbers<[1], [0], [0], [1], [0, 0, 1, 1], [], []>} : vector<16x16xf32>, vector<16x8xf32>, vector<16x8xf32> -> vector<16x8xf32>
    %75 = vector.extract_strided_slice %20 {offsets = [16, 0], sizes = [8, 32], strides = [1, 1]} : vector<32x32xf32> to vector<8x32xf32>
    %cst_35 = arith.constant dense<0.000000e+00> : vector<16x32xf32>
    %76 = tpu.matmul %74, %75, %cst_35 {dimension_numbers = #tpu.dot_dimension_numbers<[1], [0], [0], [1], [0, 0, 1, 1], [], []>} : vector<16x8xf32>, vector<8x32xf32>, vector<16x32xf32> -> vector<16x32xf32>
    %77 = arith.addf %58, %76 : vector<16x32xf32>
    %78 = vector.extract_strided_slice %19 {offsets = [0, 24], sizes = [16, 8], strides = [1, 1]} : vector<16x96xf32> to vector<16x8xf32>
    %79 = vector.extract_strided_slice %19 {offsets = [0, 56], sizes = [16, 8], strides = [1, 1]} : vector<16x96xf32> to vector<16x8xf32>
    %80 = vector.extract_strided_slice %19 {offsets = [0, 88], sizes = [16, 8], strides = [1, 1]} : vector<16x96xf32> to vector<16x8xf32>
    %cst_36 = arith.constant dense<0.000000e+00> : vector<16x16xf32>
    %81 = tpu.matmul %78, %79, %cst_36 {dimension_numbers = #tpu.dot_dimension_numbers<[1], [1], [0], [0], [0, 0, 1, 0], [], []>} : vector<16x8xf32>, vector<16x8xf32>, vector<16x16xf32> -> vector<16x16xf32>
    %82 = arith.addf %81, %12 : vector<16x16xf32>
    %cst_37 = arith.constant dense<0xFF800000> : vector<16xf32>
    %83 = vector.multi_reduction <maximumf>, %82, %cst_37 [1] : vector<16x16xf32> to vector<16xf32>
    %84 = vector.shape_cast %83 : vector<16xf32> to vector<16x1xf32>
    %85 = vector.broadcast %84 : vector<16x1xf32> to vector<16x16xf32>
    %86 = arith.subf %82, %85 : vector<16x16xf32>
    %87 = math.exp %86 : vector<16x16xf32>
    %cst_38 = arith.constant dense<0.000000e+00> : vector<16xf32>
    %88 = vector.multi_reduction <add>, %87, %cst_38 [1] : vector<16x16xf32> to vector<16xf32>
    %89 = vector.shape_cast %88 : vector<16xf32> to vector<16x1xf32>
    %90 = tpu.reciprocal %89 {approx = true} : vector<16x1xf32> -> vector<16x1xf32>
    %91 = vector.broadcast %90 : vector<16x1xf32> to vector<16x16xf32>
    %92 = arith.mulf %87, %91 : vector<16x16xf32>
    %cst_39 = arith.constant dense<0.000000e+00> : vector<16x8xf32>
    %93 = tpu.matmul %92, %80, %cst_39 {dimension_numbers = #tpu.dot_dimension_numbers<[1], [0], [0], [1], [0, 0, 1, 1], [], []>} : vector<16x16xf32>, vector<16x8xf32>, vector<16x8xf32> -> vector<16x8xf32>
    %94 = vector.extract_strided_slice %20 {offsets = [24, 0], sizes = [8, 32], strides = [1, 1]} : vector<32x32xf32> to vector<8x32xf32>
    %cst_40 = arith.constant dense<0.000000e+00> : vector<16x32xf32>
    %95 = tpu.matmul %93, %94, %cst_40 {dimension_numbers = #tpu.dot_dimension_numbers<[1], [0], [0], [1], [0, 0, 1, 1], [], []>} : vector<16x8xf32>, vector<8x32xf32>, vector<16x32xf32> -> vector<16x32xf32>
    %96 = arith.addf %77, %95 : vector<16x32xf32>
    %97 = vector.broadcast %21 : vector<1x32xf32> to vector<16x32xf32>
    %98 = arith.addf %96, %97 : vector<16x32xf32>
    %c0_41 = arith.constant 0 : index
    %c0_42 = arith.constant 0 : index
    %99 = vector.load %arg11[%c0_41, %c0_42] : memref<1x32xf32, #tpu.memory_space<vmem>>, vector<1x32xf32>
    %c0_43 = arith.constant 0 : index
    %c0_44 = arith.constant 0 : index
    %100 = vector.load %arg12[%c0_43, %c0_44] : memref<1x32xf32, #tpu.memory_space<vmem>>, vector<1x32xf32>
    %101 = arith.addf %98, %10 : vector<16x32xf32>
    %cst_45 = arith.constant dense<0.000000e+00> : vector<16xf32>
    %102 = vector.multi_reduction <add>, %101, %cst_45 [1] : vector<16x32xf32> to vector<16xf32>
    %103 = vector.shape_cast %102 : vector<16xf32> to vector<16x1xf32>
    %cst_46 = arith.constant 3.200000e+01 : f32
    %104 = vector.broadcast %cst_46 : f32 to vector<16x1xf32>
    %105 = arith.divf %103, %104 : vector<16x1xf32>
    %106 = vector.broadcast %105 : vector<16x1xf32> to vector<16x32xf32>
    %107 = arith.subf %101, %106 : vector<16x32xf32>
    %108 = arith.mulf %107, %107 : vector<16x32xf32>
    %cst_47 = arith.constant dense<0.000000e+00> : vector<16xf32>
    %109 = vector.multi_reduction <add>, %108, %cst_47 [1] : vector<16x32xf32> to vector<16xf32>
    %110 = vector.shape_cast %109 : vector<16xf32> to vector<16x1xf32>
    %cst_48 = arith.constant 3.200000e+01 : f32
    %111 = vector.broadcast %cst_48 : f32 to vector<16x1xf32>
    %112 = arith.divf %110, %111 : vector<16x1xf32>
    %113 = vector.broadcast %105 : vector<16x1xf32> to vector<16x32xf32>
    %114 = arith.subf %101, %113 : vector<16x32xf32>
    %cst_49 = arith.constant 9.99999974E-6 : f32
    %115 = vector.broadcast %cst_49 : f32 to vector<16x1xf32>
    %116 = arith.addf %112, %115 : vector<16x1xf32>
    %117 = math.rsqrt %116 : vector<16x1xf32>
    %118 = vector.broadcast %117 : vector<16x1xf32> to vector<16x32xf32>
    %119 = arith.mulf %114, %118 : vector<16x32xf32>
    %120 = vector.broadcast %99 : vector<1x32xf32> to vector<16x32xf32>
    %121 = arith.mulf %119, %120 : vector<16x32xf32>
    %122 = vector.broadcast %100 : vector<1x32xf32> to vector<16x32xf32>
    %123 = arith.addf %121, %122 : vector<16x32xf32>
    %c0_50 = arith.constant 0 : index
    %c0_51 = arith.constant 0 : index
    %c0_52 = arith.constant 0 : index
    %124 = vector.load %arg2[%c0_50, %c0_51, %c0_52] : memref<1x32x32xf32, #tpu.memory_space<vmem>>, vector<1x32x32xf32>
    %125 = vector.shape_cast %124 : vector<1x32x32xf32> to vector<32x32xf32>
    %c0_53 = arith.constant 0 : index
    %c0_54 = arith.constant 0 : index
    %126 = vector.load %arg15[%c0_53, %c0_54] : memref<32x128xf32, #tpu.memory_space<vmem>>, vector<32x128xf32>
    %cst_55 = arith.constant dense<0.000000e+00> : vector<32x128xf32>
    %127 = tpu.matmul %125, %126, %cst_55 {dimension_numbers = #tpu.dot_dimension_numbers<[1], [0], [0], [1], [0, 0, 1, 1], [], []>} : vector<32x32xf32>, vector<32x128xf32>, vector<32x128xf32> -> vector<32x128xf32>
    %c0_56 = arith.constant 0 : index
    %c0_57 = arith.constant 0 : index
    %128 = vector.load %arg16[%c0_56, %c0_57] : memref<1x128xf32, #tpu.memory_space<vmem>>, vector<1x128xf32>
    %129 = vector.broadcast %128 : vector<1x128xf32> to vector<32x128xf32>
    %130 = arith.addf %127, %129 : vector<32x128xf32>
    %c0_58 = arith.constant 0 : index
    %c0_59 = arith.constant 0 : index
    %c0_60 = arith.constant 0 : index
    %131 = vector.load %arg13[%c0_58, %c0_59, %c0_60] : memref<2x32x32xf32, #tpu.memory_space<vmem>>, vector<1x32x32xf32>
    %132 = vector.shape_cast %131 : vector<1x32x32xf32> to vector<32x32xf32>
    %cst_61 = arith.constant dense<0.000000e+00> : vector<16x32xf32>
    %133 = tpu.matmul %123, %132, %cst_61 {dimension_numbers = #tpu.dot_dimension_numbers<[1], [0], [0], [1], [0, 0, 1, 1], [], []>} : vector<16x32xf32>, vector<32x32xf32>, vector<16x32xf32> -> vector<16x32xf32>
    %c0_62 = arith.constant 0 : index
    %c0_63 = arith.constant 0 : index
    %c0_64 = arith.constant 0 : index
    %134 = vector.load %arg14[%c0_62, %c0_63, %c0_64] : memref<2x1x32xf32, #tpu.memory_space<vmem>>, vector<1x1x32xf32>
    %135 = vector.shape_cast %134 : vector<1x1x32xf32> to vector<1x32xf32>
    %136 = vector.broadcast %135 : vector<1x32xf32> to vector<16x32xf32>
    %137 = arith.addf %133, %136 : vector<16x32xf32>
    %c0_65 = arith.constant 0 : index
    %c0_66 = arith.constant 0 : index
    %c0_67 = arith.constant 0 : index
    %138 = vector.load %arg17[%c0_65, %c0_66, %c0_67] : memref<2x32x32xf32, #tpu.memory_space<vmem>>, vector<1x32x32xf32>
    %139 = vector.shape_cast %138 : vector<1x32x32xf32> to vector<32x32xf32>
    %c0_68 = arith.constant 0 : index
    %c0_69 = arith.constant 0 : index
    %c0_70 = arith.constant 0 : index
    %140 = vector.load %arg18[%c0_68, %c0_69, %c0_70] : memref<2x1x32xf32, #tpu.memory_space<vmem>>, vector<1x1x32xf32>
    %141 = vector.shape_cast %140 : vector<1x1x32xf32> to vector<1x32xf32>
    %142 = vector.extract_strided_slice %137 {offsets = [0, 0], sizes = [16, 8], strides = [1, 1]} : vector<16x32xf32> to vector<16x8xf32>
    %143 = vector.extract_strided_slice %130 {offsets = [0, 0], sizes = [32, 8], strides = [1, 1]} : vector<32x128xf32> to vector<32x8xf32>
    %144 = vector.extract_strided_slice %130 {offsets = [0, 32], sizes = [32, 8], strides = [1, 1]} : vector<32x128xf32> to vector<32x8xf32>
    %cst_71 = arith.constant dense<0.000000e+00> : vector<16x32xf32>
    %145 = tpu.matmul %142, %143, %cst_71 {dimension_numbers = #tpu.dot_dimension_numbers<[1], [1], [0], [0], [0, 0, 1, 0], [], []>} : vector<16x8xf32>, vector<32x8xf32>, vector<16x32xf32> -> vector<16x32xf32>
    %146 = arith.addf %145, %14 : vector<16x32xf32>
    %cst_72 = arith.constant dense<0xFF800000> : vector<16xf32>
    %147 = vector.multi_reduction <maximumf>, %146, %cst_72 [1] : vector<16x32xf32> to vector<16xf32>
    %148 = vector.shape_cast %147 : vector<16xf32> to vector<16x1xf32>
    %149 = vector.broadcast %148 : vector<16x1xf32> to vector<16x32xf32>
    %150 = arith.subf %146, %149 : vector<16x32xf32>
    %151 = math.exp %150 : vector<16x32xf32>
    %cst_73 = arith.constant dense<0.000000e+00> : vector<16xf32>
    %152 = vector.multi_reduction <add>, %151, %cst_73 [1] : vector<16x32xf32> to vector<16xf32>
    %153 = vector.shape_cast %152 : vector<16xf32> to vector<16x1xf32>
    %154 = tpu.reciprocal %153 {approx = true} : vector<16x1xf32> -> vector<16x1xf32>
    %155 = vector.broadcast %154 : vector<16x1xf32> to vector<16x32xf32>
    %156 = arith.mulf %151, %155 : vector<16x32xf32>
    %cst_74 = arith.constant dense<0.000000e+00> : vector<16x8xf32>
    %157 = tpu.matmul %156, %144, %cst_74 {dimension_numbers = #tpu.dot_dimension_numbers<[1], [0], [0], [1], [0, 0, 1, 1], [], []>} : vector<16x32xf32>, vector<32x8xf32>, vector<16x8xf32> -> vector<16x8xf32>
    %158 = vector.extract_strided_slice %139 {offsets = [0, 0], sizes = [8, 32], strides = [1, 1]} : vector<32x32xf32> to vector<8x32xf32>
    %cst_75 = arith.constant dense<0.000000e+00> : vector<16x32xf32>
    %159 = tpu.matmul %157, %158, %cst_75 {dimension_numbers = #tpu.dot_dimension_numbers<[1], [0], [0], [1], [0, 0, 1, 1], [], []>} : vector<16x8xf32>, vector<8x32xf32>, vector<16x32xf32> -> vector<16x32xf32>
    %160 = vector.extract_strided_slice %137 {offsets = [0, 8], sizes = [16, 8], strides = [1, 1]} : vector<16x32xf32> to vector<16x8xf32>
    %161 = vector.extract_strided_slice %130 {offsets = [0, 8], sizes = [32, 8], strides = [1, 1]} : vector<32x128xf32> to vector<32x8xf32>
    %162 = vector.extract_strided_slice %130 {offsets = [0, 40], sizes = [32, 8], strides = [1, 1]} : vector<32x128xf32> to vector<32x8xf32>
    %cst_76 = arith.constant dense<0.000000e+00> : vector<16x32xf32>
    %163 = tpu.matmul %160, %161, %cst_76 {dimension_numbers = #tpu.dot_dimension_numbers<[1], [1], [0], [0], [0, 0, 1, 0], [], []>} : vector<16x8xf32>, vector<32x8xf32>, vector<16x32xf32> -> vector<16x32xf32>
    %164 = arith.addf %163, %14 : vector<16x32xf32>
    %cst_77 = arith.constant dense<0xFF800000> : vector<16xf32>
    %165 = vector.multi_reduction <maximumf>, %164, %cst_77 [1] : vector<16x32xf32> to vector<16xf32>
    %166 = vector.shape_cast %165 : vector<16xf32> to vector<16x1xf32>
    %167 = vector.broadcast %166 : vector<16x1xf32> to vector<16x32xf32>
    %168 = arith.subf %164, %167 : vector<16x32xf32>
    %169 = math.exp %168 : vector<16x32xf32>
    %cst_78 = arith.constant dense<0.000000e+00> : vector<16xf32>
    %170 = vector.multi_reduction <add>, %169, %cst_78 [1] : vector<16x32xf32> to vector<16xf32>
    %171 = vector.shape_cast %170 : vector<16xf32> to vector<16x1xf32>
    %172 = tpu.reciprocal %171 {approx = true} : vector<16x1xf32> -> vector<16x1xf32>
    %173 = vector.broadcast %172 : vector<16x1xf32> to vector<16x32xf32>
    %174 = arith.mulf %169, %173 : vector<16x32xf32>
    %cst_79 = arith.constant dense<0.000000e+00> : vector<16x8xf32>
    %175 = tpu.matmul %174, %162, %cst_79 {dimension_numbers = #tpu.dot_dimension_numbers<[1], [0], [0], [1], [0, 0, 1, 1], [], []>} : vector<16x32xf32>, vector<32x8xf32>, vector<16x8xf32> -> vector<16x8xf32>
    %176 = vector.extract_strided_slice %139 {offsets = [8, 0], sizes = [8, 32], strides = [1, 1]} : vector<32x32xf32> to vector<8x32xf32>
    %cst_80 = arith.constant dense<0.000000e+00> : vector<16x32xf32>
    %177 = tpu.matmul %175, %176, %cst_80 {dimension_numbers = #tpu.dot_dimension_numbers<[1], [0], [0], [1], [0, 0, 1, 1], [], []>} : vector<16x8xf32>, vector<8x32xf32>, vector<16x32xf32> -> vector<16x32xf32>
    %178 = arith.addf %159, %177 : vector<16x32xf32>
    %179 = vector.extract_strided_slice %137 {offsets = [0, 16], sizes = [16, 8], strides = [1, 1]} : vector<16x32xf32> to vector<16x8xf32>
    %180 = vector.extract_strided_slice %130 {offsets = [0, 16], sizes = [32, 8], strides = [1, 1]} : vector<32x128xf32> to vector<32x8xf32>
    %181 = vector.extract_strided_slice %130 {offsets = [0, 48], sizes = [32, 8], strides = [1, 1]} : vector<32x128xf32> to vector<32x8xf32>
    %cst_81 = arith.constant dense<0.000000e+00> : vector<16x32xf32>
    %182 = tpu.matmul %179, %180, %cst_81 {dimension_numbers = #tpu.dot_dimension_numbers<[1], [1], [0], [0], [0, 0, 1, 0], [], []>} : vector<16x8xf32>, vector<32x8xf32>, vector<16x32xf32> -> vector<16x32xf32>
    %183 = arith.addf %182, %14 : vector<16x32xf32>
    %cst_82 = arith.constant dense<0xFF800000> : vector<16xf32>
    %184 = vector.multi_reduction <maximumf>, %183, %cst_82 [1] : vector<16x32xf32> to vector<16xf32>
    %185 = vector.shape_cast %184 : vector<16xf32> to vector<16x1xf32>
    %186 = vector.broadcast %185 : vector<16x1xf32> to vector<16x32xf32>
    %187 = arith.subf %183, %186 : vector<16x32xf32>
    %188 = math.exp %187 : vector<16x32xf32>
    %cst_83 = arith.constant dense<0.000000e+00> : vector<16xf32>
    %189 = vector.multi_reduction <add>, %188, %cst_83 [1] : vector<16x32xf32> to vector<16xf32>
    %190 = vector.shape_cast %189 : vector<16xf32> to vector<16x1xf32>
    %191 = tpu.reciprocal %190 {approx = true} : vector<16x1xf32> -> vector<16x1xf32>
    %192 = vector.broadcast %191 : vector<16x1xf32> to vector<16x32xf32>
    %193 = arith.mulf %188, %192 : vector<16x32xf32>
    %cst_84 = arith.constant dense<0.000000e+00> : vector<16x8xf32>
    %194 = tpu.matmul %193, %181, %cst_84 {dimension_numbers = #tpu.dot_dimension_numbers<[1], [0], [0], [1], [0, 0, 1, 1], [], []>} : vector<16x32xf32>, vector<32x8xf32>, vector<16x8xf32> -> vector<16x8xf32>
    %195 = vector.extract_strided_slice %139 {offsets = [16, 0], sizes = [8, 32], strides = [1, 1]} : vector<32x32xf32> to vector<8x32xf32>
    %cst_85 = arith.constant dense<0.000000e+00> : vector<16x32xf32>
    %196 = tpu.matmul %194, %195, %cst_85 {dimension_numbers = #tpu.dot_dimension_numbers<[1], [0], [0], [1], [0, 0, 1, 1], [], []>} : vector<16x8xf32>, vector<8x32xf32>, vector<16x32xf32> -> vector<16x32xf32>
    %197 = arith.addf %178, %196 : vector<16x32xf32>
    %198 = vector.extract_strided_slice %137 {offsets = [0, 24], sizes = [16, 8], strides = [1, 1]} : vector<16x32xf32> to vector<16x8xf32>
    %199 = vector.extract_strided_slice %130 {offsets = [0, 24], sizes = [32, 8], strides = [1, 1]} : vector<32x128xf32> to vector<32x8xf32>
    %200 = vector.extract_strided_slice %130 {offsets = [0, 56], sizes = [32, 8], strides = [1, 1]} : vector<32x128xf32> to vector<32x8xf32>
    %cst_86 = arith.constant dense<0.000000e+00> : vector<16x32xf32>
    %201 = tpu.matmul %198, %199, %cst_86 {dimension_numbers = #tpu.dot_dimension_numbers<[1], [1], [0], [0], [0, 0, 1, 0], [], []>} : vector<16x8xf32>, vector<32x8xf32>, vector<16x32xf32> -> vector<16x32xf32>
    %202 = arith.addf %201, %14 : vector<16x32xf32>
    %cst_87 = arith.constant dense<0xFF800000> : vector<16xf32>
    %203 = vector.multi_reduction <maximumf>, %202, %cst_87 [1] : vector<16x32xf32> to vector<16xf32>
    %204 = vector.shape_cast %203 : vector<16xf32> to vector<16x1xf32>
    %205 = vector.broadcast %204 : vector<16x1xf32> to vector<16x32xf32>
    %206 = arith.subf %202, %205 : vector<16x32xf32>
    %207 = math.exp %206 : vector<16x32xf32>
    %cst_88 = arith.constant dense<0.000000e+00> : vector<16xf32>
    %208 = vector.multi_reduction <add>, %207, %cst_88 [1] : vector<16x32xf32> to vector<16xf32>
    %209 = vector.shape_cast %208 : vector<16xf32> to vector<16x1xf32>
    %210 = tpu.reciprocal %209 {approx = true} : vector<16x1xf32> -> vector<16x1xf32>
    %211 = vector.broadcast %210 : vector<16x1xf32> to vector<16x32xf32>
    %212 = arith.mulf %207, %211 : vector<16x32xf32>
    %cst_89 = arith.constant dense<0.000000e+00> : vector<16x8xf32>
    %213 = tpu.matmul %212, %200, %cst_89 {dimension_numbers = #tpu.dot_dimension_numbers<[1], [0], [0], [1], [0, 0, 1, 1], [], []>} : vector<16x32xf32>, vector<32x8xf32>, vector<16x8xf32> -> vector<16x8xf32>
    %214 = vector.extract_strided_slice %139 {offsets = [24, 0], sizes = [8, 32], strides = [1, 1]} : vector<32x32xf32> to vector<8x32xf32>
    %cst_90 = arith.constant dense<0.000000e+00> : vector<16x32xf32>
    %215 = tpu.matmul %213, %214, %cst_90 {dimension_numbers = #tpu.dot_dimension_numbers<[1], [0], [0], [1], [0, 0, 1, 1], [], []>} : vector<16x8xf32>, vector<8x32xf32>, vector<16x32xf32> -> vector<16x32xf32>
    %216 = arith.addf %197, %215 : vector<16x32xf32>
    %217 = vector.broadcast %141 : vector<1x32xf32> to vector<16x32xf32>
    %218 = arith.addf %216, %217 : vector<16x32xf32>
    %c0_91 = arith.constant 0 : index
    %c0_92 = arith.constant 0 : index
    %c0_93 = arith.constant 0 : index
    %219 = vector.load %arg19[%c0_91, %c0_92, %c0_93] : memref<2x1x32xf32, #tpu.memory_space<vmem>>, vector<1x1x32xf32>
    %220 = vector.shape_cast %219 : vector<1x1x32xf32> to vector<1x32xf32>
    %c0_94 = arith.constant 0 : index
    %c0_95 = arith.constant 0 : index
    %c0_96 = arith.constant 0 : index
    %221 = vector.load %arg20[%c0_94, %c0_95, %c0_96] : memref<2x1x32xf32, #tpu.memory_space<vmem>>, vector<1x1x32xf32>
    %222 = vector.shape_cast %221 : vector<1x1x32xf32> to vector<1x32xf32>
    %223 = arith.addf %218, %123 : vector<16x32xf32>
    %cst_97 = arith.constant dense<0.000000e+00> : vector<16xf32>
    %224 = vector.multi_reduction <add>, %223, %cst_97 [1] : vector<16x32xf32> to vector<16xf32>
    %225 = vector.shape_cast %224 : vector<16xf32> to vector<16x1xf32>
    %cst_98 = arith.constant 3.200000e+01 : f32
    %226 = vector.broadcast %cst_98 : f32 to vector<16x1xf32>
    %227 = arith.divf %225, %226 : vector<16x1xf32>
    %228 = vector.broadcast %227 : vector<16x1xf32> to vector<16x32xf32>
    %229 = arith.subf %223, %228 : vector<16x32xf32>
    %230 = arith.mulf %229, %229 : vector<16x32xf32>
    %cst_99 = arith.constant dense<0.000000e+00> : vector<16xf32>
    %231 = vector.multi_reduction <add>, %230, %cst_99 [1] : vector<16x32xf32> to vector<16xf32>
    %232 = vector.shape_cast %231 : vector<16xf32> to vector<16x1xf32>
    %cst_100 = arith.constant 3.200000e+01 : f32
    %233 = vector.broadcast %cst_100 : f32 to vector<16x1xf32>
    %234 = arith.divf %232, %233 : vector<16x1xf32>
    %235 = vector.broadcast %227 : vector<16x1xf32> to vector<16x32xf32>
    %236 = arith.subf %223, %235 : vector<16x32xf32>
    %cst_101 = arith.constant 9.99999974E-6 : f32
    %237 = vector.broadcast %cst_101 : f32 to vector<16x1xf32>
    %238 = arith.addf %234, %237 : vector<16x1xf32>
    %239 = math.rsqrt %238 : vector<16x1xf32>
    %240 = vector.broadcast %239 : vector<16x1xf32> to vector<16x32xf32>
    %241 = arith.mulf %236, %240 : vector<16x32xf32>
    %242 = vector.broadcast %220 : vector<1x32xf32> to vector<16x32xf32>
    %243 = arith.mulf %241, %242 : vector<16x32xf32>
    %244 = vector.broadcast %222 : vector<1x32xf32> to vector<16x32xf32>
    %245 = arith.addf %243, %244 : vector<16x32xf32>
    %c0_102 = arith.constant 0 : index
    %c0_103 = arith.constant 0 : index
    %c0_104 = arith.constant 0 : index
    %246 = vector.load %arg23[%c0_102, %c0_103, %c0_104] : memref<2x32x64xf32, #tpu.memory_space<vmem>>, vector<1x32x64xf32>
    %247 = vector.shape_cast %246 : vector<1x32x64xf32> to vector<32x64xf32>
    %cst_105 = arith.constant dense<0.000000e+00> : vector<16x64xf32>
    %248 = tpu.matmul %245, %247, %cst_105 {dimension_numbers = #tpu.dot_dimension_numbers<[1], [0], [0], [1], [0, 0, 1, 1], [], []>} : vector<16x32xf32>, vector<32x64xf32>, vector<16x64xf32> -> vector<16x64xf32>
    %c0_106 = arith.constant 0 : index
    %c0_107 = arith.constant 0 : index
    %c0_108 = arith.constant 0 : index
    %249 = vector.load %arg24[%c0_106, %c0_107, %c0_108] : memref<2x1x64xf32, #tpu.memory_space<vmem>>, vector<1x1x64xf32>
    %250 = vector.shape_cast %249 : vector<1x1x64xf32> to vector<1x64xf32>
    %251 = vector.broadcast %250 : vector<1x64xf32> to vector<16x64xf32>
    %252 = arith.addf %248, %251 : vector<16x64xf32>
    %cst_109 = arith.constant 0.000000e+00 : f32
    %253 = vector.broadcast %cst_109 : f32 to vector<16x64xf32>
    %254 = arith.maximumf %252, %253 : vector<16x64xf32>
    %c0_110 = arith.constant 0 : index
    %c0_111 = arith.constant 0 : index
    %c0_112 = arith.constant 0 : index
    %255 = vector.load %arg25[%c0_110, %c0_111, %c0_112] : memref<2x64x32xf32, #tpu.memory_space<vmem>>, vector<1x64x32xf32>
    %256 = vector.shape_cast %255 : vector<1x64x32xf32> to vector<64x32xf32>
    %cst_113 = arith.constant dense<0.000000e+00> : vector<16x32xf32>
    %257 = tpu.matmul %254, %256, %cst_113 {dimension_numbers = #tpu.dot_dimension_numbers<[1], [0], [0], [1], [0, 0, 1, 1], [], []>} : vector<16x64xf32>, vector<64x32xf32>, vector<16x32xf32> -> vector<16x32xf32>
    %c0_114 = arith.constant 0 : index
    %c0_115 = arith.constant 0 : index
    %c0_116 = arith.constant 0 : index
    %258 = vector.load %arg26[%c0_114, %c0_115, %c0_116] : memref<2x1x32xf32, #tpu.memory_space<vmem>>, vector<1x1x32xf32>
    %259 = vector.shape_cast %258 : vector<1x1x32xf32> to vector<1x32xf32>
    %260 = vector.broadcast %259 : vector<1x32xf32> to vector<16x32xf32>
    %261 = arith.addf %257, %260 : vector<16x32xf32>
    %c0_117 = arith.constant 0 : index
    %c0_118 = arith.constant 0 : index
    %c0_119 = arith.constant 0 : index
    %262 = vector.load %arg21[%c0_117, %c0_118, %c0_119] : memref<2x1x32xf32, #tpu.memory_space<vmem>>, vector<1x1x32xf32>
    %263 = vector.shape_cast %262 : vector<1x1x32xf32> to vector<1x32xf32>
    %c0_120 = arith.constant 0 : index
    %c0_121 = arith.constant 0 : index
    %c0_122 = arith.constant 0 : index
    %264 = vector.load %arg22[%c0_120, %c0_121, %c0_122] : memref<2x1x32xf32, #tpu.memory_space<vmem>>, vector<1x1x32xf32>
    %265 = vector.shape_cast %264 : vector<1x1x32xf32> to vector<1x32xf32>
    %266 = arith.addf %261, %245 : vector<16x32xf32>
    %cst_123 = arith.constant dense<0.000000e+00> : vector<16xf32>
    %267 = vector.multi_reduction <add>, %266, %cst_123 [1] : vector<16x32xf32> to vector<16xf32>
    %268 = vector.shape_cast %267 : vector<16xf32> to vector<16x1xf32>
    %cst_124 = arith.constant 3.200000e+01 : f32
    %269 = vector.broadcast %cst_124 : f32 to vector<16x1xf32>
    %270 = arith.divf %268, %269 : vector<16x1xf32>
    %271 = vector.broadcast %270 : vector<16x1xf32> to vector<16x32xf32>
    %272 = arith.subf %266, %271 : vector<16x32xf32>
    %273 = arith.mulf %272, %272 : vector<16x32xf32>
    %cst_125 = arith.constant dense<0.000000e+00> : vector<16xf32>
    %274 = vector.multi_reduction <add>, %273, %cst_125 [1] : vector<16x32xf32> to vector<16xf32>
    %275 = vector.shape_cast %274 : vector<16xf32> to vector<16x1xf32>
    %cst_126 = arith.constant 3.200000e+01 : f32
    %276 = vector.broadcast %cst_126 : f32 to vector<16x1xf32>
    %277 = arith.divf %275, %276 : vector<16x1xf32>
    %278 = vector.broadcast %270 : vector<16x1xf32> to vector<16x32xf32>
    %279 = arith.subf %266, %278 : vector<16x32xf32>
    %cst_127 = arith.constant 9.99999974E-6 : f32
    %280 = vector.broadcast %cst_127 : f32 to vector<16x1xf32>
    %281 = arith.addf %277, %280 : vector<16x1xf32>
    %282 = math.rsqrt %281 : vector<16x1xf32>
    %283 = vector.broadcast %282 : vector<16x1xf32> to vector<16x32xf32>
    %284 = arith.mulf %279, %283 : vector<16x32xf32>
    %285 = vector.broadcast %263 : vector<1x32xf32> to vector<16x32xf32>
    %286 = arith.mulf %284, %285 : vector<16x32xf32>
    %287 = vector.broadcast %265 : vector<1x32xf32> to vector<16x32xf32>
    %288 = arith.addf %286, %287 : vector<16x32xf32>
    %c1 = arith.constant 1 : index
    %c0_128 = arith.constant 0 : index
    %c0_129 = arith.constant 0 : index
    %289 = vector.load %arg13[%c1, %c0_128, %c0_129] : memref<2x32x32xf32, #tpu.memory_space<vmem>>, vector<1x32x32xf32>
    %290 = vector.shape_cast %289 : vector<1x32x32xf32> to vector<32x32xf32>
    %cst_130 = arith.constant dense<0.000000e+00> : vector<16x32xf32>
    %291 = tpu.matmul %288, %290, %cst_130 {dimension_numbers = #tpu.dot_dimension_numbers<[1], [0], [0], [1], [0, 0, 1, 1], [], []>} : vector<16x32xf32>, vector<32x32xf32>, vector<16x32xf32> -> vector<16x32xf32>
    %c1_131 = arith.constant 1 : index
    %c0_132 = arith.constant 0 : index
    %c0_133 = arith.constant 0 : index
    %292 = vector.load %arg14[%c1_131, %c0_132, %c0_133] : memref<2x1x32xf32, #tpu.memory_space<vmem>>, vector<1x1x32xf32>
    %293 = vector.shape_cast %292 : vector<1x1x32xf32> to vector<1x32xf32>
    %294 = vector.broadcast %293 : vector<1x32xf32> to vector<16x32xf32>
    %295 = arith.addf %291, %294 : vector<16x32xf32>
    %c1_134 = arith.constant 1 : index
    %c0_135 = arith.constant 0 : index
    %c0_136 = arith.constant 0 : index
    %296 = vector.load %arg17[%c1_134, %c0_135, %c0_136] : memref<2x32x32xf32, #tpu.memory_space<vmem>>, vector<1x32x32xf32>
    %297 = vector.shape_cast %296 : vector<1x32x32xf32> to vector<32x32xf32>
    %c1_137 = arith.constant 1 : index
    %c0_138 = arith.constant 0 : index
    %c0_139 = arith.constant 0 : index
    %298 = vector.load %arg18[%c1_137, %c0_138, %c0_139] : memref<2x1x32xf32, #tpu.memory_space<vmem>>, vector<1x1x32xf32>
    %299 = vector.shape_cast %298 : vector<1x1x32xf32> to vector<1x32xf32>
    %300 = vector.extract_strided_slice %295 {offsets = [0, 0], sizes = [16, 8], strides = [1, 1]} : vector<16x32xf32> to vector<16x8xf32>
    %301 = vector.extract_strided_slice %130 {offsets = [0, 64], sizes = [32, 8], strides = [1, 1]} : vector<32x128xf32> to vector<32x8xf32>
    %302 = vector.extract_strided_slice %130 {offsets = [0, 96], sizes = [32, 8], strides = [1, 1]} : vector<32x128xf32> to vector<32x8xf32>
    %cst_140 = arith.constant dense<0.000000e+00> : vector<16x32xf32>
    %303 = tpu.matmul %300, %301, %cst_140 {dimension_numbers = #tpu.dot_dimension_numbers<[1], [1], [0], [0], [0, 0, 1, 0], [], []>} : vector<16x8xf32>, vector<32x8xf32>, vector<16x32xf32> -> vector<16x32xf32>
    %304 = arith.addf %303, %14 : vector<16x32xf32>
    %cst_141 = arith.constant dense<0xFF800000> : vector<16xf32>
    %305 = vector.multi_reduction <maximumf>, %304, %cst_141 [1] : vector<16x32xf32> to vector<16xf32>
    %306 = vector.shape_cast %305 : vector<16xf32> to vector<16x1xf32>
    %307 = vector.broadcast %306 : vector<16x1xf32> to vector<16x32xf32>
    %308 = arith.subf %304, %307 : vector<16x32xf32>
    %309 = math.exp %308 : vector<16x32xf32>
    %cst_142 = arith.constant dense<0.000000e+00> : vector<16xf32>
    %310 = vector.multi_reduction <add>, %309, %cst_142 [1] : vector<16x32xf32> to vector<16xf32>
    %311 = vector.shape_cast %310 : vector<16xf32> to vector<16x1xf32>
    %312 = tpu.reciprocal %311 {approx = true} : vector<16x1xf32> -> vector<16x1xf32>
    %313 = vector.broadcast %312 : vector<16x1xf32> to vector<16x32xf32>
    %314 = arith.mulf %309, %313 : vector<16x32xf32>
    %cst_143 = arith.constant dense<0.000000e+00> : vector<16x8xf32>
    %315 = tpu.matmul %314, %302, %cst_143 {dimension_numbers = #tpu.dot_dimension_numbers<[1], [0], [0], [1], [0, 0, 1, 1], [], []>} : vector<16x32xf32>, vector<32x8xf32>, vector<16x8xf32> -> vector<16x8xf32>
    %316 = vector.extract_strided_slice %297 {offsets = [0, 0], sizes = [8, 32], strides = [1, 1]} : vector<32x32xf32> to vector<8x32xf32>
    %cst_144 = arith.constant dense<0.000000e+00> : vector<16x32xf32>
    %317 = tpu.matmul %315, %316, %cst_144 {dimension_numbers = #tpu.dot_dimension_numbers<[1], [0], [0], [1], [0, 0, 1, 1], [], []>} : vector<16x8xf32>, vector<8x32xf32>, vector<16x32xf32> -> vector<16x32xf32>
    %318 = vector.extract_strided_slice %295 {offsets = [0, 8], sizes = [16, 8], strides = [1, 1]} : vector<16x32xf32> to vector<16x8xf32>
    %319 = vector.extract_strided_slice %130 {offsets = [0, 72], sizes = [32, 8], strides = [1, 1]} : vector<32x128xf32> to vector<32x8xf32>
    %320 = vector.extract_strided_slice %130 {offsets = [0, 104], sizes = [32, 8], strides = [1, 1]} : vector<32x128xf32> to vector<32x8xf32>
    %cst_145 = arith.constant dense<0.000000e+00> : vector<16x32xf32>
    %321 = tpu.matmul %318, %319, %cst_145 {dimension_numbers = #tpu.dot_dimension_numbers<[1], [1], [0], [0], [0, 0, 1, 0], [], []>} : vector<16x8xf32>, vector<32x8xf32>, vector<16x32xf32> -> vector<16x32xf32>
    %322 = arith.addf %321, %14 : vector<16x32xf32>
    %cst_146 = arith.constant dense<0xFF800000> : vector<16xf32>
    %323 = vector.multi_reduction <maximumf>, %322, %cst_146 [1] : vector<16x32xf32> to vector<16xf32>
    %324 = vector.shape_cast %323 : vector<16xf32> to vector<16x1xf32>
    %325 = vector.broadcast %324 : vector<16x1xf32> to vector<16x32xf32>
    %326 = arith.subf %322, %325 : vector<16x32xf32>
    %327 = math.exp %326 : vector<16x32xf32>
    %cst_147 = arith.constant dense<0.000000e+00> : vector<16xf32>
    %328 = vector.multi_reduction <add>, %327, %cst_147 [1] : vector<16x32xf32> to vector<16xf32>
    %329 = vector.shape_cast %328 : vector<16xf32> to vector<16x1xf32>
    %330 = tpu.reciprocal %329 {approx = true} : vector<16x1xf32> -> vector<16x1xf32>
    %331 = vector.broadcast %330 : vector<16x1xf32> to vector<16x32xf32>
    %332 = arith.mulf %327, %331 : vector<16x32xf32>
    %cst_148 = arith.constant dense<0.000000e+00> : vector<16x8xf32>
    %333 = tpu.matmul %332, %320, %cst_148 {dimension_numbers = #tpu.dot_dimension_numbers<[1], [0], [0], [1], [0, 0, 1, 1], [], []>} : vector<16x32xf32>, vector<32x8xf32>, vector<16x8xf32> -> vector<16x8xf32>
    %334 = vector.extract_strided_slice %297 {offsets = [8, 0], sizes = [8, 32], strides = [1, 1]} : vector<32x32xf32> to vector<8x32xf32>
    %cst_149 = arith.constant dense<0.000000e+00> : vector<16x32xf32>
    %335 = tpu.matmul %333, %334, %cst_149 {dimension_numbers = #tpu.dot_dimension_numbers<[1], [0], [0], [1], [0, 0, 1, 1], [], []>} : vector<16x8xf32>, vector<8x32xf32>, vector<16x32xf32> -> vector<16x32xf32>
    %336 = arith.addf %317, %335 : vector<16x32xf32>
    %337 = vector.extract_strided_slice %295 {offsets = [0, 16], sizes = [16, 8], strides = [1, 1]} : vector<16x32xf32> to vector<16x8xf32>
    %338 = vector.extract_strided_slice %130 {offsets = [0, 80], sizes = [32, 8], strides = [1, 1]} : vector<32x128xf32> to vector<32x8xf32>
    %339 = vector.extract_strided_slice %130 {offsets = [0, 112], sizes = [32, 8], strides = [1, 1]} : vector<32x128xf32> to vector<32x8xf32>
    %cst_150 = arith.constant dense<0.000000e+00> : vector<16x32xf32>
    %340 = tpu.matmul %337, %338, %cst_150 {dimension_numbers = #tpu.dot_dimension_numbers<[1], [1], [0], [0], [0, 0, 1, 0], [], []>} : vector<16x8xf32>, vector<32x8xf32>, vector<16x32xf32> -> vector<16x32xf32>
    %341 = arith.addf %340, %14 : vector<16x32xf32>
    %cst_151 = arith.constant dense<0xFF800000> : vector<16xf32>
    %342 = vector.multi_reduction <maximumf>, %341, %cst_151 [1] : vector<16x32xf32> to vector<16xf32>
    %343 = vector.shape_cast %342 : vector<16xf32> to vector<16x1xf32>
    %344 = vector.broadcast %343 : vector<16x1xf32> to vector<16x32xf32>
    %345 = arith.subf %341, %344 : vector<16x32xf32>
    %346 = math.exp %345 : vector<16x32xf32>
    %cst_152 = arith.constant dense<0.000000e+00> : vector<16xf32>
    %347 = vector.multi_reduction <add>, %346, %cst_152 [1] : vector<16x32xf32> to vector<16xf32>
    %348 = vector.shape_cast %347 : vector<16xf32> to vector<16x1xf32>
    %349 = tpu.reciprocal %348 {approx = true} : vector<16x1xf32> -> vector<16x1xf32>
    %350 = vector.broadcast %349 : vector<16x1xf32> to vector<16x32xf32>
    %351 = arith.mulf %346, %350 : vector<16x32xf32>
    %cst_153 = arith.constant dense<0.000000e+00> : vector<16x8xf32>
    %352 = tpu.matmul %351, %339, %cst_153 {dimension_numbers = #tpu.dot_dimension_numbers<[1], [0], [0], [1], [0, 0, 1, 1], [], []>} : vector<16x32xf32>, vector<32x8xf32>, vector<16x8xf32> -> vector<16x8xf32>
    %353 = vector.extract_strided_slice %297 {offsets = [16, 0], sizes = [8, 32], strides = [1, 1]} : vector<32x32xf32> to vector<8x32xf32>
    %cst_154 = arith.constant dense<0.000000e+00> : vector<16x32xf32>
    %354 = tpu.matmul %352, %353, %cst_154 {dimension_numbers = #tpu.dot_dimension_numbers<[1], [0], [0], [1], [0, 0, 1, 1], [], []>} : vector<16x8xf32>, vector<8x32xf32>, vector<16x32xf32> -> vector<16x32xf32>
    %355 = arith.addf %336, %354 : vector<16x32xf32>
    %356 = vector.extract_strided_slice %295 {offsets = [0, 24], sizes = [16, 8], strides = [1, 1]} : vector<16x32xf32> to vector<16x8xf32>
    %357 = vector.extract_strided_slice %130 {offsets = [0, 88], sizes = [32, 8], strides = [1, 1]} : vector<32x128xf32> to vector<32x8xf32>
    %358 = vector.extract_strided_slice %130 {offsets = [0, 120], sizes = [32, 8], strides = [1, 1]} : vector<32x128xf32> to vector<32x8xf32>
    %cst_155 = arith.constant dense<0.000000e+00> : vector<16x32xf32>
    %359 = tpu.matmul %356, %357, %cst_155 {dimension_numbers = #tpu.dot_dimension_numbers<[1], [1], [0], [0], [0, 0, 1, 0], [], []>} : vector<16x8xf32>, vector<32x8xf32>, vector<16x32xf32> -> vector<16x32xf32>
    %360 = arith.addf %359, %14 : vector<16x32xf32>
    %cst_156 = arith.constant dense<0xFF800000> : vector<16xf32>
    %361 = vector.multi_reduction <maximumf>, %360, %cst_156 [1] : vector<16x32xf32> to vector<16xf32>
    %362 = vector.shape_cast %361 : vector<16xf32> to vector<16x1xf32>
    %363 = vector.broadcast %362 : vector<16x1xf32> to vector<16x32xf32>
    %364 = arith.subf %360, %363 : vector<16x32xf32>
    %365 = math.exp %364 : vector<16x32xf32>
    %cst_157 = arith.constant dense<0.000000e+00> : vector<16xf32>
    %366 = vector.multi_reduction <add>, %365, %cst_157 [1] : vector<16x32xf32> to vector<16xf32>
    %367 = vector.shape_cast %366 : vector<16xf32> to vector<16x1xf32>
    %368 = tpu.reciprocal %367 {approx = true} : vector<16x1xf32> -> vector<16x1xf32>
    %369 = vector.broadcast %368 : vector<16x1xf32> to vector<16x32xf32>
    %370 = arith.mulf %365, %369 : vector<16x32xf32>
    %cst_158 = arith.constant dense<0.000000e+00> : vector<16x8xf32>
    %371 = tpu.matmul %370, %358, %cst_158 {dimension_numbers = #tpu.dot_dimension_numbers<[1], [0], [0], [1], [0, 0, 1, 1], [], []>} : vector<16x32xf32>, vector<32x8xf32>, vector<16x8xf32> -> vector<16x8xf32>
    %372 = vector.extract_strided_slice %297 {offsets = [24, 0], sizes = [8, 32], strides = [1, 1]} : vector<32x32xf32> to vector<8x32xf32>
    %cst_159 = arith.constant dense<0.000000e+00> : vector<16x32xf32>
    %373 = tpu.matmul %371, %372, %cst_159 {dimension_numbers = #tpu.dot_dimension_numbers<[1], [0], [0], [1], [0, 0, 1, 1], [], []>} : vector<16x8xf32>, vector<8x32xf32>, vector<16x32xf32> -> vector<16x32xf32>
    %374 = arith.addf %355, %373 : vector<16x32xf32>
    %375 = vector.broadcast %299 : vector<1x32xf32> to vector<16x32xf32>
    %376 = arith.addf %374, %375 : vector<16x32xf32>
    %c1_160 = arith.constant 1 : index
    %c0_161 = arith.constant 0 : index
    %c0_162 = arith.constant 0 : index
    %377 = vector.load %arg19[%c1_160, %c0_161, %c0_162] : memref<2x1x32xf32, #tpu.memory_space<vmem>>, vector<1x1x32xf32>
    %378 = vector.shape_cast %377 : vector<1x1x32xf32> to vector<1x32xf32>
    %c1_163 = arith.constant 1 : index
    %c0_164 = arith.constant 0 : index
    %c0_165 = arith.constant 0 : index
    %379 = vector.load %arg20[%c1_163, %c0_164, %c0_165] : memref<2x1x32xf32, #tpu.memory_space<vmem>>, vector<1x1x32xf32>
    %380 = vector.shape_cast %379 : vector<1x1x32xf32> to vector<1x32xf32>
    %381 = arith.addf %376, %288 : vector<16x32xf32>
    %cst_166 = arith.constant dense<0.000000e+00> : vector<16xf32>
    %382 = vector.multi_reduction <add>, %381, %cst_166 [1] : vector<16x32xf32> to vector<16xf32>
    %383 = vector.shape_cast %382 : vector<16xf32> to vector<16x1xf32>
    %cst_167 = arith.constant 3.200000e+01 : f32
    %384 = vector.broadcast %cst_167 : f32 to vector<16x1xf32>
    %385 = arith.divf %383, %384 : vector<16x1xf32>
    %386 = vector.broadcast %385 : vector<16x1xf32> to vector<16x32xf32>
    %387 = arith.subf %381, %386 : vector<16x32xf32>
    %388 = arith.mulf %387, %387 : vector<16x32xf32>
    %cst_168 = arith.constant dense<0.000000e+00> : vector<16xf32>
    %389 = vector.multi_reduction <add>, %388, %cst_168 [1] : vector<16x32xf32> to vector<16xf32>
    %390 = vector.shape_cast %389 : vector<16xf32> to vector<16x1xf32>
    %cst_169 = arith.constant 3.200000e+01 : f32
    %391 = vector.broadcast %cst_169 : f32 to vector<16x1xf32>
    %392 = arith.divf %390, %391 : vector<16x1xf32>
    %393 = vector.broadcast %385 : vector<16x1xf32> to vector<16x32xf32>
    %394 = arith.subf %381, %393 : vector<16x32xf32>
    %cst_170 = arith.constant 9.99999974E-6 : f32
    %395 = vector.broadcast %cst_170 : f32 to vector<16x1xf32>
    %396 = arith.addf %392, %395 : vector<16x1xf32>
    %397 = math.rsqrt %396 : vector<16x1xf32>
    %398 = vector.broadcast %397 : vector<16x1xf32> to vector<16x32xf32>
    %399 = arith.mulf %394, %398 : vector<16x32xf32>
    %400 = vector.broadcast %378 : vector<1x32xf32> to vector<16x32xf32>
    %401 = arith.mulf %399, %400 : vector<16x32xf32>
    %402 = vector.broadcast %380 : vector<1x32xf32> to vector<16x32xf32>
    %403 = arith.addf %401, %402 : vector<16x32xf32>
    %c1_171 = arith.constant 1 : index
    %c0_172 = arith.constant 0 : index
    %c0_173 = arith.constant 0 : index
    %404 = vector.load %arg23[%c1_171, %c0_172, %c0_173] : memref<2x32x64xf32, #tpu.memory_space<vmem>>, vector<1x32x64xf32>
    %405 = vector.shape_cast %404 : vector<1x32x64xf32> to vector<32x64xf32>
    %cst_174 = arith.constant dense<0.000000e+00> : vector<16x64xf32>
    %406 = tpu.matmul %403, %405, %cst_174 {dimension_numbers = #tpu.dot_dimension_numbers<[1], [0], [0], [1], [0, 0, 1, 1], [], []>} : vector<16x32xf32>, vector<32x64xf32>, vector<16x64xf32> -> vector<16x64xf32>
    %c1_175 = arith.constant 1 : index
    %c0_176 = arith.constant 0 : index
    %c0_177 = arith.constant 0 : index
    %407 = vector.load %arg24[%c1_175, %c0_176, %c0_177] : memref<2x1x64xf32, #tpu.memory_space<vmem>>, vector<1x1x64xf32>
    %408 = vector.shape_cast %407 : vector<1x1x64xf32> to vector<1x64xf32>
    %409 = vector.broadcast %408 : vector<1x64xf32> to vector<16x64xf32>
    %410 = arith.addf %406, %409 : vector<16x64xf32>
    %cst_178 = arith.constant 0.000000e+00 : f32
    %411 = vector.broadcast %cst_178 : f32 to vector<16x64xf32>
    %412 = arith.maximumf %410, %411 : vector<16x64xf32>
    %c1_179 = arith.constant 1 : index
    %c0_180 = arith.constant 0 : index
    %c0_181 = arith.constant 0 : index
    %413 = vector.load %arg25[%c1_179, %c0_180, %c0_181] : memref<2x64x32xf32, #tpu.memory_space<vmem>>, vector<1x64x32xf32>
    %414 = vector.shape_cast %413 : vector<1x64x32xf32> to vector<64x32xf32>
    %cst_182 = arith.constant dense<0.000000e+00> : vector<16x32xf32>
    %415 = tpu.matmul %412, %414, %cst_182 {dimension_numbers = #tpu.dot_dimension_numbers<[1], [0], [0], [1], [0, 0, 1, 1], [], []>} : vector<16x64xf32>, vector<64x32xf32>, vector<16x32xf32> -> vector<16x32xf32>
    %c1_183 = arith.constant 1 : index
    %c0_184 = arith.constant 0 : index
    %c0_185 = arith.constant 0 : index
    %416 = vector.load %arg26[%c1_183, %c0_184, %c0_185] : memref<2x1x32xf32, #tpu.memory_space<vmem>>, vector<1x1x32xf32>
    %417 = vector.shape_cast %416 : vector<1x1x32xf32> to vector<1x32xf32>
    %418 = vector.broadcast %417 : vector<1x32xf32> to vector<16x32xf32>
    %419 = arith.addf %415, %418 : vector<16x32xf32>
    %c1_186 = arith.constant 1 : index
    %c0_187 = arith.constant 0 : index
    %c0_188 = arith.constant 0 : index
    %420 = vector.load %arg21[%c1_186, %c0_187, %c0_188] : memref<2x1x32xf32, #tpu.memory_space<vmem>>, vector<1x1x32xf32>
    %421 = vector.shape_cast %420 : vector<1x1x32xf32> to vector<1x32xf32>
    %c1_189 = arith.constant 1 : index
    %c0_190 = arith.constant 0 : index
    %c0_191 = arith.constant 0 : index
    %422 = vector.load %arg22[%c1_189, %c0_190, %c0_191] : memref<2x1x32xf32, #tpu.memory_space<vmem>>, vector<1x1x32xf32>
    %423 = vector.shape_cast %422 : vector<1x1x32xf32> to vector<1x32xf32>
    %424 = arith.addf %419, %403 : vector<16x32xf32>
    %cst_192 = arith.constant dense<0.000000e+00> : vector<16xf32>
    %425 = vector.multi_reduction <add>, %424, %cst_192 [1] : vector<16x32xf32> to vector<16xf32>
    %426 = vector.shape_cast %425 : vector<16xf32> to vector<16x1xf32>
    %cst_193 = arith.constant 3.200000e+01 : f32
    %427 = vector.broadcast %cst_193 : f32 to vector<16x1xf32>
    %428 = arith.divf %426, %427 : vector<16x1xf32>
    %429 = vector.broadcast %428 : vector<16x1xf32> to vector<16x32xf32>
    %430 = arith.subf %424, %429 : vector<16x32xf32>
    %431 = arith.mulf %430, %430 : vector<16x32xf32>
    %cst_194 = arith.constant dense<0.000000e+00> : vector<16xf32>
    %432 = vector.multi_reduction <add>, %431, %cst_194 [1] : vector<16x32xf32> to vector<16xf32>
    %433 = vector.shape_cast %432 : vector<16xf32> to vector<16x1xf32>
    %cst_195 = arith.constant 3.200000e+01 : f32
    %434 = vector.broadcast %cst_195 : f32 to vector<16x1xf32>
    %435 = arith.divf %433, %434 : vector<16x1xf32>
    %436 = vector.broadcast %428 : vector<16x1xf32> to vector<16x32xf32>
    %437 = arith.subf %424, %436 : vector<16x32xf32>
    %cst_196 = arith.constant 9.99999974E-6 : f32
    %438 = vector.broadcast %cst_196 : f32 to vector<16x1xf32>
    %439 = arith.addf %435, %438 : vector<16x1xf32>
    %440 = math.rsqrt %439 : vector<16x1xf32>
    %441 = vector.broadcast %440 : vector<16x1xf32> to vector<16x32xf32>
    %442 = arith.mulf %437, %441 : vector<16x32xf32>
    %443 = vector.broadcast %421 : vector<1x32xf32> to vector<16x32xf32>
    %444 = arith.mulf %442, %443 : vector<16x32xf32>
    %445 = vector.broadcast %423 : vector<1x32xf32> to vector<16x32xf32>
    %446 = arith.addf %444, %445 : vector<16x32xf32>
    %c0_197 = arith.constant 0 : index
    %c0_198 = arith.constant 0 : index
    %447 = vector.load %arg27[%c0_197, %c0_198] : memref<32x128xf32, #tpu.memory_space<vmem>>, vector<32x128xf32>
    %cst_199 = arith.constant dense<0.000000e+00> : vector<16x128xf32>
    %448 = tpu.matmul %446, %447, %cst_199 {dimension_numbers = #tpu.dot_dimension_numbers<[1], [0], [0], [1], [0, 0, 1, 1], [], []>} : vector<16x32xf32>, vector<32x128xf32>, vector<16x128xf32> -> vector<16x128xf32>
    %c0_200 = arith.constant 0 : index
    %c0_201 = arith.constant 0 : index
    %449 = vector.load %arg28[%c0_200, %c0_201] : memref<1x128xf32, #tpu.memory_space<vmem>>, vector<1x128xf32>
    %450 = vector.broadcast %449 : vector<1x128xf32> to vector<16x128xf32>
    %451 = arith.addf %448, %450 : vector<16x128xf32>
    %c0_202 = arith.constant 0 : index
    %c0_203 = arith.constant 0 : index
    %c0_204 = arith.constant 0 : index
    %452 = vector.load %arg29[%c0_202, %c0_203, %c0_204] : memref<1x16x128xf32, #tpu.memory_space<vmem>>, vector<1x16x128xf32>
    %453 = vector.shape_cast %452 : vector<1x16x128xf32> to vector<16x128xf32>
    %454 = vector.shape_cast %451 : vector<16x128xf32> to vector<1x16x128xf32>
    tpu.vector_store %arg29[%c0_202, %c0_203, %c0_204], %454 {strides = array<i32>} : memref<1x16x128xf32, #tpu.memory_space<vmem>>, vector<1x16x128xf32>,
    return
  }
  func.func @transform_0(%arg0: i32) -> (i32, i32, i32) {
    %c0_i32 = arith.constant 0 : i32
    %c0_i32_0 = arith.constant 0 : i32
    %c0_i32_1 = arith.constant 0 : i32
    return %arg0, %c0_i32, %c0_i32_0 : i32, i32, i32
  }
  func.func @transform_1(%arg0: i32) -> (i32, i32, i32) {
    %c0_i32 = arith.constant 0 : i32
    %c0_i32_0 = arith.constant 0 : i32
    %c0_i32_1 = arith.constant 0 : i32
    return %arg0, %c0_i32, %c0_i32_0 : i32, i32, i32
  }
  func.func @transform_2(%arg0: i32) -> (i32, i32, i32) {
    %c0_i32 = arith.constant 0 : i32
    %c0_i32_0 = arith.constant 0 : i32
    %c0_i32_1 = arith.constant 0 : i32
    return %arg0, %c0_i32, %c0_i32_0 : i32, i32, i32
  }
  func.func @transform_3(%arg0: i32) -> (i32, i32, i32) {
    %c0_i32 = arith.constant 0 : i32
    %c0_i32_0 = arith.constant 0 : i32
    %c0_i32_1 = arith.constant 0 : i32
    return %arg0, %c0_i32, %c0_i32_0 : i32, i32, i32
  }
  func.func @transform_4(%arg0: i32) -> (i32, i32) {
    %c0_i32 = arith.constant 0 : i32
    %c0_i32_0 = arith.constant 0 : i32
    %c0_i32_1 = arith.constant 0 : i32
    return %c0_i32, %c0_i32_0 : i32, i32
  }
  func.func @transform_5(%arg0: i32) -> (i32, i32) {
    %c0_i32 = arith.constant 0 : i32
    %c0_i32_0 = arith.constant 0 : i32
    %c0_i32_1 = arith.constant 0 : i32
    return %c0_i32, %c0_i32_0 : i32, i32
  }
  func.func @transform_6(%arg0: i32) -> (i32, i32) {
    %c0_i32 = arith.constant 0 : i32
    %c0_i32_0 = arith.constant 0 : i32
    %c0_i32_1 = arith.constant 0 : i32
    return %c0_i32, %c0_i32_0 : i32, i32
  }
  func.func @transform_7(%arg0: i32) -> (i32, i32) {
    %c0_i32 = arith.constant 0 : i32
    %c0_i32_0 = arith.constant 0 : i32
    %c0_i32_1 = arith.constant 0 : i32
    return %c0_i32, %c0_i32_0 : i32, i32
  }
  func.func @transform_8(%arg0: i32) -> (i32, i32) {
    %c0_i32 = arith.constant 0 : i32
    %c0_i32_0 = arith.constant 0 : i32
    %c0_i32_1 = arith.constant 0 : i32
    return %c0_i32, %c0_i32_0 : i32, i32
  }
  func.func @transform_9(%arg0: i32) -> (i32, i32) {
    %c0_i32 = arith.constant 0 : i32
    %c0_i32_0 = arith.constant 0 : i32
    %c0_i32_1 = arith.constant 0 : i32
    return %c0_i32, %c0_i32_0 : i32, i32
  }
  func.func @transform_10(%arg0: i32) -> (i32, i32) {
    %c0_i32 = arith.constant 0 : i32
    %c0_i32_0 = arith.constant 0 : i32
    %c0_i32_1 = arith.constant 0 : i32
    return %c0_i32, %c0_i32_0 : i32, i32
  }
  func.func @transform_11(%arg0: i32) -> (i32, i32) {
    %c0_i32 = arith.constant 0 : i32
    %c0_i32_0 = arith.constant 0 : i32
    %c0_i32_1 = arith.constant 0 : i32
    return %c0_i32, %c0_i32_0 : i32, i32
  }
  func.func @transform_12(%arg0: i32) -> (i32, i32, i32) {
    %c0_i32 = arith.constant 0 : i32
    %c0_i32_0 = arith.constant 0 : i32
    %c0_i32_1 = arith.constant 0 : i32
    %c0_i32_2 = arith.constant 0 : i32
    return %c0_i32, %c0_i32_0, %c0_i32_1 : i32, i32, i32
  }
  func.func @transform_13(%arg0: i32) -> (i32, i32, i32) {
    %c0_i32 = arith.constant 0 : i32
    %c0_i32_0 = arith.constant 0 : i32
    %c0_i32_1 = arith.constant 0 : i32
    %c0_i32_2 = arith.constant 0 : i32
    return %c0_i32, %c0_i32_0, %c0_i32_1 : i32, i32, i32
  }
  func.func @transform_14(%arg0: i32) -> (i32, i32) {
    %c0_i32 = arith.constant 0 : i32
    %c0_i32_0 = arith.constant 0 : i32
    %c0_i32_1 = arith.constant 0 : i32
    return %c0_i32, %c0_i32_0 : i32, i32
  }
  func.func @transform_15(%arg0: i32) -> (i32, i32) {
    %c0_i32 = arith.constant 0 : i32
    %c0_i32_0 = arith.constant 0 : i32
    %c0_i32_1 = arith.constant 0 : i32
    return %c0_i32, %c0_i32_0 : i32, i32
  }
  func.func @transform_16(%arg0: i32) -> (i32, i32, i32) {
    %c0_i32 = arith.constant 0 : i32
    %c0_i32_0 = arith.constant 0 : i32
    %c0_i32_1 = arith.constant 0 : i32
    %c0_i32_2 = arith.constant 0 : i32
    return %c0_i32, %c0_i32_0, %c0_i32_1 : i32, i32, i32
  }
  func.func @transform_17(%arg0: i32) -> (i32, i32, i32) {
    %c0_i32 = arith.constant 0 : i32
    %c0_i32_0 = arith.constant 0 : i32
    %c0_i32_1 = arith.constant 0 : i32
    %c0_i32_2 = arith.constant 0 : i32
    return %c0_i32, %c0_i32_0, %c0_i32_1 : i32, i32, i32
  }
  func.func @transform_18(%arg0: i32) -> (i32, i32, i32) {
    %c0_i32 = arith.constant 0 : i32
    %c0_i32_0 = arith.constant 0 : i32
    %c0_i32_1 = arith.constant 0 : i32
    %c0_i32_2 = arith.constant 0 : i32
    return %c0_i32, %c0_i32_0, %c0_i32_1 : i32, i32, i32
  }
  func.func @transform_19(%arg0: i32) -> (i32, i32, i32) {
    %c0_i32 = arith.constant 0 : i32
    %c0_i32_0 = arith.constant 0 : i32
    %c0_i32_1 = arith.constant 0 : i32
    %c0_i32_2 = arith.constant 0 : i32
    return %c0_i32, %c0_i32_0, %c0_i32_1 : i32, i32, i32
  }
  func.func @transform_20(%arg0: i32) -> (i32, i32, i32) {
    %c0_i32 = arith.constant 0 : i32
    %c0_i32_0 = arith.constant 0 : i32
    %c0_i32_1 = arith.constant 0 : i32
    %c0_i32_2 = arith.constant 0 : i32
    return %c0_i32, %c0_i32_0, %c0_i32_1 : i32, i32, i32
  }
  func.func @transform_21(%arg0: i32) -> (i32, i32, i32) {
    %c0_i32 = arith.constant 0 : i32
    %c0_i32_0 = arith.constant 0 : i32
    %c0_i32_1 = arith.constant 0 : i32
    %c0_i32_2 = arith.constant 0 : i32
    return %c0_i32, %c0_i32_0, %c0_i32_1 : i32, i32, i32
  }
  func.func @transform_22(%arg0: i32) -> (i32, i32, i32) {
    %c0_i32 = arith.constant 0 : i32
    %c0_i32_0 = arith.constant 0 : i32
    %c0_i32_1 = arith.constant 0 : i32
    %c0_i32_2 = arith.constant 0 : i32
    return %c0_i32, %c0_i32_0, %c0_i32_1 : i32, i32, i32
  }
  func.func @transform_23(%arg0: i32) -> (i32, i32, i32) {
    %c0_i32 = arith.constant 0 : i32
    %c0_i32_0 = arith.constant 0 : i32
    %c0_i32_1 = arith.constant 0 : i32
    %c0_i32_2 = arith.constant 0 : i32
    return %c0_i32, %c0_i32_0, %c0_i32_1 : i32, i32, i32
  }
  func.func @transform_24(%arg0: i32) -> (i32, i32, i32) {
    %c0_i32 = arith.constant 0 : i32
    %c0_i32_0 = arith.constant 0 : i32
    %c0_i32_1 = arith.constant 0 : i32
    %c0_i32_2 = arith.constant 0 : i32
    return %c0_i32, %c0_i32_0, %c0_i32_1 : i32, i32, i32
  }
  func.func @transform_25(%arg0: i32) -> (i32, i32, i32) {
    %c0_i32 = arith.constant 0 : i32
    %c0_i32_0 = arith.constant 0 : i32
    %c0_i32_1 = arith.constant 0 : i32
    %c0_i32_2 = arith.constant 0 : i32
    return %c0_i32, %c0_i32_0, %c0_i32_1 : i32, i32, i32
  }
  func.func @transform_26(%arg0: i32) -> (i32, i32) {
    %c0_i32 = arith.constant 0 : i32
    %c0_i32_0 = arith.constant 0 : i32
    %c0_i32_1 = arith.constant 0 : i32
    return %c0_i32, %c0_i32_0 : i32, i32
  }
  func.func @transform_27(%arg0: i32) -> (i32, i32) {
    %c0_i32 = arith.constant 0 : i32
    %c0_i32_0 = arith.constant 0 : i32
    %c0_i32_1 = arith.constant 0 : i32
    return %c0_i32, %c0_i32_0 : i32, i32
  }
  func.func @transform_28(%arg0: i32) -> (i32, i32, i32) {
    %c0_i32 = arith.constant 0 : i32
    %c0_i32_0 = arith.constant 0 : i32
    %c0_i32_1 = arith.constant 0 : i32
    return %arg0, %c0_i32, %c0_i32_0 : i32, i32, i32
  }
}

</mosaic_0001>

<llo_original>
// kernel: decoder_forward.1
$region0: #{decoder_forward.1}
  #allocation0 [shape = 'u32[]', space=smem, size = 0x4, offset = 0x4, fixed_abs, tag = 'smem constant byte address 0x4 - core index']
  #allocation1 [shape = 'u32[144,128]{1,0:T(1,128)}', space=vmem, size = 0x12000, scoped, tag = 'internal scratch']
  %s0 = inlined_call_operand.vmem [shape: s32[1,16,1], index: 0, kind: input, shape index: {}]
  %s1 = inlined_call_operand.vmem [shape: f32[1,32,32], index: 1, kind: input, shape index: {}]
  %s2 = inlined_call_operand.vmem [shape: f32[1,16,16], index: 2, kind: input, shape index: {}]
  %s3 = inlined_call_operand.vmem [shape: f32[1,16,32], index: 3, kind: input, shape index: {}]
  %s4 = inlined_call_operand.vmem [shape: f32[16,32], index: 4, kind: input, shape index: {}]
  %s5 = inlined_call_operand.hbm [shape: f32[16,32], index: 5, kind: input, shape index: {}]
  %s6 = inlined_call_operand.vmem [shape: f32[32,96], index: 6, kind: input, shape index: {}]
  %s7 = inlined_call_operand.vmem [shape: f32[1,96], index: 7, kind: input, shape index: {}]
  %s8 = inlined_call_operand.vmem [shape: f32[32,32], index: 8, kind: input, shape index: {}]
  %s9 = inlined_call_operand.vmem [shape: f32[1,32], index: 9, kind: input, shape index: {}]
  %s10 = inlined_call_operand.vmem [shape: f32[1,32], index: 10, kind: input, shape index: {}]
  %s11 = inlined_call_operand.hbm [shape: f32[1,32], index: 11, kind: input, shape index: {}]
  %s12 = inlined_call_operand.vmem [shape: f32[2,32,32], index: 12, kind: input, shape index: {}]
  %s13 = inlined_call_operand.hbm [shape: f32[2,1,32], index: 13, kind: input, shape index: {}]
  %s14 = inlined_call_operand.hbm [shape: f32[32,128], index: 14, kind: input, shape index: {}]
  %s15 = inlined_call_operand.hbm [shape: f32[1,128], index: 15, kind: input, shape index: {}]
  %s16 = inlined_call_operand.vmem [shape: f32[2,32,32], index: 16, kind: input, shape index: {}]
  %s17 = inlined_call_operand.hbm [shape: f32[2,1,32], index: 17, kind: input, shape index: {}]
  %s18 = inlined_call_operand.vmem [shape: f32[2,1,32], index: 18, kind: input, shape index: {}]
  %s19 = inlined_call_operand.hbm [shape: f32[2,1,32], index: 19, kind: input, shape index: {}]
  %s20 = inlined_call_operand.vmem [shape: f32[2,1,32], index: 20, kind: input, shape index: {}]
  %s21 = inlined_call_operand.hbm [shape: f32[2,1,32], index: 21, kind: input, shape index: {}]
  %s22 = inlined_call_operand.vmem [shape: f32[2,32,64], index: 22, kind: input, shape index: {}]
  %s23 = inlined_call_operand.hbm [shape: f32[2,1,64], index: 23, kind: input, shape index: {}]
  %s24 = inlined_call_operand.vmem [shape: f32[2,64,32], index: 24, kind: input, shape index: {}]
  %s25 = inlined_call_operand.hbm [shape: f32[2,1,32], index: 25, kind: input, shape index: {}]
  %s26 = inlined_call_operand.hbm [shape: f32[32,128], index: 26, kind: input, shape index: {}]
  %s27 = inlined_call_operand.hbm [shape: f32[1,128], index: 27, kind: input, shape index: {}]
  %s28 = inlined_call_operand.vmem [shape: f32[1,16,128], index: 28, kind: output, shape index: {}]
  %s29 = sld [smem:[#allocation0]]
  $region170: #{decoder_forward.1} parent=0
    _
  %s31 = ssub.s32 1, %s29
  %s32 = scalar_select 0, %s31, %s29
  $region1: #{decoder_forward.1} parent=0
    #allocation2 [shape = 'u8[8192]{0}', space=vmem, size = 0x2000, scoped, tag = 'input window, operand 5, single buffered']
    #allocation3 [shape = 's32[1]{0}', space=sflag, size = 0x4, scoped, tag = 'scoped memory for decoder_forward.1']
    #allocation4 [shape = 'u8[512]{0}', space=vmem, size = 0x400, scoped, tag = 'input window, operand 11, single buffered']
    #allocation5 [shape = 's32[1]{0}', space=sflag, size = 0x4, scoped, tag = 'scoped memory for decoder_forward.1']
    #allocation6 [shape = 'u8[1024]{0}', space=vmem, size = 0x400, scoped, tag = 'input window, operand 13, single buffered']
    #allocation7 [shape = 'u8[16384]{0}', space=vmem, size = 0x4000, scoped, tag = 'input window, operand 14, single buffered']
    #allocation8 [shape = 's32[1]{0}', space=sflag, size = 0x4, scoped, tag = 'scoped memory for decoder_forward.1']
    #allocation9 [shape = 'u8[512]{0}', space=vmem, size = 0x400, scoped, tag = 'input window, operand 15, single buffered']
    #allocation10 [shape = 'u8[1024]{0}', space=vmem, size = 0x400, scoped, tag = 'input window, operand 17, single buffered']
    #allocation11 [shape = 's32[1]{0}', space=sflag, size = 0x4, scoped, tag = 'scoped memory for decoder_forward.1']
    #allocation12 [shape = 'u8[1024]{0}', space=vmem, size = 0x400, scoped, tag = 'input window, operand 19, single buffered']
    #allocation13 [shape = 'u8[1024]{0}', space=vmem, size = 0x400, scoped, tag = 'input window, operand 21, single buffered']
    #allocation14 [shape = 's32[1]{0}', space=sflag, size = 0x4, scoped, tag = 'scoped memory for decoder_forward.1']
    #allocation15 [shape = 'u8[1024]{0}', space=vmem, size = 0x400, scoped, tag = 'input window, operand 23, single buffered']
    #allocation16 [shape = 'u8[1024]{0}', space=vmem, size = 0x400, scoped, tag = 'input window, operand 25, single buffered']
    #allocation17 [shape = 's32[1]{0}', space=sflag, size = 0x4, scoped, tag = 'scoped memory for decoder_forward.1']
    #allocation18 [shape = 'u8[16384]{0}', space=vmem, size = 0x4000, scoped, tag = 'input window, operand 26, single buffered']
    #allocation19 [shape = 'u8[512]{0}', space=vmem, size = 0x400, scoped, tag = 'input window, operand 27, single buffered']
    #allocation20 [shape = 's32[1]{0}', space=sflag, size = 0x4, scoped, tag = 'scoped memory for decoder_forward.1']
    %33 = vsyncpa [#allocation3], 0
    %34 = vsyncpa [#allocation5], 0
    %35 = vsyncpa [#allocation8], 0
    %36 = vsyncpa [#allocation11], 0
    %37 = vsyncpa [#allocation14], 0
    %38 = vsyncpa [#allocation17], 0
    %39 = vsyncpa [#allocation20], 0
    // Predicated region
    $region2: #{decoder_forward.1} parent=1 // pred_check
      _
    $region3: #{decoder_forward.1} parent=1 // pred_check_branch
      %41 = sbr.rel (0) target = $region5
    $region4: #{decoder_forward.1} parent=1 // pred_region
      _
    $region5: #{decoder_forward.1} parent=1 // pred_fallthru
      _
    // Predicated region
    $region6: #{decoder_forward.1} parent=1 // pred_check
      _
    $region7: #{decoder_forward.1} parent=1 // pred_check_branch
      %43 = sbr.rel (0) target = $region9
    $region8: #{decoder_forward.1} parent=1 // pred_region
      _
    $region9: #{decoder_forward.1} parent=1 // pred_fallthru
      _
    // Predicated region
    $region10: #{decoder_forward.1} parent=1 // pred_check
      _
    $region11: #{decoder_forward.1} parent=1 // pred_check_branch
      %45 = sbr.rel (0) target = $region13
    $region12: #{decoder_forward.1} parent=1 // pred_region
      _
    $region13: #{decoder_forward.1} parent=1 // pred_fallthru
      _
    // Predicated region
    $region14: #{decoder_forward.1} parent=1 // pred_check
      _
    $region15: #{decoder_forward.1} parent=1 // pred_check_branch
      %47 = sbr.rel (0) target = $region17
    $region16: #{decoder_forward.1} parent=1 // pred_region
      _
    $region17: #{decoder_forward.1} parent=1 // pred_fallthru
      _
    // Predicated region
    $region18: #{decoder_forward.1} parent=1 // pred_check
      _
    $region19: #{decoder_forward.1} parent=1 // pred_check_branch
      %49 = sbr.rel (0) target = $region21
    $region20: #{decoder_forward.1} parent=1 // pred_region
      _
    $region21: #{decoder_forward.1} parent=1 // pred_fallthru
      _
    // Predicated region
    $region22: #{decoder_forward.1} parent=1 // pred_check
      _
    $region23: #{decoder_forward.1} parent=1 // pred_check_branch
      %51 = sbr.rel (0) target = $region25
    $region24: #{decoder_forward.1} parent=1 // pred_region
      %s53 = ssub.s32 256, 256
      %54 = vsyncadd [#allocation3], %s53
      %s55 = sshll.u32 [#allocation2], 4
      %s56 = int_to_ptr.vmem [resolvable:$true] %s55
      %61 = dma.hbm_to_vmem [thread:$0]  %s5, 256, %s56, [#allocation3], 128, 128, 8
    $region25: #{decoder_forward.1} parent=1 // pred_fallthru
      _
    // Predicated region
    $region26: #{decoder_forward.1} parent=1 // pred_check
      _
    $region27: #{decoder_forward.1} parent=1 // pred_check_branch
      %63 = sbr.rel (0) target = $region29
    $region28: #{decoder_forward.1} parent=1 // pred_region
      _
    $region29: #{decoder_forward.1} parent=1 // pred_fallthru
      _
    // Predicated region
    $region30: #{decoder_forward.1} parent=1 // pred_check
      _
    $region31: #{decoder_forward.1} parent=1 // pred_check_branch
      %65 = sbr.rel (0) target = $region33
    $region32: #{decoder_forward.1} parent=1 // pred_region
      _
    $region33: #{decoder_forward.1} parent=1 // pred_fallthru
      _
    // Predicated region
    $region34: #{decoder_forward.1} parent=1 // pred_check
      _
    $region35: #{decoder_forward.1} parent=1 // pred_check_branch
      %67 = sbr.rel (0) target = $region37
    $region36: #{decoder_forward.1} parent=1 // pred_region
      _
    $region37: #{decoder_forward.1} parent=1 // pred_fallthru
      _
    // Predicated region
    $region38: #{decoder_forward.1} parent=1 // pred_check
      _
    $region39: #{decoder_forward.1} parent=1 // pred_check_branch
      %69 = sbr.rel (0) target = $region41
    $region40: #{decoder_forward.1} parent=1 // pred_region
      _
    $region41: #{decoder_forward.1} parent=1 // pred_fallthru
      _
    // Predicated region
    $region42: #{decoder_forward.1} parent=1 // pred_check
      _
    $region43: #{decoder_forward.1} parent=1 // pred_check_branch
      %71 = sbr.rel (0) target = $region45
    $region44: #{decoder_forward.1} parent=1 // pred_region
      _
    $region45: #{decoder_forward.1} parent=1 // pred_fallthru
      _
    // Predicated region
    $region46: #{decoder_forward.1} parent=1 // pred_check
      _
    $region47: #{decoder_forward.1} parent=1 // pred_check_branch
      %73 = sbr.rel (0) target = $region49
    $region48: #{decoder_forward.1} parent=1 // pred_region
      %s75 = ssub.s32 16, 16
      %76 = vsyncadd [#allocation5], %s75
      %s78 = sshll.u32 [#allocation4], 4
      %s79 = int_to_ptr.vmem [resolvable:$true] %s78
      %81 = dma.hbm_to_vmem [thread:$0]  %s11, 16, %s79, [#allocation5]
    $region49: #{decoder_forward.1} parent=1 // pred_fallthru
      _
    // Predicated region
    $region50: #{decoder_forward.1} parent=1 // pred_check
      _
    $region51: #{decoder_forward.1} parent=1 // pred_check_branch
      %83 = sbr.rel (0) target = $region53
    $region52: #{decoder_forward.1} parent=1 // pred_region
      _
    $region53: #{decoder_forward.1} parent=1 // pred_fallthru
      _
    // Predicated region
    $region54: #{decoder_forward.1} parent=1 // pred_check
      _
    $region55: #{decoder_forward.1} parent=1 // pred_check_branch
      %85 = sbr.rel (0) target = $region57
    $region56: #{decoder_forward.1} parent=1 // pred_region
      %s87 = ssub.s32 32, 32
      %88 = vsyncadd [#allocation5], %s87
      %s89 = sshll.u32 [#allocation6], 4
      %s90 = int_to_ptr.vmem [resolvable:$true] %s89
      %95 = dma.hbm_to_vmem [thread:$0]  %s13, 32, %s90, [#allocation5], 16, 16, 1
    $region57: #{decoder_forward.1} parent=1 // pred_fallthru
      _
    // Predicated region
    $region58: #{decoder_forward.1} parent=1 // pred_check
      _
    $region59: #{decoder_forward.1} parent=1 // pred_check_branch
      %97 = sbr.rel (0) target = $region61
    $region60: #{decoder_forward.1} parent=1 // pred_region
      %s99 = ssub.s32 512, 512
      %100 = vsyncadd [#allocation8], %s99
      %s101 = sshll.u32 [#allocation7], 4
      %s102 = int_to_ptr.vmem [resolvable:$true] %s101
      %107 = dma.hbm_to_vmem [thread:$0]  %s14, 512, %s102, [#allocation8], 128, 128, 8
    $region61: #{decoder_forward.1} parent=1 // pred_fallthru
      _
    // Predicated region
    $region62: #{decoder_forward.1} parent=1 // pred_check
      _
    $region63: #{decoder_forward.1} parent=1 // pred_check_branch
      %109 = sbr.rel (0) target = $region65
    $region64: #{decoder_forward.1} parent=1 // pred_region
      %s111 = ssub.s32 16, 16
      %112 = vsyncadd [#allocation8], %s111
      %s114 = sshll.u32 [#allocation9], 4
      %s115 = int_to_ptr.vmem [resolvable:$true] %s114
      %117 = dma.hbm_to_vmem [thread:$0]  %s15, 16, %s115, [#allocation8]
    $region65: #{decoder_forward.1} parent=1 // pred_fallthru
      _
    // Predicated region
    $region66: #{decoder_forward.1} parent=1 // pred_check
      _
    $region67: #{decoder_forward.1} parent=1 // pred_check_branch
      %119 = sbr.rel (0) target = $region69
    $region68: #{decoder_forward.1} parent=1 // pred_region
      _
    $region69: #{decoder_forward.1} parent=1 // pred_fallthru
      _
    // Predicated region
    $region70: #{decoder_forward.1} parent=1 // pred_check
      _
    $region71: #{decoder_forward.1} parent=1 // pred_check_branch
      %121 = sbr.rel (0) target = $region73
    $region72: #{decoder_forward.1} parent=1 // pred_region
      %s123 = ssub.s32 32, 32
      %124 = vsyncadd [#allocation11], %s123
      %s125 = sshll.u32 [#allocation10], 4
      %s126 = int_to_ptr.vmem [resolvable:$true] %s125
      %131 = dma.hbm_to_vmem [thread:$0]  %s17, 32, %s126, [#allocation11], 16, 16, 1
    $region73: #{decoder_forward.1} parent=1 // pred_fallthru
      _
    // Predicated region
    $region74: #{decoder_forward.1} parent=1 // pred_check
      _
    $region75: #{decoder_forward.1} parent=1 // pred_check_branch
      %133 = sbr.rel (0) target = $region77
    $region76: #{decoder_forward.1} parent=1 // pred_region
      _
    $region77: #{decoder_forward.1} parent=1 // pred_fallthru
      _
    // Predicated region
    $region78: #{decoder_forward.1} parent=1 // pred_check
      _
    $region79: #{decoder_forward.1} parent=1 // pred_check_branch
      %135 = sbr.rel (0) target = $region81
    $region80: #{decoder_forward.1} parent=1 // pred_region
      %s137 = ssub.s32 32, 32
      %138 = vsyncadd [#allocation11], %s137
      %s139 = sshll.u32 [#allocation12], 4
      %s140 = int_to_ptr.vmem [resolvable:$true] %s139
      %145 = dma.hbm_to_vmem [thread:$0]  %s19, 32, %s140, [#allocation11], 16, 16, 1
    $region81: #{decoder_forward.1} parent=1 // pred_fallthru
      _
    // Predicated region
    $region82: #{decoder_forward.1} parent=1 // pred_check
      _
    $region83: #{decoder_forward.1} parent=1 // pred_check_branch
      %147 = sbr.rel (0) target = $region85
    $region84: #{decoder_forward.1} parent=1 // pred_region
      _
    $region85: #{decoder_forward.1} parent=1 // pred_fallthru
      _
    // Predicated region
    $region86: #{decoder_forward.1} parent=1 // pred_check
      _
    $region87: #{decoder_forward.1} parent=1 // pred_check_branch
      %149 = sbr.rel (0) target = $region89
    $region88: #{decoder_forward.1} parent=1 // pred_region
      %s151 = ssub.s32 32, 32
      %152 = vsyncadd [#allocation14], %s151
      %s153 = sshll.u32 [#allocation13], 4
      %s154 = int_to_ptr.vmem [resolvable:$true] %s153
      %159 = dma.hbm_to_vmem [thread:$0]  %s21, 32, %s154, [#allocation14], 16, 16, 1
    $region89: #{decoder_forward.1} parent=1 // pred_fallthru
      _
    // Predicated region
    $region90: #{decoder_forward.1} parent=1 // pred_check
      _
    $region91: #{decoder_forward.1} parent=1 // pred_check_branch
      %161 = sbr.rel (0) target = $region93
    $region92: #{decoder_forward.1} parent=1 // pred_region
      _
    $region93: #{decoder_forward.1} parent=1 // pred_fallthru
      _
    // Predicated region
    $region94: #{decoder_forward.1} parent=1 // pred_check
      _
    $region95: #{decoder_forward.1} parent=1 // pred_check_branch
      %163 = sbr.rel (0) target = $region97
    $region96: #{decoder_forward.1} parent=1 // pred_region
      %s165 = ssub.s32 32, 32
      %166 = vsyncadd [#allocation14], %s165
      %s167 = sshll.u32 [#allocation15], 4
      %s168 = int_to_ptr.vmem [resolvable:$true] %s167
      %173 = dma.hbm_to_vmem [thread:$0]  %s23, 32, %s168, [#allocation14], 16, 16, 1
    $region97: #{decoder_forward.1} parent=1 // pred_fallthru
      _
    // Predicated region
    $region98: #{decoder_forward.1} parent=1 // pred_check
      _
    $region99: #{decoder_forward.1} parent=1 // pred_check_branch
      %175 = sbr.rel (0) target = $region101
    $region100: #{decoder_forward.1} parent=1 // pred_region
      _
    $region101: #{decoder_forward.1} parent=1 // pred_fallthru
      _
    // Predicated region
    $region102: #{decoder_forward.1} parent=1 // pred_check
      _
    $region103: #{decoder_forward.1} parent=1 // pred_check_branch
      %177 = sbr.rel (0) target = $region105
    $region104: #{decoder_forward.1} parent=1 // pred_region
      %s179 = ssub.s32 32, 32
      %180 = vsyncadd [#allocation17], %s179
      %s181 = sshll.u32 [#allocation16], 4
      %s182 = int_to_ptr.vmem [resolvable:$true] %s181
      %187 = dma.hbm_to_vmem [thread:$0]  %s25, 32, %s182, [#allocation17], 16, 16, 1
    $region105: #{decoder_forward.1} parent=1 // pred_fallthru
      _
    // Predicated region
    $region106: #{decoder_forward.1} parent=1 // pred_check
      _
    $region107: #{decoder_forward.1} parent=1 // pred_check_branch
      %189 = sbr.rel (0) target = $region109
    $region108: #{decoder_forward.1} parent=1 // pred_region
      %s191 = ssub.s32 512, 512
      %192 = vsyncadd [#allocation17], %s191
      %s193 = sshll.u32 [#allocation18], 4
      %s194 = int_to_ptr.vmem [resolvable:$true] %s193
      %199 = dma.hbm_to_vmem [thread:$0]  %s26, 512, %s194, [#allocation17], 128, 128, 8
    $region109: #{decoder_forward.1} parent=1 // pred_fallthru
      _
    // Predicated region
    $region110: #{decoder_forward.1} parent=1 // pred_check
      _
    $region111: #{decoder_forward.1} parent=1 // pred_check_branch
      %201 = sbr.rel (0) target = $region113
    $region112: #{decoder_forward.1} parent=1 // pred_region
      %s203 = ssub.s32 16, 16
      %204 = vsyncadd [#allocation20], %s203
      %s206 = sshll.u32 [#allocation19], 4
      %s207 = int_to_ptr.vmem [resolvable:$true] %s206
      %209 = dma.hbm_to_vmem [thread:$0]  %s27, 16, %s207, [#allocation20]
    $region113: #{decoder_forward.1} parent=1 // pred_fallthru
      _
    // Predicated region
    $region114: #{decoder_forward.1} parent=1 // pred_check
      _
    $region115: #{decoder_forward.1} parent=1 // pred_check_branch
      %211 = sbr.rel (0) target = $region117
    $region116: #{decoder_forward.1} parent=1 // pred_region
      %212 = dma.done [#allocation3], 256
    $region117: #{decoder_forward.1} parent=1 // pred_fallthru
      _
    // Predicated region
    $region118: #{decoder_forward.1} parent=1 // pred_check
      _
    $region119: #{decoder_forward.1} parent=1 // pred_check_branch
      %214 = sbr.rel (0) target = $region121
    $region120: #{decoder_forward.1} parent=1 // pred_region
      %215 = dma.done [#allocation5], 16
    $region121: #{decoder_forward.1} parent=1 // pred_fallthru
      _
    // Predicated region
    $region122: #{decoder_forward.1} parent=1 // pred_check
      _
    $region123: #{decoder_forward.1} parent=1 // pred_check_branch
      %217 = sbr.rel (0) target = $region125
    $region124: #{decoder_forward.1} parent=1 // pred_region
      %218 = dma.done [#allocation5], 32
    $region125: #{decoder_forward.1} parent=1 // pred_fallthru
      _
    // Predicated region
    $region126: #{decoder_forward.1} parent=1 // pred_check
      _
    $region127: #{decoder_forward.1} parent=1 // pred_check_branch
      %220 = sbr.rel (0) target = $region129
    $region128: #{decoder_forward.1} parent=1 // pred_region
      %221 = dma.done [#allocation8], 512
    $region129: #{decoder_forward.1} parent=1 // pred_fallthru
      _
    // Predicated region
    $region130: #{decoder_forward.1} parent=1 // pred_check
      _
    $region131: #{decoder_forward.1} parent=1 // pred_check_branch
      %223 = sbr.rel (0) target = $region133
    $region132: #{decoder_forward.1} parent=1 // pred_region
      %224 = dma.done [#allocation8], 16
    $region133: #{decoder_forward.1} parent=1 // pred_fallthru
      _
    // Predicated region
    $region134: #{decoder_forward.1} parent=1 // pred_check
      _
    $region135: #{decoder_forward.1} parent=1 // pred_check_branch
      %226 = sbr.rel (0) target = $region137
    $region136: #{decoder_forward.1} parent=1 // pred_region
      %227 = dma.done [#allocation11], 32
    $region137: #{decoder_forward.1} parent=1 // pred_fallthru
      _
    // Predicated region
    $region138: #{decoder_forward.1} parent=1 // pred_check
      _
    $region139: #{decoder_forward.1} parent=1 // pred_check_branch
      %229 = sbr.rel (0) target = $region141
    $region140: #{decoder_forward.1} parent=1 // pred_region
      %230 = dma.done [#allocation11], 32
    $region141: #{decoder_forward.1} parent=1 // pred_fallthru
      _
    // Predicated region
    $region142: #{decoder_forward.1} parent=1 // pred_check
      _
    $region143: #{decoder_forward.1} parent=1 // pred_check_branch
      %232 = sbr.rel (0) target = $region145
    $region144: #{decoder_forward.1} parent=1 // pred_region
      %233 = dma.done [#allocation14], 32
    $region145: #{decoder_forward.1} parent=1 // pred_fallthru
      _
    // Predicated region
    $region146: #{decoder_forward.1} parent=1 // pred_check
      _
    $region147: #{decoder_forward.1} parent=1 // pred_check_branch
      %235 = sbr.rel (0) target = $region149
    $region148: #{decoder_forward.1} parent=1 // pred_region
      %236 = dma.done [#allocation14], 32
    $region149: #{decoder_forward.1} parent=1 // pred_fallthru
      _
    // Predicated region
    $region150: #{decoder_forward.1} parent=1 // pred_check
      _
    $region151: #{decoder_forward.1} parent=1 // pred_check_branch
      %238 = sbr.rel (0) target = $region153
    $region152: #{decoder_forward.1} parent=1 // pred_region
      %239 = dma.done [#allocation17], 32
    $region153: #{decoder_forward.1} parent=1 // pred_fallthru
      _
    // Predicated region
    $region154: #{decoder_forward.1} parent=1 // pred_check
      _
    $region155: #{decoder_forward.1} parent=1 // pred_check_branch
      %241 = sbr.rel (0) target = $region157
    $region156: #{decoder_forward.1} parent=1 // pred_region
      %242 = dma.done [#allocation17], 512
    $region157: #{decoder_forward.1} parent=1 // pred_fallthru
      _
    // Predicated region
    $region158: #{decoder_forward.1} parent=1 // pred_check
      _
    $region159: #{decoder_forward.1} parent=1 // pred_check_branch
      %244 = sbr.rel (0) target = $region161
    $region160: #{decoder_forward.1} parent=1 // pred_region
      %245 = dma.done [#allocation20], 16
    $region161: #{decoder_forward.1} parent=1 // pred_fallthru
      _
    %v246 = vlaneseq
    %v247 = vand.u32 %v246, 127
    %v248 = vld [vmem:[%s0] sm:$0xff]
    %v249 = vld [vmem:[%s0 + $0x8] sm:$0xff]
    %250 = vset.pattern.permute.xlu0 0
    %251 = vperm.xlu0 %250, %v248
    %v252 = vpop.permute.xlu0 %251
    %253 = vset.pattern.permute.xlu0 0
    %254 = vperm.xlu0 %253, %v249
    %v255 = vpop.permute.xlu0 %254
    %vm256 = vcmp.eq.s32.totalorder %v247, %v252
    %vm257 = vcmp.eq.s32.totalorder %v247, %v255
    %v258 = vsel %vm256, 1, 0
    %v259 = vsel %vm257, 1, 0
    %v260 = vcvt.s32.f32 %v258
    %v261 = vcvt.s32.f32 %v259
    %v262 = vld [vmem:[#allocation2] sm:$0xff]
    %v263 = vld [vmem:[#allocation2 + $0x8] sm:$0xff]
    %v264 = vld [vmem:[%s4] sm:$0xff]
    %v265 = vld [vmem:[%s4 + $0x8] sm:$0xff]
    %vm266 = vcmask 130048
    %v268 = vsel %vm266, %v260, 0
    %v271 = vsel %vm266, %v261, 0
    %273 = vmatprep.subr.mxu0 0.0
    %274 = vmatpush1.msra.mxu0 %v262
    %275 = vmatprep.subr.mxu0 0.0
    %276 = vmatpush1.msra.mxu0 %v263
    %277 = vmatprep.subr.mxu0 0.0
    %278 = vmatpush1.msra.mxu0 0.0
    %279 = vmatprep.subr.mxu0 0.0
    %280 = vmatpush1.msra.mxu0 0.0
    %281 = vmatprep.subr.mxu0 0.0
    %282 = vmatpush1.msra.mxu0 0.0
    %283 = vmatprep.subr.mxu0 0.0
    %284 = vmatpush1.msra.mxu0 0.0
    %285 = vmatprep.subr.mxu0 0.0
    %286 = vmatpush1.msra.mxu0 0.0
    %287 = vmatprep.subr.mxu0 0.0
    %288 = vmatpush1.msra.mxu0 0.0
    %289 = vmatprep.subr.mxu0 0.0
    %290 = vmatpush1.msra.mxu0 0.0
    %291 = vmatprep.subr.mxu0 0.0
    %292 = vmatpush1.msra.mxu0 0.0
    %293 = vmatprep.subr.mxu0 0.0
    %294 = vmatpush1.msra.mxu0 0.0
    %295 = vmatprep.subr.mxu0 0.0
    %296 = vmatpush1.msra.mxu0 0.0
    %297 = vmatprep.subr.mxu0 0.0
    %298 = vmatpush1.msra.mxu0 0.0
    %299 = vmatprep.subr.mxu0 0.0
    %300 = vmatpush1.msra.mxu0 0.0
    %301 = vmatprep.subr.mxu0 0.0
    %302 = vmatpush1.msra.mxu0 0.0
    %303 = vmatprep.subr.mxu0 0.0
    %304 = vmatpush1.msra.mxu0 0.0
    %305 = vmatprep.subr.mxu0 0.0
    %306 = vmatpush1.msra.mxu0 0.0
    %307 = vmatprep.subr.mxu0 0.0
    %308 = vmatpush1.msra.mxu0 0.0
    %309 = vmatprep.subr.mxu0 0.0
    %310 = vmatpush1.msra.mxu0 0.0
    %311 = vmatprep.subr.mxu0 0.0
    %312 = vmatpush1.msra.mxu0 0.0
    %313 = vmatprep.subr.mxu0 0.0
    %314 = vmatpush1.msra.mxu0 0.0
    %315 = vmatprep.subr.mxu0 0.0
    %316 = vmatpush1.msra.mxu0 0.0
    %317 = vmatprep.subr.mxu0 0.0
    %318 = vmatpush1.msra.mxu0 0.0
    %319 = vmatprep.subr.mxu0 0.0
    %320 = vmatpush1.msra.mxu0 0.0
    %321 = vmatprep.subr.mxu0 0.0
    %322 = vmatpush1.msra.mxu0 0.0
    %323 = vmatprep.subr.mxu0 0.0
    %324 = vmatpush1.msra.mxu0 0.0
    %325 = vmatprep.subr.mxu0 0.0
    %326 = vmatpush1.msra.mxu0 0.0
    %327 = vmatprep.subr.mxu0 0.0
    %328 = vmatpush1.msra.mxu0 0.0
    %329 = vmatprep.subr.mxu0 0.0
    %330 = vmatpush1.msra.mxu0 0.0
    %331 = vmatprep.subr.mxu0 0.0
    %332 = vmatpush1.msra.mxu0 0.0
    %333 = vmatprep.subr.mxu0 0.0
    %334 = vmatpush1.msra.mxu0 0.0
    %335 = vmatprep.subr.mxu0 0.0
    %336 = vmatpush1.msra.mxu0 0.0
    %337 = vmatprep.mubr.f32.mxu0 0.0
    %338 = vmatmul.mubr.f32.gmra.mrb[0].mxu0 %v268
    %v339 = vpop.f32.mrb[0].mxu0
    %v340 = vadd.f32 %v264, %v339
    %v341 = vpop.f32.mrb[0].mxu0
    %342 = vmatprep.mubr.f32.mxu0 0.0
    %343 = vmatmul.mubr.f32.gmra.mrb[0].mxu0 %v271
    %v344 = vpop.f32.mrb[0].mxu0
    %v345 = vadd.f32 %v265, %v344
    %v346 = vpop.f32.mrb[0].mxu0
    %347 = vdwg.mxu0
    %v348 = vld [vmem:[%s2] sm:$0xff]
    %v349 = vld [vmem:[%s2 + $0x8] sm:$0xff]
    %v350 = vld [vmem:[%s3] sm:$0xff]
    %v351 = vld [vmem:[%s3 + $0x8] sm:$0xff]
    %v352 = vld [vmem:[%s6] sm:$0xff]
    %v353 = vld [vmem:[%s6 + $0x8] sm:$0xff]
    %v354 = vld [vmem:[%s6 + $0x10] sm:$0xff]
    %v355 = vld [vmem:[%s6 + $0x18] sm:$0xff]
    %v356 = vld [vmem:[%s7] sm:$0x1]
    %v358 = vlaneseq
    %v359 = vshrl.u32 %v358, 7
    %v360 = vsub.s32 0, %v359
    %v361 = vrot.slane %v356, %v360
    %vm363 = vcmask 261120
    %v365 = vsel %vm363, %v340, 0
    %v368 = vsel %vm363, %v345, 0
    %370 = vmatprep.subr.mxu0 0.0
    %371 = vmatpush1.msra.mxu0 %v352
    %372 = vmatprep.subr.mxu0 0.0
    %373 = vmatpush1.msra.mxu0 %v353
    %374 = vmatprep.subr.mxu0 0.0
    %375 = vmatpush1.msra.mxu0 %v354
    %376 = vmatprep.subr.mxu0 0.0
    %377 = vmatpush1.msra.mxu0 %v355
    %378 = vmatprep.subr.mxu0 0.0
    %379 = vmatpush1.msra.mxu0 0.0
    %380 = vmatprep.subr.mxu0 0.0
    %381 = vmatpush1.msra.mxu0 0.0
    %382 = vmatprep.subr.mxu0 0.0
    %383 = vmatpush1.msra.mxu0 0.0
    %384 = vmatprep.subr.mxu0 0.0
    %385 = vmatpush1.msra.mxu0 0.0
    %386 = vmatprep.subr.mxu0 0.0
    %387 = vmatpush1.msra.mxu0 0.0
    %388 = vmatprep.subr.mxu0 0.0
    %389 = vmatpush1.msra.mxu0 0.0
    %390 = vmatprep.subr.mxu0 0.0
    %391 = vmatpush1.msra.mxu0 0.0
    %392 = vmatprep.subr.mxu0 0.0
    %393 = vmatpush1.msra.mxu0 0.0
    %394 = vmatprep.subr.mxu0 0.0
    %395 = vmatpush1.msra.mxu0 0.0
    %396 = vmatprep.subr.mxu0 0.0
    %397 = vmatpush1.msra.mxu0 0.0
    %398 = vmatprep.subr.mxu0 0.0
    %399 = vmatpush1.msra.mxu0 0.0
    %400 = vmatprep.subr.mxu0 0.0
    %401 = vmatpush1.msra.mxu0 0.0
    %402 = vmatprep.subr.mxu0 0.0
    %403 = vmatpush1.msra.mxu0 0.0
    %404 = vmatprep.subr.mxu0 0.0
    %405 = vmatpush1.msra.mxu0 0.0
    %406 = vmatprep.subr.mxu0 0.0
    %407 = vmatpush1.msra.mxu0 0.0
    %408 = vmatprep.subr.mxu0 0.0
    %409 = vmatpush1.msra.mxu0 0.0
    %410 = vmatprep.subr.mxu0 0.0
    %411 = vmatpush1.msra.mxu0 0.0
    %412 = vmatprep.subr.mxu0 0.0
    %413 = vmatpush1.msra.mxu0 0.0
    %414 = vmatprep.subr.mxu0 0.0
    %415 = vmatpush1.msra.mxu0 0.0
    %416 = vmatprep.subr.mxu0 0.0
    %417 = vmatpush1.msra.mxu0 0.0
    %418 = vmatprep.subr.mxu0 0.0
    %419 = vmatpush1.msra.mxu0 0.0
    %420 = vmatprep.subr.mxu0 0.0
    %421 = vmatpush1.msra.mxu0 0.0
    %422 = vmatprep.subr.mxu0 0.0
    %423 = vmatpush1.msra.mxu0 0.0
    %424 = vmatprep.subr.mxu0 0.0
    %425 = vmatpush1.msra.mxu0 0.0
    %426 = vmatprep.subr.mxu0 0.0
    %427 = vmatpush1.msra.mxu0 0.0
    %428 = vmatprep.subr.mxu0 0.0
    %429 = vmatpush1.msra.mxu0 0.0
    %430 = vmatprep.subr.mxu0 0.0
    %431 = vmatpush1.msra.mxu0 0.0
    %432 = vmatprep.subr.mxu0 0.0
    %433 = vmatpush1.msra.mxu0 0.0
    %434 = vmatprep.mubr.f32.mxu0 0.0
    %435 = vmatmul.mubr.f32.gmra.mrb[0].mxu0 %v365
    %v436 = vpop.f32.mrb[0].mxu0
    %v437 = vadd.f32 %v361, %v436
    %v438 = vpop.f32.mrb[0].mxu0
    %439 = vmatprep.mubr.f32.mxu0 0.0
    %440 = vmatmul.mubr.f32.gmra.mrb[0].mxu0 %v368
    %v441 = vpop.f32.mrb[0].mxu0
    %v442 = vadd.f32 %v361, %v441
    %v443 = vpop.f32.mrb[0].mxu0
    %444 = vdwg.mxu0
    %v445 = vld [vmem:[%s8] sm:$0xff]
    %v446 = vld [vmem:[%s8 + $0x8] sm:$0xff]
    %v447 = vld [vmem:[%s8 + $0x10] sm:$0xff]
    %v448 = vld [vmem:[%s8 + $0x18] sm:$0xff]
    %v449 = vld [vmem:[%s9] sm:$0x1]
    %452 = vrot.lane.b32.xlu0 %v437, 96
    %v453 = vpop.permute.xlu0 %452
    %454 = vrot.lane.b32.xlu0 %v442, 96
    %v455 = vpop.permute.xlu0 %454
    %vm456 = vcmask 64512
    %v457 = vsel %vm456, %v437, 0
    %v459 = vsel %vm456, %v442, 0
    %v461 = vsel %vm456, %v453, 0
    %v463 = vsel %vm456, %v455, 0
    %465 = vmatprep.subr.mxu0 0.0
    %466 = vmatpush1.xpose.msra.mxu0 %v461
    %467 = vmatprep.subr.mxu0 0.0
    %468 = vmatpush1.xpose.msra.mxu0 %v463
    %469 = vmatprep.subr.mxu0 0.0
    %470 = vmatpush1.xpose.msra.mxu0 0.0
    %471 = vmatprep.subr.mxu0 0.0
    %472 = vmatpush1.xpose.msra.mxu0 0.0
    %473 = vmatprep.subr.mxu0 0.0
    %474 = vmatpush1.xpose.msra.mxu0 0.0
    %475 = vmatprep.subr.mxu0 0.0
    %476 = vmatpush1.xpose.msra.mxu0 0.0
    %477 = vmatprep.subr.mxu0 0.0
    %478 = vmatpush1.xpose.msra.mxu0 0.0
    %479 = vmatprep.subr.mxu0 0.0
    %480 = vmatpush1.xpose.msra.mxu0 0.0
    %481 = vmatprep.subr.mxu0 0.0
    %482 = vmatpush1.xpose.msra.mxu0 0.0
    %483 = vmatprep.subr.mxu0 0.0
    %484 = vmatpush1.xpose.msra.mxu0 0.0
    %485 = vmatprep.subr.mxu0 0.0
    %486 = vmatpush1.xpose.msra.mxu0 0.0
    %487 = vmatprep.subr.mxu0 0.0
    %488 = vmatpush1.xpose.msra.mxu0 0.0
    %489 = vmatprep.subr.mxu0 0.0
    %490 = vmatpush1.xpose.msra.mxu0 0.0
    %491 = vmatprep.subr.mxu0 0.0
    %492 = vmatpush1.xpose.msra.mxu0 0.0
    %493 = vmatprep.subr.mxu0 0.0
    %494 = vmatpush1.xpose.msra.mxu0 0.0
    %495 = vmatprep.subr.mxu0 0.0
    %496 = vmatpush1.xpose.msra.mxu0 0.0
    %497 = vmatprep.subr.mxu0 0.0
    %498 = vmatpush1.xpose.msra.mxu0 0.0
    %499 = vmatprep.subr.mxu0 0.0
    %500 = vmatpush1.xpose.msra.mxu0 0.0
    %501 = vmatprep.subr.mxu0 0.0
    %502 = vmatpush1.xpose.msra.mxu0 0.0
    %503 = vmatprep.subr.mxu0 0.0
    %504 = vmatpush1.xpose.msra.mxu0 0.0
    %505 = vmatprep.subr.mxu0 0.0
    %506 = vmatpush1.xpose.msra.mxu0 0.0
    %507 = vmatprep.subr.mxu0 0.0
    %508 = vmatpush1.xpose.msra.mxu0 0.0
    %509 = vmatprep.subr.mxu0 0.0
    %510 = vmatpush1.xpose.msra.mxu0 0.0
    %511 = vmatprep.subr.mxu0 0.0
    %512 = vmatpush1.xpose.msra.mxu0 0.0
    %513 = vmatprep.subr.mxu0 0.0
    %514 = vmatpush1.xpose.msra.mxu0 0.0
    %515 = vmatprep.subr.mxu0 0.0
    %516 = vmatpush1.xpose.msra.mxu0 0.0
    %517 = vmatprep.subr.mxu0 0.0
    %518 = vmatpush1.xpose.msra.mxu0 0.0
    %519 = vmatprep.subr.mxu0 0.0
    %520 = vmatpush1.xpose.msra.mxu0 0.0
    %521 = vmatprep.subr.mxu0 0.0
    %522 = vmatpush1.xpose.msra.mxu0 0.0
    %523 = vmatprep.subr.mxu0 0.0
    %524 = vmatpush1.xpose.msra.mxu0 0.0
    %525 = vmatprep.subr.mxu0 0.0
    %526 = vmatpush1.xpose.msra.mxu0 0.0
    %527 = vmatprep.subr.mxu0 0.0
    %528 = vmatpush1.xpose.msra.mxu0 0.0
    %529 = vmatprep.mubr.f32.mxu0 0.0
    %530 = vmatmul.mubr.f32.gmra.mrb[0].mxu0 %v457
    %v531 = vpop.f32.mrb[0].mxu0
    %v532 = vadd.f32 %v348, %v531
    %v533 = vpop.f32.mrb[0].mxu0
    %534 = vmatprep.mubr.f32.mxu0 0.0
    %535 = vmatmul.mubr.f32.gmra.mrb[0].mxu0 %v459
    %v536 = vpop.f32.mrb[0].mxu0
    %v537 = vadd.f32 %v349, %v536
    %v538 = vpop.f32.mrb[0].mxu0
    %539 = vdwg.mxu0
    %v540 = vsel %vm266, %v532, -inf
    %541 = vmax.xlane.f32.xlu0 %v540
    %v542 = vpop.xlane.xlu0 %541
    %v543 = vsel %vm266, %v537, -inf
    %544 = vmax.xlane.f32.xlu0 %v543
    %v545 = vpop.xlane.xlu0 %544
    %v546 = vsub.f32 %v532, %v542
    %v547 = vsub.f32 %v537, %v545
    %v548 = vmul.f32 %v546, 1.442695
    %v549 = vpow.pop %v548
    %v550 = vmul.f32 %v547, 1.442695
    %v551 = vpow.pop %v550
    %v552 = vsel %vm266, %v549, 0.0
    %553 = vadd.xlane.f32.xlu0 %v552
    %v554 = vpop.xlane.xlu0 %553
    %v555 = vsel %vm266, %v551, 0.0
    %556 = vadd.xlane.f32.xlu0 %v555
    %v557 = vpop.xlane.xlu0 %556
    %v558 = vrcp.pop %v554
    %v559 = vrcp.pop %v557
    %v560 = vmul.f32 %v549, %v558
    %v561 = vmul.f32 %v551, %v559
    %562 = vrot.lane.b32.xlu0 %v437, 64
    %v563 = vpop.permute.xlu0 %562
    %564 = vrot.lane.b32.xlu0 %v442, 64
    %v565 = vpop.permute.xlu0 %564
    %v569 = vsel %vm266, %v560, 0
    %v572 = vsel %vm266, %v561, 0
    %574 = vmatprep.subr.mxu0 0.0
    %575 = vmatpush1.msra.mxu0 %v563
    %576 = vmatprep.subr.mxu0 0.0
    %577 = vmatpush1.msra.mxu0 %v565
    %578 = vmatprep.subr.mxu0 0.0
    %579 = vmatpush1.msra.mxu0 0.0
    %580 = vmatprep.subr.mxu0 0.0
    %581 = vmatpush1.msra.mxu0 0.0
    %582 = vmatprep.subr.mxu0 0.0
    %583 = vmatpush1.msra.mxu0 0.0
    %584 = vmatprep.subr.mxu0 0.0
    %585 = vmatpush1.msra.mxu0 0.0
    %586 = vmatprep.subr.mxu0 0.0
    %587 = vmatpush1.msra.mxu0 0.0
    %588 = vmatprep.subr.mxu0 0.0
    %589 = vmatpush1.msra.mxu0 0.0
    %590 = vmatprep.subr.mxu0 0.0
    %591 = vmatpush1.msra.mxu0 0.0
    %592 = vmatprep.subr.mxu0 0.0
    %593 = vmatpush1.msra.mxu0 0.0
    %594 = vmatprep.subr.mxu0 0.0
    %595 = vmatpush1.msra.mxu0 0.0
    %596 = vmatprep.subr.mxu0 0.0
    %597 = vmatpush1.msra.mxu0 0.0
    %598 = vmatprep.subr.mxu0 0.0
    %599 = vmatpush1.msra.mxu0 0.0
    %600 = vmatprep.subr.mxu0 0.0
    %601 = vmatpush1.msra.mxu0 0.0
    %602 = vmatprep.subr.mxu0 0.0
    %603 = vmatpush1.msra.mxu0 0.0
    %604 = vmatprep.subr.mxu0 0.0
    %605 = vmatpush1.msra.mxu0 0.0
    %606 = vmatprep.subr.mxu0 0.0
    %607 = vmatpush1.msra.mxu0 0.0
    %608 = vmatprep.subr.mxu0 0.0
    %609 = vmatpush1.msra.mxu0 0.0
    %610 = vmatprep.subr.mxu0 0.0
    %611 = vmatpush1.msra.mxu0 0.0
    %612 = vmatprep.subr.mxu0 0.0
    %613 = vmatpush1.msra.mxu0 0.0
    %614 = vmatprep.subr.mxu0 0.0
    %615 = vmatpush1.msra.mxu0 0.0
    %616 = vmatprep.subr.mxu0 0.0
    %617 = vmatpush1.msra.mxu0 0.0
    %618 = vmatprep.subr.mxu0 0.0
    %619 = vmatpush1.msra.mxu0 0.0
    %620 = vmatprep.subr.mxu0 0.0
    %621 = vmatpush1.msra.mxu0 0.0
    %622 = vmatprep.subr.mxu0 0.0
    %623 = vmatpush1.msra.mxu0 0.0
    %624 = vmatprep.subr.mxu0 0.0
    %625 = vmatpush1.msra.mxu0 0.0
    %626 = vmatprep.subr.mxu0 0.0
    %627 = vmatpush1.msra.mxu0 0.0
    %628 = vmatprep.subr.mxu0 0.0
    %629 = vmatpush1.msra.mxu0 0.0
    %630 = vmatprep.subr.mxu0 0.0
    %631 = vmatpush1.msra.mxu0 0.0
    %632 = vmatprep.subr.mxu0 0.0
    %633 = vmatpush1.msra.mxu0 0.0
    %634 = vmatprep.subr.mxu0 0.0
    %635 = vmatpush1.msra.mxu0 0.0
    %636 = vmatprep.subr.mxu0 0.0
    %637 = vmatpush1.msra.mxu0 0.0
    %638 = vmatprep.mubr.f32.mxu0 0.0
    %639 = vmatmul.mubr.f32.gmra.mrb[0].mxu0 %v569
    %v640 = vpop.f32.mrb[0].mxu0
    %v641 = vadd.f32 0.0, %v640
    %v642 = vpop.f32.mrb[0].mxu0
    %643 = vmatprep.mubr.f32.mxu0 0.0
    %644 = vmatmul.mubr.f32.gmra.mrb[0].mxu0 %v572
    %v645 = vpop.f32.mrb[0].mxu0
    %v646 = vadd.f32 0.0, %v645
    %v647 = vpop.f32.mrb[0].mxu0
    %648 = vdwg.mxu0
    %649 = vrot.lane.b32.xlu0 %v437, 120
    %v650 = vpop.permute.xlu0 %649
    %651 = vrot.lane.b32.xlu0 %v442, 120
    %v652 = vpop.permute.xlu0 %651
    %653 = vrot.lane.b32.xlu0 %v437, 88
    %v654 = vpop.permute.xlu0 %653
    %655 = vrot.lane.b32.xlu0 %v442, 88
    %v656 = vpop.permute.xlu0 %655
    %v657 = vsel %vm456, %v650, 0
    %v659 = vsel %vm456, %v652, 0
    %v661 = vsel %vm456, %v654, 0
    %v663 = vsel %vm456, %v656, 0
    %665 = vmatprep.subr.mxu0 0.0
    %666 = vmatpush1.xpose.msra.mxu0 %v661
    %667 = vmatprep.subr.mxu0 0.0
    %668 = vmatpush1.xpose.msra.mxu0 %v663
    %669 = vmatprep.subr.mxu0 0.0
    %670 = vmatpush1.xpose.msra.mxu0 0.0
    %671 = vmatprep.subr.mxu0 0.0
    %672 = vmatpush1.xpose.msra.mxu0 0.0
    %673 = vmatprep.subr.mxu0 0.0
    %674 = vmatpush1.xpose.msra.mxu0 0.0
    %675 = vmatprep.subr.mxu0 0.0
    %676 = vmatpush1.xpose.msra.mxu0 0.0
    %677 = vmatprep.subr.mxu0 0.0
    %678 = vmatpush1.xpose.msra.mxu0 0.0
    %679 = vmatprep.subr.mxu0 0.0
    %680 = vmatpush1.xpose.msra.mxu0 0.0
    %681 = vmatprep.subr.mxu0 0.0
    %682 = vmatpush1.xpose.msra.mxu0 0.0
    %683 = vmatprep.subr.mxu0 0.0
    %684 = vmatpush1.xpose.msra.mxu0 0.0
    %685 = vmatprep.subr.mxu0 0.0
    %686 = vmatpush1.xpose.msra.mxu0 0.0
    %687 = vmatprep.subr.mxu0 0.0
    %688 = vmatpush1.xpose.msra.mxu0 0.0
    %689 = vmatprep.subr.mxu0 0.0
    %690 = vmatpush1.xpose.msra.mxu0 0.0
    %691 = vmatprep.subr.mxu0 0.0
    %692 = vmatpush1.xpose.msra.mxu0 0.0
    %693 = vmatprep.subr.mxu0 0.0
    %694 = vmatpush1.xpose.msra.mxu0 0.0
    %695 = vmatprep.subr.mxu0 0.0
    %696 = vmatpush1.xpose.msra.mxu0 0.0
    %697 = vmatprep.subr.mxu0 0.0
    %698 = vmatpush1.xpose.msra.mxu0 0.0
    %699 = vmatprep.subr.mxu0 0.0
    %700 = vmatpush1.xpose.msra.mxu0 0.0
    %701 = vmatprep.subr.mxu0 0.0
    %702 = vmatpush1.xpose.msra.mxu0 0.0
    %703 = vmatprep.subr.mxu0 0.0
    %704 = vmatpush1.xpose.msra.mxu0 0.0
    %705 = vmatprep.subr.mxu0 0.0
    %706 = vmatpush1.xpose.msra.mxu0 0.0
    %707 = vmatprep.subr.mxu0 0.0
    %708 = vmatpush1.xpose.msra.mxu0 0.0
    %709 = vmatprep.subr.mxu0 0.0
    %710 = vmatpush1.xpose.msra.mxu0 0.0
    %711 = vmatprep.subr.mxu0 0.0
    %712 = vmatpush1.xpose.msra.mxu0 0.0
    %713 = vmatprep.subr.mxu0 0.0
    %714 = vmatpush1.xpose.msra.mxu0 0.0
    %715 = vmatprep.subr.mxu0 0.0
    %716 = vmatpush1.xpose.msra.mxu0 0.0
    %717 = vmatprep.subr.mxu0 0.0
    %718 = vmatpush1.xpose.msra.mxu0 0.0
    %719 = vmatprep.subr.mxu0 0.0
    %720 = vmatpush1.xpose.msra.mxu0 0.0
    %721 = vmatprep.subr.mxu0 0.0
    %722 = vmatpush1.xpose.msra.mxu0 0.0
    %723 = vmatprep.subr.mxu0 0.0
    %724 = vmatpush1.xpose.msra.mxu0 0.0
    %725 = vmatprep.subr.mxu0 0.0
    %726 = vmatpush1.xpose.msra.mxu0 0.0
    %727 = vmatprep.subr.mxu0 0.0
    %728 = vmatpush1.xpose.msra.mxu0 0.0
    %729 = vmatprep.mubr.f32.mxu0 0.0
    %730 = vmatmul.mubr.f32.gmra.mrb[0].mxu0 %v657
    %v731 = vpop.f32.mrb[0].mxu0
    %v732 = vadd.f32 %v348, %v731
    %v733 = vpop.f32.mrb[0].mxu0
    %734 = vmatprep.mubr.f32.mxu0 0.0
    %735 = vmatmul.mubr.f32.gmra.mrb[0].mxu0 %v659
    %v736 = vpop.f32.mrb[0].mxu0
    %v737 = vadd.f32 %v349, %v736
    %v738 = vpop.f32.mrb[0].mxu0
    %739 = vdwg.mxu0
    %v740 = vsel %vm266, %v732, -inf
    %741 = vmax.xlane.f32.xlu0 %v740
    %v742 = vpop.xlane.xlu0 %741
    %v743 = vsel %vm266, %v737, -inf
    %744 = vmax.xlane.f32.xlu0 %v743
    %v745 = vpop.xlane.xlu0 %744
    %v746 = vsub.f32 %v732, %v742
    %v747 = vsub.f32 %v737, %v745
    %v748 = vmul.f32 %v746, 1.442695
    %v749 = vpow.pop %v748
    %v750 = vmul.f32 %v747, 1.442695
    %v751 = vpow.pop %v750
    %v752 = vsel %vm266, %v749, 0.0
    %753 = vadd.xlane.f32.xlu0 %v752
    %v754 = vpop.xlane.xlu0 %753
    %v755 = vsel %vm266, %v751, 0.0
    %756 = vadd.xlane.f32.xlu0 %v755
    %v757 = vpop.xlane.xlu0 %756
    %v758 = vrcp.pop %v754
    %v759 = vrcp.pop %v757
    %v760 = vmul.f32 %v749, %v758
    %v761 = vmul.f32 %v751, %v759
    %762 = vrot.lane.b32.xlu0 %v437, 56
    %v763 = vpop.permute.xlu0 %762
    %764 = vrot.lane.b32.xlu0 %v442, 56
    %v765 = vpop.permute.xlu0 %764
    %v769 = vsel %vm266, %v760, 0
    %v772 = vsel %vm266, %v761, 0
    %774 = vmatprep.subr.mxu0 0.0
    %775 = vmatpush1.msra.mxu0 %v763
    %776 = vmatprep.subr.mxu0 0.0
    %777 = vmatpush1.msra.mxu0 %v765
    %778 = vmatprep.subr.mxu0 0.0
    %779 = vmatpush1.msra.mxu0 0.0
    %780 = vmatprep.subr.mxu0 0.0
    %781 = vmatpush1.msra.mxu0 0.0
    %782 = vmatprep.subr.mxu0 0.0
    %783 = vmatpush1.msra.mxu0 0.0
    %784 = vmatprep.subr.mxu0 0.0
    %785 = vmatpush1.msra.mxu0 0.0
    %786 = vmatprep.subr.mxu0 0.0
    %787 = vmatpush1.msra.mxu0 0.0
    %788 = vmatprep.subr.mxu0 0.0
    %789 = vmatpush1.msra.mxu0 0.0
    %790 = vmatprep.subr.mxu0 0.0
    %791 = vmatpush1.msra.mxu0 0.0
    %792 = vmatprep.subr.mxu0 0.0
    %793 = vmatpush1.msra.mxu0 0.0
    %794 = vmatprep.subr.mxu0 0.0
    %795 = vmatpush1.msra.mxu0 0.0
    %796 = vmatprep.subr.mxu0 0.0
    %797 = vmatpush1.msra.mxu0 0.0
    %798 = vmatprep.subr.mxu0 0.0
    %799 = vmatpush1.msra.mxu0 0.0
    %800 = vmatprep.subr.mxu0 0.0
    %801 = vmatpush1.msra.mxu0 0.0
    %802 = vmatprep.subr.mxu0 0.0
    %803 = vmatpush1.msra.mxu0 0.0
    %804 = vmatprep.subr.mxu0 0.0
    %805 = vmatpush1.msra.mxu0 0.0
    %806 = vmatprep.subr.mxu0 0.0
    %807 = vmatpush1.msra.mxu0 0.0
    %808 = vmatprep.subr.mxu0 0.0
    %809 = vmatpush1.msra.mxu0 0.0
    %810 = vmatprep.subr.mxu0 0.0
    %811 = vmatpush1.msra.mxu0 0.0
    %812 = vmatprep.subr.mxu0 0.0
    %813 = vmatpush1.msra.mxu0 0.0
    %814 = vmatprep.subr.mxu0 0.0
    %815 = vmatpush1.msra.mxu0 0.0
    %816 = vmatprep.subr.mxu0 0.0
    %817 = vmatpush1.msra.mxu0 0.0
    %818 = vmatprep.subr.mxu0 0.0
    %819 = vmatpush1.msra.mxu0 0.0
    %820 = vmatprep.subr.mxu0 0.0
    %821 = vmatpush1.msra.mxu0 0.0
    %822 = vmatprep.subr.mxu0 0.0
    %823 = vmatpush1.msra.mxu0 0.0
    %824 = vmatprep.subr.mxu0 0.0
    %825 = vmatpush1.msra.mxu0 0.0
    %826 = vmatprep.subr.mxu0 0.0
    %827 = vmatpush1.msra.mxu0 0.0
    %828 = vmatprep.subr.mxu0 0.0
    %829 = vmatpush1.msra.mxu0 0.0
    %830 = vmatprep.subr.mxu0 0.0
    %831 = vmatpush1.msra.mxu0 0.0
    %832 = vmatprep.subr.mxu0 0.0
    %833 = vmatpush1.msra.mxu0 0.0
    %834 = vmatprep.subr.mxu0 0.0
    %835 = vmatpush1.msra.mxu0 0.0
    %836 = vmatprep.subr.mxu0 0.0
    %837 = vmatpush1.msra.mxu0 0.0
    %838 = vmatprep.mubr.f32.mxu0 0.0
    %839 = vmatmul.mubr.f32.gmra.mrb[0].mxu0 %v769
    %v840 = vpop.f32.mrb[0].mxu0
    %v841 = vadd.f32 0.0, %v840
    %v842 = vpop.f32.mrb[0].mxu0
    %843 = vmatprep.mubr.f32.mxu0 0.0
    %844 = vmatmul.mubr.f32.gmra.mrb[0].mxu0 %v772
    %v845 = vpop.f32.mrb[0].mxu0
    %v846 = vadd.f32 0.0, %v845
    %v847 = vpop.f32.mrb[0].mxu0
    %848 = vdwg.mxu0
    %v850 = vsel %vm456, %v841, 0
    %v853 = vsel %vm456, %v846, 0
    %855 = vmatprep.subr.mxu0 0.0
    %856 = vmatpush1.msra.mxu0 %v446
    %857 = vmatprep.subr.mxu0 0.0
    %858 = vmatpush1.msra.mxu0 0.0
    %859 = vmatprep.subr.mxu0 0.0
    %860 = vmatpush1.msra.mxu0 0.0
    %861 = vmatprep.subr.mxu0 0.0
    %862 = vmatpush1.msra.mxu0 0.0
    %863 = vmatprep.subr.mxu0 0.0
    %864 = vmatpush1.msra.mxu0 0.0
    %865 = vmatprep.subr.mxu0 0.0
    %866 = vmatpush1.msra.mxu0 0.0
    %867 = vmatprep.subr.mxu0 0.0
    %868 = vmatpush1.msra.mxu0 0.0
    %869 = vmatprep.subr.mxu0 0.0
    %870 = vmatpush1.msra.mxu0 0.0
    %871 = vmatprep.subr.mxu0 0.0
    %872 = vmatpush1.msra.mxu0 0.0
    %873 = vmatprep.subr.mxu0 0.0
    %874 = vmatpush1.msra.mxu0 0.0
    %875 = vmatprep.subr.mxu0 0.0
    %876 = vmatpush1.msra.mxu0 0.0
    %877 = vmatprep.subr.mxu0 0.0
    %878 = vmatpush1.msra.mxu0 0.0
    %879 = vmatprep.subr.mxu0 0.0
    %880 = vmatpush1.msra.mxu0 0.0
    %881 = vmatprep.subr.mxu0 0.0
    %882 = vmatpush1.msra.mxu0 0.0
    %883 = vmatprep.subr.mxu0 0.0
    %884 = vmatpush1.msra.mxu0 0.0
    %885 = vmatprep.subr.mxu0 0.0
    %886 = vmatpush1.msra.mxu0 0.0
    %887 = vmatprep.subr.mxu0 0.0
    %888 = vmatpush1.msra.mxu0 0.0
    %889 = vmatprep.subr.mxu0 0.0
    %890 = vmatpush1.msra.mxu0 0.0
    %891 = vmatprep.subr.mxu0 0.0
    %892 = vmatpush1.msra.mxu0 0.0
    %893 = vmatprep.subr.mxu0 0.0
    %894 = vmatpush1.msra.mxu0 0.0
    %895 = vmatprep.subr.mxu0 0.0
    %896 = vmatpush1.msra.mxu0 0.0
    %897 = vmatprep.subr.mxu0 0.0
    %898 = vmatpush1.msra.mxu0 0.0
    %899 = vmatprep.subr.mxu0 0.0
    %900 = vmatpush1.msra.mxu0 0.0
    %901 = vmatprep.subr.mxu0 0.0
    %902 = vmatpush1.msra.mxu0 0.0
    %903 = vmatprep.subr.mxu0 0.0
    %904 = vmatpush1.msra.mxu0 0.0
    %905 = vmatprep.subr.mxu0 0.0
    %906 = vmatpush1.msra.mxu0 0.0
    %907 = vmatprep.subr.mxu0 0.0
    %908 = vmatpush1.msra.mxu0 0.0
    %909 = vmatprep.subr.mxu0 0.0
    %910 = vmatpush1.msra.mxu0 0.0
    %911 = vmatprep.subr.mxu0 0.0
    %912 = vmatpush1.msra.mxu0 0.0
    %913 = vmatprep.subr.mxu0 0.0
    %914 = vmatpush1.msra.mxu0 0.0
    %915 = vmatprep.subr.mxu0 0.0
    %916 = vmatpush1.msra.mxu0 0.0
    %917 = vmatprep.subr.mxu0 0.0
    %918 = vmatpush1.msra.mxu0 0.0
    %919 = vmatprep.mubr.f32.mxu0 0.0
    %920 = vmatmul.mubr.f32.gmra.mrb[0].mxu0 %v850
    %v921 = vpop.f32.mrb[0].mxu0
    %v922 = vadd.f32 0.0, %v921
    %v923 = vpop.f32.mrb[0].mxu0
    %924 = vmatprep.mubr.f32.mxu0 0.0
    %925 = vmatmul.mubr.f32.gmra.mrb[0].mxu0 %v853
    %v926 = vpop.f32.mrb[0].mxu0
    %v927 = vadd.f32 0.0, %v926
    %v928 = vpop.f32.mrb[0].mxu0
    %929 = vdwg.mxu0
    %v931 = vsel %vm456, %v641, 0
    %v934 = vsel %vm456, %v646, 0
    %936 = vmatprep.subr.mxu0 0.0
    %937 = vmatpush1.msra.mxu0 %v445
    %938 = vmatprep.subr.mxu0 0.0
    %939 = vmatpush1.msra.mxu0 0.0
    %940 = vmatprep.subr.mxu0 0.0
    %941 = vmatpush1.msra.mxu0 0.0
    %942 = vmatprep.subr.mxu0 0.0
    %943 = vmatpush1.msra.mxu0 0.0
    %944 = vmatprep.subr.mxu0 0.0
    %945 = vmatpush1.msra.mxu0 0.0
    %946 = vmatprep.subr.mxu0 0.0
    %947 = vmatpush1.msra.mxu0 0.0
    %948 = vmatprep.subr.mxu0 0.0
    %949 = vmatpush1.msra.mxu0 0.0
    %950 = vmatprep.subr.mxu0 0.0
    %951 = vmatpush1.msra.mxu0 0.0
    %952 = vmatprep.subr.mxu0 0.0
    %953 = vmatpush1.msra.mxu0 0.0
    %954 = vmatprep.subr.mxu0 0.0
    %955 = vmatpush1.msra.mxu0 0.0
    %956 = vmatprep.subr.mxu0 0.0
    %957 = vmatpush1.msra.mxu0 0.0
    %958 = vmatprep.subr.mxu0 0.0
    %959 = vmatpush1.msra.mxu0 0.0
    %960 = vmatprep.subr.mxu0 0.0
    %961 = vmatpush1.msra.mxu0 0.0
    %962 = vmatprep.subr.mxu0 0.0
    %963 = vmatpush1.msra.mxu0 0.0
    %964 = vmatprep.subr.mxu0 0.0
    %965 = vmatpush1.msra.mxu0 0.0
    %966 = vmatprep.subr.mxu0 0.0
    %967 = vmatpush1.msra.mxu0 0.0
    %968 = vmatprep.subr.mxu0 0.0
    %969 = vmatpush1.msra.mxu0 0.0
    %970 = vmatprep.subr.mxu0 0.0
    %971 = vmatpush1.msra.mxu0 0.0
    %972 = vmatprep.subr.mxu0 0.0
    %973 = vmatpush1.msra.mxu0 0.0
    %974 = vmatprep.subr.mxu0 0.0
    %975 = vmatpush1.msra.mxu0 0.0
    %976 = vmatprep.subr.mxu0 0.0
    %977 = vmatpush1.msra.mxu0 0.0
    %978 = vmatprep.subr.mxu0 0.0
    %979 = vmatpush1.msra.mxu0 0.0
    %980 = vmatprep.subr.mxu0 0.0
    %981 = vmatpush1.msra.mxu0 0.0
    %982 = vmatprep.subr.mxu0 0.0
    %983 = vmatpush1.msra.mxu0 0.0
    %984 = vmatprep.subr.mxu0 0.0
    %985 = vmatpush1.msra.mxu0 0.0
    %986 = vmatprep.subr.mxu0 0.0
    %987 = vmatpush1.msra.mxu0 0.0
    %988 = vmatprep.subr.mxu0 0.0
    %989 = vmatpush1.msra.mxu0 0.0
    %990 = vmatprep.subr.mxu0 0.0
    %991 = vmatpush1.msra.mxu0 0.0
    %992 = vmatprep.subr.mxu0 0.0
    %993 = vmatpush1.msra.mxu0 0.0
    %994 = vmatprep.subr.mxu0 0.0
    %995 = vmatpush1.msra.mxu0 0.0
    %996 = vmatprep.subr.mxu0 0.0
    %997 = vmatpush1.msra.mxu0 0.0
    %998 = vmatprep.subr.mxu0 0.0
    %999 = vmatpush1.msra.mxu0 0.0
    %1000 = vmatprep.mubr.f32.mxu0 0.0
    %1001 = vmatmul.mubr.f32.gmra.mrb[0].mxu0 %v931
    %v1002 = vpop.f32.mrb[0].mxu0
    %v1003 = vadd.f32 %v922, %v1002
    %v1004 = vpop.f32.mrb[0].mxu0
    %1005 = vmatprep.mubr.f32.mxu0 0.0
    %1006 = vmatmul.mubr.f32.gmra.mrb[0].mxu0 %v934
    %v1007 = vpop.f32.mrb[0].mxu0
    %v1008 = vadd.f32 %v927, %v1007
    %v1009 = vpop.f32.mrb[0].mxu0
    %1010 = vdwg.mxu0
    %1011 = vrot.lane.b32.xlu0 %v437, 112
    %v1012 = vpop.permute.xlu0 %1011
    %1013 = vrot.lane.b32.xlu0 %v442, 112
    %v1014 = vpop.permute.xlu0 %1013
    %1015 = vrot.lane.b32.xlu0 %v437, 80
    %v1016 = vpop.permute.xlu0 %1015
    %1017 = vrot.lane.b32.xlu0 %v442, 80
    %v1018 = vpop.permute.xlu0 %1017
    %v1019 = vsel %vm456, %v1012, 0
    %v1021 = vsel %vm456, %v1014, 0
    %v1023 = vsel %vm456, %v1016, 0
    %v1025 = vsel %vm456, %v1018, 0
    %1027 = vmatprep.subr.mxu0 0.0
    %1028 = vmatpush1.xpose.msra.mxu0 %v1023
    %1029 = vmatprep.subr.mxu0 0.0
    %1030 = vmatpush1.xpose.msra.mxu0 %v1025
    %1031 = vmatprep.subr.mxu0 0.0
    %1032 = vmatpush1.xpose.msra.mxu0 0.0
    %1033 = vmatprep.subr.mxu0 0.0
    %1034 = vmatpush1.xpose.msra.mxu0 0.0
    %1035 = vmatprep.subr.mxu0 0.0
    %1036 = vmatpush1.xpose.msra.mxu0 0.0
    %1037 = vmatprep.subr.mxu0 0.0
    %1038 = vmatpush1.xpose.msra.mxu0 0.0
    %1039 = vmatprep.subr.mxu0 0.0
    %1040 = vmatpush1.xpose.msra.mxu0 0.0
    %1041 = vmatprep.subr.mxu0 0.0
    %1042 = vmatpush1.xpose.msra.mxu0 0.0
    %1043 = vmatprep.subr.mxu0 0.0
    %1044 = vmatpush1.xpose.msra.mxu0 0.0
    %1045 = vmatprep.subr.mxu0 0.0
    %1046 = vmatpush1.xpose.msra.mxu0 0.0
    %1047 = vmatprep.subr.mxu0 0.0
    %1048 = vmatpush1.xpose.msra.mxu0 0.0
    %1049 = vmatprep.subr.mxu0 0.0
    %1050 = vmatpush1.xpose.msra.mxu0 0.0
    %1051 = vmatprep.subr.mxu0 0.0
    %1052 = vmatpush1.xpose.msra.mxu0 0.0
    %1053 = vmatprep.subr.mxu0 0.0
    %1054 = vmatpush1.xpose.msra.mxu0 0.0
    %1055 = vmatprep.subr.mxu0 0.0
    %1056 = vmatpush1.xpose.msra.mxu0 0.0
    %1057 = vmatprep.subr.mxu0 0.0
    %1058 = vmatpush1.xpose.msra.mxu0 0.0
    %1059 = vmatprep.subr.mxu0 0.0
    %1060 = vmatpush1.xpose.msra.mxu0 0.0
    %1061 = vmatprep.subr.mxu0 0.0
    %1062 = vmatpush1.xpose.msra.mxu0 0.0
    %1063 = vmatprep.subr.mxu0 0.0
    %1064 = vmatpush1.xpose.msra.mxu0 0.0
    %1065 = vmatprep.subr.mxu0 0.0
    %1066 = vmatpush1.xpose.msra.mxu0 0.0
    %1067 = vmatprep.subr.mxu0 0.0
    %1068 = vmatpush1.xpose.msra.mxu0 0.0
    %1069 = vmatprep.subr.mxu0 0.0
    %1070 = vmatpush1.xpose.msra.mxu0 0.0
    %1071 = vmatprep.subr.mxu0 0.0
    %1072 = vmatpush1.xpose.msra.mxu0 0.0
    %1073 = vmatprep.subr.mxu0 0.0
    %1074 = vmatpush1.xpose.msra.mxu0 0.0
    %1075 = vmatprep.subr.mxu0 0.0
    %1076 = vmatpush1.xpose.msra.mxu0 0.0
    %1077 = vmatprep.subr.mxu0 0.0
    %1078 = vmatpush1.xpose.msra.mxu0 0.0
    %1079 = vmatprep.subr.mxu0 0.0
    %1080 = vmatpush1.xpose.msra.mxu0 0.0
    %1081 = vmatprep.subr.mxu0 0.0
    %1082 = vmatpush1.xpose.msra.mxu0 0.0
    %1083 = vmatprep.subr.mxu0 0.0
    %1084 = vmatpush1.xpose.msra.mxu0 0.0
    %1085 = vmatprep.subr.mxu0 0.0
    %1086 = vmatpush1.xpose.msra.mxu0 0.0
    %1087 = vmatprep.subr.mxu0 0.0
    %1088 = vmatpush1.xpose.msra.mxu0 0.0
    %1089 = vmatprep.subr.mxu0 0.0
    %1090 = vmatpush1.xpose.msra.mxu0 0.0
    %1091 = vmatprep.mubr.f32.mxu0 0.0
    %1092 = vmatmul.mubr.f32.gmra.mrb[0].mxu0 %v1019
    %v1093 = vpop.f32.mrb[0].mxu0
    %v1094 = vadd.f32 %v348, %v1093
    %v1095 = vpop.f32.mrb[0].mxu0
    %1096 = vmatprep.mubr.f32.mxu0 0.0
    %1097 = vmatmul.mubr.f32.gmra.mrb[0].mxu0 %v1021
    %v1098 = vpop.f32.mrb[0].mxu0
    %v1099 = vadd.f32 %v349, %v1098
    %v1100 = vpop.f32.mrb[0].mxu0
    %1101 = vdwg.mxu0
    %v1102 = vsel %vm266, %v1094, -inf
    %1103 = vmax.xlane.f32.xlu0 %v1102
    %v1104 = vpop.xlane.xlu0 %1103
    %v1105 = vsel %vm266, %v1099, -inf
    %1106 = vmax.xlane.f32.xlu0 %v1105
    %v1107 = vpop.xlane.xlu0 %1106
    %v1108 = vsub.f32 %v1094, %v1104
    %v1109 = vsub.f32 %v1099, %v1107
    %v1110 = vmul.f32 %v1108, 1.442695
    %v1111 = vpow.pop %v1110
    %v1112 = vmul.f32 %v1109, 1.442695
    %v1113 = vpow.pop %v1112
    %v1114 = vsel %vm266, %v1111, 0.0
    %1115 = vadd.xlane.f32.xlu0 %v1114
    %v1116 = vpop.xlane.xlu0 %1115
    %v1117 = vsel %vm266, %v1113, 0.0
    %1118 = vadd.xlane.f32.xlu0 %v1117
    %v1119 = vpop.xlane.xlu0 %1118
    %v1120 = vrcp.pop %v1116
    %v1121 = vrcp.pop %v1119
    %v1122 = vmul.f32 %v1111, %v1120
    %v1123 = vmul.f32 %v1113, %v1121
    %1124 = vrot.lane.b32.xlu0 %v437, 48
    %v1125 = vpop.permute.xlu0 %1124
    %1126 = vrot.lane.b32.xlu0 %v442, 48
    %v1127 = vpop.permute.xlu0 %1126
    %v1131 = vsel %vm266, %v1122, 0
    %v1134 = vsel %vm266, %v1123, 0
    %1136 = vmatprep.subr.mxu0 0.0
    %1137 = vmatpush1.msra.mxu0 %v1125
    %1138 = vmatprep.subr.mxu0 0.0
    %1139 = vmatpush1.msra.mxu0 %v1127
    %1140 = vmatprep.subr.mxu0 0.0
    %1141 = vmatpush1.msra.mxu0 0.0
    %1142 = vmatprep.subr.mxu0 0.0
    %1143 = vmatpush1.msra.mxu0 0.0
    %1144 = vmatprep.subr.mxu0 0.0
    %1145 = vmatpush1.msra.mxu0 0.0
    %1146 = vmatprep.subr.mxu0 0.0
    %1147 = vmatpush1.msra.mxu0 0.0
    %1148 = vmatprep.subr.mxu0 0.0
    %1149 = vmatpush1.msra.mxu0 0.0
    %1150 = vmatprep.subr.mxu0 0.0
    %1151 = vmatpush1.msra.mxu0 0.0
    %1152 = vmatprep.subr.mxu0 0.0
    %1153 = vmatpush1.msra.mxu0 0.0
    %1154 = vmatprep.subr.mxu0 0.0
    %1155 = vmatpush1.msra.mxu0 0.0
    %1156 = vmatprep.subr.mxu0 0.0
    %1157 = vmatpush1.msra.mxu0 0.0
    %1158 = vmatprep.subr.mxu0 0.0
    %1159 = vmatpush1.msra.mxu0 0.0
    %1160 = vmatprep.subr.mxu0 0.0
    %1161 = vmatpush1.msra.mxu0 0.0
    %1162 = vmatprep.subr.mxu0 0.0
    %1163 = vmatpush1.msra.mxu0 0.0
    %1164 = vmatprep.subr.mxu0 0.0
    %1165 = vmatpush1.msra.mxu0 0.0
    %1166 = vmatprep.subr.mxu0 0.0
    %1167 = vmatpush1.msra.mxu0 0.0
    %1168 = vmatprep.subr.mxu0 0.0
    %1169 = vmatpush1.msra.mxu0 0.0
    %1170 = vmatprep.subr.mxu0 0.0
    %1171 = vmatpush1.msra.mxu0 0.0
    %1172 = vmatprep.subr.mxu0 0.0
    %1173 = vmatpush1.msra.mxu0 0.0
    %1174 = vmatprep.subr.mxu0 0.0
    %1175 = vmatpush1.msra.mxu0 0.0
    %1176 = vmatprep.subr.mxu0 0.0
    %1177 = vmatpush1.msra.mxu0 0.0
    %1178 = vmatprep.subr.mxu0 0.0
    %1179 = vmatpush1.msra.mxu0 0.0
    %1180 = vmatprep.subr.mxu0 0.0
    %1181 = vmatpush1.msra.mxu0 0.0
    %1182 = vmatprep.subr.mxu0 0.0
    %1183 = vmatpush1.msra.mxu0 0.0
    %1184 = vmatprep.subr.mxu0 0.0
    %1185 = vmatpush1.msra.mxu0 0.0
    %1186 = vmatprep.subr.mxu0 0.0
    %1187 = vmatpush1.msra.mxu0 0.0
    %1188 = vmatprep.subr.mxu0 0.0
    %1189 = vmatpush1.msra.mxu0 0.0
    %1190 = vmatprep.subr.mxu0 0.0
    %1191 = vmatpush1.msra.mxu0 0.0
    %1192 = vmatprep.subr.mxu0 0.0
    %1193 = vmatpush1.msra.mxu0 0.0
    %1194 = vmatprep.subr.mxu0 0.0
    %1195 = vmatpush1.msra.mxu0 0.0
    %1196 = vmatprep.subr.mxu0 0.0
    %1197 = vmatpush1.msra.mxu0 0.0
    %1198 = vmatprep.subr.mxu0 0.0
    %1199 = vmatpush1.msra.mxu0 0.0
    %1200 = vmatprep.mubr.f32.mxu0 0.0
    %1201 = vmatmul.mubr.f32.gmra.mrb[0].mxu0 %v1131
    %v1202 = vpop.f32.mrb[0].mxu0
    %v1203 = vadd.f32 0.0, %v1202
    %v1204 = vpop.f32.mrb[0].mxu0
    %1205 = vmatprep.mubr.f32.mxu0 0.0
    %1206 = vmatmul.mubr.f32.gmra.mrb[0].mxu0 %v1134
    %v1207 = vpop.f32.mrb[0].mxu0
    %v1208 = vadd.f32 0.0, %v1207
    %v1209 = vpop.f32.mrb[0].mxu0
    %1210 = vdwg.mxu0
    %v1212 = vsel %vm456, %v1203, 0
    %v1215 = vsel %vm456, %v1208, 0
    %1217 = vmatprep.subr.mxu0 0.0
    %1218 = vmatpush1.msra.mxu0 %v447
    %1219 = vmatprep.subr.mxu0 0.0
    %1220 = vmatpush1.msra.mxu0 0.0
    %1221 = vmatprep.subr.mxu0 0.0
    %1222 = vmatpush1.msra.mxu0 0.0
    %1223 = vmatprep.subr.mxu0 0.0
    %1224 = vmatpush1.msra.mxu0 0.0
    %1225 = vmatprep.subr.mxu0 0.0
    %1226 = vmatpush1.msra.mxu0 0.0
    %1227 = vmatprep.subr.mxu0 0.0
    %1228 = vmatpush1.msra.mxu0 0.0
    %1229 = vmatprep.subr.mxu0 0.0
    %1230 = vmatpush1.msra.mxu0 0.0
    %1231 = vmatprep.subr.mxu0 0.0
    %1232 = vmatpush1.msra.mxu0 0.0
    %1233 = vmatprep.subr.mxu0 0.0
    %1234 = vmatpush1.msra.mxu0 0.0
    %1235 = vmatprep.subr.mxu0 0.0
    %1236 = vmatpush1.msra.mxu0 0.0
    %1237 = vmatprep.subr.mxu0 0.0
    %1238 = vmatpush1.msra.mxu0 0.0
    %1239 = vmatprep.subr.mxu0 0.0
    %1240 = vmatpush1.msra.mxu0 0.0
    %1241 = vmatprep.subr.mxu0 0.0
    %1242 = vmatpush1.msra.mxu0 0.0
    %1243 = vmatprep.subr.mxu0 0.0
    %1244 = vmatpush1.msra.mxu0 0.0
    %1245 = vmatprep.subr.mxu0 0.0
    %1246 = vmatpush1.msra.mxu0 0.0
    %1247 = vmatprep.subr.mxu0 0.0
    %1248 = vmatpush1.msra.mxu0 0.0
    %1249 = vmatprep.subr.mxu0 0.0
    %1250 = vmatpush1.msra.mxu0 0.0
    %1251 = vmatprep.subr.mxu0 0.0
    %1252 = vmatpush1.msra.mxu0 0.0
    %1253 = vmatprep.subr.mxu0 0.0
    %1254 = vmatpush1.msra.mxu0 0.0
    %1255 = vmatprep.subr.mxu0 0.0
    %1256 = vmatpush1.msra.mxu0 0.0
    %1257 = vmatprep.subr.mxu0 0.0
    %1258 = vmatpush1.msra.mxu0 0.0
    %1259 = vmatprep.subr.mxu0 0.0
    %1260 = vmatpush1.msra.mxu0 0.0
    %1261 = vmatprep.subr.mxu0 0.0
    %1262 = vmatpush1.msra.mxu0 0.0
    %1263 = vmatprep.subr.mxu0 0.0
    %1264 = vmatpush1.msra.mxu0 0.0
    %1265 = vmatprep.subr.mxu0 0.0
    %1266 = vmatpush1.msra.mxu0 0.0
    %1267 = vmatprep.subr.mxu0 0.0
    %1268 = vmatpush1.msra.mxu0 0.0
    %1269 = vmatprep.subr.mxu0 0.0
    %1270 = vmatpush1.msra.mxu0 0.0
    %1271 = vmatprep.subr.mxu0 0.0
    %1272 = vmatpush1.msra.mxu0 0.0
    %1273 = vmatprep.subr.mxu0 0.0
    %1274 = vmatpush1.msra.mxu0 0.0
    %1275 = vmatprep.subr.mxu0 0.0
    %1276 = vmatpush1.msra.mxu0 0.0
    %1277 = vmatprep.subr.mxu0 0.0
    %1278 = vmatpush1.msra.mxu0 0.0
    %1279 = vmatprep.subr.mxu0 0.0
    %1280 = vmatpush1.msra.mxu0 0.0
    %1281 = vmatprep.mubr.f32.mxu0 0.0
    %1282 = vmatmul.mubr.f32.gmra.mrb[0].mxu0 %v1212
    %v1283 = vpop.f32.mrb[0].mxu0
    %v1284 = vadd.f32 0.0, %v1283
    %v1285 = vpop.f32.mrb[0].mxu0
    %1286 = vmatprep.mubr.f32.mxu0 0.0
    %1287 = vmatmul.mubr.f32.gmra.mrb[0].mxu0 %v1215
    %v1288 = vpop.f32.mrb[0].mxu0
    %v1289 = vadd.f32 0.0, %v1288
    %v1290 = vpop.f32.mrb[0].mxu0
    %1291 = vdwg.mxu0
    %v1292 = vadd.f32 %v1003, %v1284
    %v1293 = vadd.f32 %v1008, %v1289
    %1294 = vrot.lane.b32.xlu0 %v437, 104
    %v1295 = vpop.permute.xlu0 %1294
    %1296 = vrot.lane.b32.xlu0 %v442, 104
    %v1297 = vpop.permute.xlu0 %1296
    %1298 = vrot.lane.b32.xlu0 %v437, 72
    %v1299 = vpop.permute.xlu0 %1298
    %1300 = vrot.lane.b32.xlu0 %v442, 72
    %v1301 = vpop.permute.xlu0 %1300
    %v1302 = vsel %vm456, %v1295, 0
    %v1304 = vsel %vm456, %v1297, 0
    %v1306 = vsel %vm456, %v1299, 0
    %v1308 = vsel %vm456, %v1301, 0
    %1310 = vmatprep.subr.mxu0 0.0
    %1311 = vmatpush1.xpose.msra.mxu0 %v1306
    %1312 = vmatprep.subr.mxu0 0.0
    %1313 = vmatpush1.xpose.msra.mxu0 %v1308
    %1314 = vmatprep.subr.mxu0 0.0
    %1315 = vmatpush1.xpose.msra.mxu0 0.0
    %1316 = vmatprep.subr.mxu0 0.0
    %1317 = vmatpush1.xpose.msra.mxu0 0.0
    %1318 = vmatprep.subr.mxu0 0.0
    %1319 = vmatpush1.xpose.msra.mxu0 0.0
    %1320 = vmatprep.subr.mxu0 0.0
    %1321 = vmatpush1.xpose.msra.mxu0 0.0
    %1322 = vmatprep.subr.mxu0 0.0
    %1323 = vmatpush1.xpose.msra.mxu0 0.0
    %1324 = vmatprep.subr.mxu0 0.0
    %1325 = vmatpush1.xpose.msra.mxu0 0.0
    %1326 = vmatprep.subr.mxu0 0.0
    %1327 = vmatpush1.xpose.msra.mxu0 0.0
    %1328 = vmatprep.subr.mxu0 0.0
    %1329 = vmatpush1.xpose.msra.mxu0 0.0
    %1330 = vmatprep.subr.mxu0 0.0
    %1331 = vmatpush1.xpose.msra.mxu0 0.0
    %1332 = vmatprep.subr.mxu0 0.0
    %1333 = vmatpush1.xpose.msra.mxu0 0.0
    %1334 = vmatprep.subr.mxu0 0.0
    %1335 = vmatpush1.xpose.msra.mxu0 0.0
    %1336 = vmatprep.subr.mxu0 0.0
    %1337 = vmatpush1.xpose.msra.mxu0 0.0
    %1338 = vmatprep.subr.mxu0 0.0
    %1339 = vmatpush1.xpose.msra.mxu0 0.0
    %1340 = vmatprep.subr.mxu0 0.0
    %1341 = vmatpush1.xpose.msra.mxu0 0.0
    %1342 = vmatprep.subr.mxu0 0.0
    %1343 = vmatpush1.xpose.msra.mxu0 0.0
    %1344 = vmatprep.subr.mxu0 0.0
    %1345 = vmatpush1.xpose.msra.mxu0 0.0
    %1346 = vmatprep.subr.mxu0 0.0
    %1347 = vmatpush1.xpose.msra.mxu0 0.0
    %1348 = vmatprep.subr.mxu0 0.0
    %1349 = vmatpush1.xpose.msra.mxu0 0.0
    %1350 = vmatprep.subr.mxu0 0.0
    %1351 = vmatpush1.xpose.msra.mxu0 0.0
    %1352 = vmatprep.subr.mxu0 0.0
    %1353 = vmatpush1.xpose.msra.mxu0 0.0
    %1354 = vmatprep.subr.mxu0 0.0
    %1355 = vmatpush1.xpose.msra.mxu0 0.0
    %1356 = vmatprep.subr.mxu0 0.0
    %1357 = vmatpush1.xpose.msra.mxu0 0.0
    %1358 = vmatprep.subr.mxu0 0.0
    %1359 = vmatpush1.xpose.msra.mxu0 0.0
    %1360 = vmatprep.subr.mxu0 0.0
    %1361 = vmatpush1.xpose.msra.mxu0 0.0
    %1362 = vmatprep.subr.mxu0 0.0
    %1363 = vmatpush1.xpose.msra.mxu0 0.0
    %1364 = vmatprep.subr.mxu0 0.0
    %1365 = vmatpush1.xpose.msra.mxu0 0.0
    %1366 = vmatprep.subr.mxu0 0.0
    %1367 = vmatpush1.xpose.msra.mxu0 0.0
    %1368 = vmatprep.subr.mxu0 0.0
    %1369 = vmatpush1.xpose.msra.mxu0 0.0
    %1370 = vmatprep.subr.mxu0 0.0
    %1371 = vmatpush1.xpose.msra.mxu0 0.0
    %1372 = vmatprep.subr.mxu0 0.0
    %1373 = vmatpush1.xpose.msra.mxu0 0.0
    %1374 = vmatprep.mubr.f32.mxu0 0.0
    %1375 = vmatmul.mubr.f32.gmra.mrb[0].mxu0 %v1302
    %v1376 = vpop.f32.mrb[0].mxu0
    %v1377 = vadd.f32 %v348, %v1376
    %v1378 = vpop.f32.mrb[0].mxu0
    %1379 = vmatprep.mubr.f32.mxu0 0.0
    %1380 = vmatmul.mubr.f32.gmra.mrb[0].mxu0 %v1304
    %v1381 = vpop.f32.mrb[0].mxu0
    %v1382 = vadd.f32 %v349, %v1381
    %v1383 = vpop.f32.mrb[0].mxu0
    %1384 = vdwg.mxu0
    %v1385 = vsel %vm266, %v1377, -inf
    %1386 = vmax.xlane.f32.xlu0 %v1385
    %v1387 = vpop.xlane.xlu0 %1386
    %v1388 = vsel %vm266, %v1382, -inf
    %1389 = vmax.xlane.f32.xlu0 %v1388
    %v1390 = vpop.xlane.xlu0 %1389
    %v1391 = vsub.f32 %v1377, %v1387
    %v1392 = vsub.f32 %v1382, %v1390
    %v1393 = vmul.f32 %v1391, 1.442695
    %v1394 = vpow.pop %v1393
    %v1395 = vmul.f32 %v1392, 1.442695
    %v1396 = vpow.pop %v1395
    %v1397 = vsel %vm266, %v1394, 0.0
    %1398 = vadd.xlane.f32.xlu0 %v1397
    %v1399 = vpop.xlane.xlu0 %1398
    %v1400 = vsel %vm266, %v1396, 0.0
    %1401 = vadd.xlane.f32.xlu0 %v1400
    %v1402 = vpop.xlane.xlu0 %1401
    %v1403 = vrcp.pop %v1399
    %v1404 = vrcp.pop %v1402
    %v1405 = vmul.f32 %v1394, %v1403
    %v1406 = vmul.f32 %v1396, %v1404
    %1407 = vrot.lane.b32.xlu0 %v437, 40
    %v1408 = vpop.permute.xlu0 %1407
    %1409 = vrot.lane.b32.xlu0 %v442, 40
    %v1410 = vpop.permute.xlu0 %1409
    %v1414 = vsel %vm266, %v1405, 0
    %v1417 = vsel %vm266, %v1406, 0
    %1419 = vmatprep.subr.mxu0 0.0
    %1420 = vmatpush1.msra.mxu0 %v1408
    %1421 = vmatprep.subr.mxu0 0.0
    %1422 = vmatpush1.msra.mxu0 %v1410
    %1423 = vmatprep.subr.mxu0 0.0
    %1424 = vmatpush1.msra.mxu0 0.0
    %1425 = vmatprep.subr.mxu0 0.0
    %1426 = vmatpush1.msra.mxu0 0.0
    %1427 = vmatprep.subr.mxu0 0.0
    %1428 = vmatpush1.msra.mxu0 0.0
    %1429 = vmatprep.subr.mxu0 0.0
    %1430 = vmatpush1.msra.mxu0 0.0
    %1431 = vmatprep.subr.mxu0 0.0
    %1432 = vmatpush1.msra.mxu0 0.0
    %1433 = vmatprep.subr.mxu0 0.0
    %1434 = vmatpush1.msra.mxu0 0.0
    %1435 = vmatprep.subr.mxu0 0.0
    %1436 = vmatpush1.msra.mxu0 0.0
    %1437 = vmatprep.subr.mxu0 0.0
    %1438 = vmatpush1.msra.mxu0 0.0
    %1439 = vmatprep.subr.mxu0 0.0
    %1440 = vmatpush1.msra.mxu0 0.0
    %1441 = vmatprep.subr.mxu0 0.0
    %1442 = vmatpush1.msra.mxu0 0.0
    %1443 = vmatprep.subr.mxu0 0.0
    %1444 = vmatpush1.msra.mxu0 0.0
    %1445 = vmatprep.subr.mxu0 0.0
    %1446 = vmatpush1.msra.mxu0 0.0
    %1447 = vmatprep.subr.mxu0 0.0
    %1448 = vmatpush1.msra.mxu0 0.0
    %1449 = vmatprep.subr.mxu0 0.0
    %1450 = vmatpush1.msra.mxu0 0.0
    %1451 = vmatprep.subr.mxu0 0.0
    %1452 = vmatpush1.msra.mxu0 0.0
    %1453 = vmatprep.subr.mxu0 0.0
    %1454 = vmatpush1.msra.mxu0 0.0
    %1455 = vmatprep.subr.mxu0 0.0
    %1456 = vmatpush1.msra.mxu0 0.0
    %1457 = vmatprep.subr.mxu0 0.0
    %1458 = vmatpush1.msra.mxu0 0.0
    %1459 = vmatprep.subr.mxu0 0.0
    %1460 = vmatpush1.msra.mxu0 0.0
    %1461 = vmatprep.subr.mxu0 0.0
    %1462 = vmatpush1.msra.mxu0 0.0
    %1463 = vmatprep.subr.mxu0 0.0
    %1464 = vmatpush1.msra.mxu0 0.0
    %1465 = vmatprep.subr.mxu0 0.0
    %1466 = vmatpush1.msra.mxu0 0.0
    %1467 = vmatprep.subr.mxu0 0.0
    %1468 = vmatpush1.msra.mxu0 0.0
    %1469 = vmatprep.subr.mxu0 0.0
    %1470 = vmatpush1.msra.mxu0 0.0
    %1471 = vmatprep.subr.mxu0 0.0
    %1472 = vmatpush1.msra.mxu0 0.0
    %1473 = vmatprep.subr.mxu0 0.0
    %1474 = vmatpush1.msra.mxu0 0.0
    %1475 = vmatprep.subr.mxu0 0.0
    %1476 = vmatpush1.msra.mxu0 0.0
    %1477 = vmatprep.subr.mxu0 0.0
    %1478 = vmatpush1.msra.mxu0 0.0
    %1479 = vmatprep.subr.mxu0 0.0
    %1480 = vmatpush1.msra.mxu0 0.0
    %1481 = vmatprep.subr.mxu0 0.0
    %1482 = vmatpush1.msra.mxu0 0.0
    %1483 = vmatprep.mubr.f32.mxu0 0.0
    %1484 = vmatmul.mubr.f32.gmra.mrb[0].mxu0 %v1414
    %v1485 = vpop.f32.mrb[0].mxu0
    %v1486 = vadd.f32 0.0, %v1485
    %v1487 = vpop.f32.mrb[0].mxu0
    %1488 = vmatprep.mubr.f32.mxu0 0.0
    %1489 = vmatmul.mubr.f32.gmra.mrb[0].mxu0 %v1417
    %v1490 = vpop.f32.mrb[0].mxu0
    %v1491 = vadd.f32 0.0, %v1490
    %v1492 = vpop.f32.mrb[0].mxu0
    %1493 = vdwg.mxu0
    %v1495 = vsel %vm456, %v1486, 0
    %v1498 = vsel %vm456, %v1491, 0
    %1500 = vmatprep.subr.mxu0 0.0
    %1501 = vmatpush1.msra.mxu0 %v448
    %1502 = vmatprep.subr.mxu0 0.0
    %1503 = vmatpush1.msra.mxu0 0.0
    %1504 = vmatprep.subr.mxu0 0.0
    %1505 = vmatpush1.msra.mxu0 0.0
    %1506 = vmatprep.subr.mxu0 0.0
    %1507 = vmatpush1.msra.mxu0 0.0
    %1508 = vmatprep.subr.mxu0 0.0
    %1509 = vmatpush1.msra.mxu0 0.0
    %1510 = vmatprep.subr.mxu0 0.0
    %1511 = vmatpush1.msra.mxu0 0.0
    %1512 = vmatprep.subr.mxu0 0.0
    %1513 = vmatpush1.msra.mxu0 0.0
    %1514 = vmatprep.subr.mxu0 0.0
    %1515 = vmatpush1.msra.mxu0 0.0
    %1516 = vmatprep.subr.mxu0 0.0
    %1517 = vmatpush1.msra.mxu0 0.0
    %1518 = vmatprep.subr.mxu0 0.0
    %1519 = vmatpush1.msra.mxu0 0.0
    %1520 = vmatprep.subr.mxu0 0.0
    %1521 = vmatpush1.msra.mxu0 0.0
    %1522 = vmatprep.subr.mxu0 0.0
    %1523 = vmatpush1.msra.mxu0 0.0
    %1524 = vmatprep.subr.mxu0 0.0
    %1525 = vmatpush1.msra.mxu0 0.0
    %1526 = vmatprep.subr.mxu0 0.0
    %1527 = vmatpush1.msra.mxu0 0.0
    %1528 = vmatprep.subr.mxu0 0.0
    %1529 = vmatpush1.msra.mxu0 0.0
    %1530 = vmatprep.subr.mxu0 0.0
    %1531 = vmatpush1.msra.mxu0 0.0
    %1532 = vmatprep.subr.mxu0 0.0
    %1533 = vmatpush1.msra.mxu0 0.0
    %1534 = vmatprep.subr.mxu0 0.0
    %1535 = vmatpush1.msra.mxu0 0.0
    %1536 = vmatprep.subr.mxu0 0.0
    %1537 = vmatpush1.msra.mxu0 0.0
    %1538 = vmatprep.subr.mxu0 0.0
    %1539 = vmatpush1.msra.mxu0 0.0
    %1540 = vmatprep.subr.mxu0 0.0
    %1541 = vmatpush1.msra.mxu0 0.0
    %1542 = vmatprep.subr.mxu0 0.0
    %1543 = vmatpush1.msra.mxu0 0.0
    %1544 = vmatprep.subr.mxu0 0.0
    %1545 = vmatpush1.msra.mxu0 0.0
    %1546 = vmatprep.subr.mxu0 0.0
    %1547 = vmatpush1.msra.mxu0 0.0
    %1548 = vmatprep.subr.mxu0 0.0
    %1549 = vmatpush1.msra.mxu0 0.0
    %1550 = vmatprep.subr.mxu0 0.0
    %1551 = vmatpush1.msra.mxu0 0.0
    %1552 = vmatprep.subr.mxu0 0.0
    %1553 = vmatpush1.msra.mxu0 0.0
    %1554 = vmatprep.subr.mxu0 0.0
    %1555 = vmatpush1.msra.mxu0 0.0
    %1556 = vmatprep.subr.mxu0 0.0
    %1557 = vmatpush1.msra.mxu0 0.0
    %1558 = vmatprep.subr.mxu0 0.0
    %1559 = vmatpush1.msra.mxu0 0.0
    %1560 = vmatprep.subr.mxu0 0.0
    %1561 = vmatpush1.msra.mxu0 0.0
    %1562 = vmatprep.subr.mxu0 0.0
    %1563 = vmatpush1.msra.mxu0 0.0
    %1564 = vmatprep.mubr.f32.mxu0 0.0
    %1565 = vmatmul.mubr.f32.gmra.mrb[0].mxu0 %v1495
    %v1566 = vpop.f32.mrb[0].mxu0
    %v1567 = vadd.f32 0.0, %v1566
    %v1568 = vpop.f32.mrb[0].mxu0
    %1569 = vmatprep.mubr.f32.mxu0 0.0
    %1570 = vmatmul.mubr.f32.gmra.mrb[0].mxu0 %v1498
    %v1571 = vpop.f32.mrb[0].mxu0
    %v1572 = vadd.f32 0.0, %v1571
    %v1573 = vpop.f32.mrb[0].mxu0
    %1574 = vdwg.mxu0
    %v1575 = vadd.f32 %v1292, %v1567
    %v1576 = vadd.f32 %v1293, %v1572
    %v1578 = vlaneseq
    %v1579 = vshrl.u32 %v1578, 7
    %v1580 = vsub.s32 0, %v1579
    %v1581 = vrot.slane %v449, %v1580
    %v1583 = vadd.f32 %v1575, %v1581
    %v1584 = vadd.f32 %v1576, %v1581
    %v1585 = vld [vmem:[%s10] sm:$0x1]
    %v1586 = vld [vmem:[#allocation4] sm:$0x1]
    %v1587 = vadd.f32 %v1583, %v340
    %v1588 = vadd.f32 %v1584, %v345
    %v1589 = vsel %vm363, %v1587, 0.0
    %1590 = vadd.xlane.f32.xlu0 %v1589
    %v1591 = vpop.xlane.xlu0 %1590
    %v1592 = vsel %vm363, %v1588, 0.0
    %1593 = vadd.xlane.f32.xlu0 %v1592
    %v1594 = vpop.xlane.xlu0 %1593
    %v1595 = vrcp.pop 32.0
    %v1596 = vmul.f32 %v1591, %v1595
    %v1597 = vmul.f32 %v1594, %v1595
    %v1598 = vsub.f32 %v1587, %v1596
    %v1599 = vsub.f32 %v1588, %v1597
    %v1600 = vmul.f32 %v1598, %v1598
    %v1601 = vmul.f32 %v1599, %v1599
    %v1602 = vsel %vm363, %v1600, 0.0
    %1603 = vadd.xlane.f32.xlu0 %v1602
    %v1604 = vpop.xlane.xlu0 %1603
    %v1605 = vsel %vm363, %v1601, 0.0
    %1606 = vadd.xlane.f32.xlu0 %v1605
    %v1607 = vpop.xlane.xlu0 %1606
    %v1608 = vmul.f32 %v1604, %v1595
    %v1609 = vmul.f32 %v1607, %v1595
    %v1610 = vadd.f32 %v1608, 1e-05
    %v1611 = vadd.f32 %v1609, 1e-05
    %v1612 = vrsqrt.pop %v1610
    %v1613 = vrsqrt.pop %v1611
    %v1614 = vmul.f32 %v1598, %v1612
    %v1615 = vmul.f32 %v1599, %v1613
    %v1617 = vlaneseq
    %v1618 = vshrl.u32 %v1617, 7
    %v1619 = vsub.s32 0, %v1618
    %v1620 = vrot.slane %v1585, %v1619
    %v1622 = vmul.f32 %v1614, %v1620
    %v1623 = vmul.f32 %v1615, %v1620
    %v1625 = vlaneseq
    %v1626 = vshrl.u32 %v1625, 7
    %v1627 = vsub.s32 0, %v1626
    %v1628 = vrot.slane %v1586, %v1627
    %v1630 = vadd.f32 %v1622, %v1628
    %v1631 = vadd.f32 %v1623, %v1628
    %v1632 = vld [vmem:[%s1] sm:$0xff]
    %v1633 = vld [vmem:[%s1 + $0x8] sm:$0xff]
    %v1634 = vld [vmem:[%s1 + $0x10] sm:$0xff]
    %v1635 = vld [vmem:[%s1 + $0x18] sm:$0xff]
    %v1636 = vld [vmem:[#allocation7] sm:$0xff]
    %v1637 = vld [vmem:[#allocation7 + $0x8] sm:$0xff]
    %v1638 = vld [vmem:[#allocation7 + $0x10] sm:$0xff]
    %v1639 = vld [vmem:[#allocation7 + $0x18] sm:$0xff]
    %v1640 = vld [vmem:[#allocation9] sm:$0x1]
    %v1642 = vlaneseq
    %v1643 = vshrl.u32 %v1642, 7
    %v1644 = vsub.s32 0, %v1643
    %v1645 = vrot.slane %v1640, %v1644
    %v1648 = vsel %vm363, %v1632, 0
    %v1651 = vsel %vm363, %v1633, 0
    %v1654 = vsel %vm363, %v1634, 0
    %v1657 = vsel %vm363, %v1635, 0
    %1659 = vmatprep.subr.mxu0 0.0
    %1660 = vmatpush1.msra.mxu0 %v1636
    %1661 = vmatprep.subr.mxu0 0.0
    %1662 = vmatpush1.msra.mxu0 %v1637
    %1663 = vmatprep.subr.mxu0 0.0
    %1664 = vmatpush1.msra.mxu0 %v1638
    %1665 = vmatprep.subr.mxu0 0.0
    %1666 = vmatpush1.msra.mxu0 %v1639
    %1667 = vmatprep.subr.mxu0 0.0
    %1668 = vmatpush1.msra.mxu0 0.0
    %1669 = vmatprep.subr.mxu0 0.0
    %1670 = vmatpush1.msra.mxu0 0.0
    %1671 = vmatprep.subr.mxu0 0.0
    %1672 = vmatpush1.msra.mxu0 0.0
    %1673 = vmatprep.subr.mxu0 0.0
    %1674 = vmatpush1.msra.mxu0 0.0
    %1675 = vmatprep.subr.mxu0 0.0
    %1676 = vmatpush1.msra.mxu0 0.0
    %1677 = vmatprep.subr.mxu0 0.0
    %1678 = vmatpush1.msra.mxu0 0.0
    %1679 = vmatprep.subr.mxu0 0.0
    %1680 = vmatpush1.msra.mxu0 0.0
    %1681 = vmatprep.subr.mxu0 0.0
    %1682 = vmatpush1.msra.mxu0 0.0
    %1683 = vmatprep.subr.mxu0 0.0
    %1684 = vmatpush1.msra.mxu0 0.0
    %1685 = vmatprep.subr.mxu0 0.0
    %1686 = vmatpush1.msra.mxu0 0.0
    %1687 = vmatprep.subr.mxu0 0.0
    %1688 = vmatpush1.msra.mxu0 0.0
    %1689 = vmatprep.subr.mxu0 0.0
    %1690 = vmatpush1.msra.mxu0 0.0
    %1691 = vmatprep.subr.mxu0 0.0
    %1692 = vmatpush1.msra.mxu0 0.0
    %1693 = vmatprep.subr.mxu0 0.0
    %1694 = vmatpush1.msra.mxu0 0.0
    %1695 = vmatprep.subr.mxu0 0.0
    %1696 = vmatpush1.msra.mxu0 0.0
    %1697 = vmatprep.subr.mxu0 0.0
    %1698 = vmatpush1.msra.mxu0 0.0
    %1699 = vmatprep.subr.mxu0 0.0
    %1700 = vmatpush1.msra.mxu0 0.0
    %1701 = vmatprep.subr.mxu0 0.0
    %1702 = vmatpush1.msra.mxu0 0.0
    %1703 = vmatprep.subr.mxu0 0.0
    %1704 = vmatpush1.msra.mxu0 0.0
    %1705 = vmatprep.subr.mxu0 0.0
    %1706 = vmatpush1.msra.mxu0 0.0
    %1707 = vmatprep.subr.mxu0 0.0
    %1708 = vmatpush1.msra.mxu0 0.0
    %1709 = vmatprep.subr.mxu0 0.0
    %1710 = vmatpush1.msra.mxu0 0.0
    %1711 = vmatprep.subr.mxu0 0.0
    %1712 = vmatpush1.msra.mxu0 0.0
    %1713 = vmatprep.subr.mxu0 0.0
    %1714 = vmatpush1.msra.mxu0 0.0
    %1715 = vmatprep.subr.mxu0 0.0
    %1716 = vmatpush1.msra.mxu0 0.0
    %1717 = vmatprep.subr.mxu0 0.0
    %1718 = vmatpush1.msra.mxu0 0.0
    %1719 = vmatprep.subr.mxu0 0.0
    %1720 = vmatpush1.msra.mxu0 0.0
    %1721 = vmatprep.subr.mxu0 0.0
    %1722 = vmatpush1.msra.mxu0 0.0
    %1723 = vmatprep.mubr.f32.mxu0 0.0
    %1724 = vmatmul.mubr.f32.gmra.mrb[0].mxu0 %v1648
    %v1725 = vpop.f32.mrb[0].mxu0
    %v1726 = vadd.f32 %v1645, %v1725
    %v1727 = vpop.f32.mrb[0].mxu0
    %1728 = vmatprep.mubr.f32.mxu0 0.0
    %1729 = vmatmul.mubr.f32.gmra.mrb[0].mxu0 %v1651
    %v1730 = vpop.f32.mrb[0].mxu0
    %v1731 = vadd.f32 %v1645, %v1730
    %v1732 = vpop.f32.mrb[0].mxu0
    %1733 = vmatprep.mubr.f32.mxu0 0.0
    %1734 = vmatmul.mubr.f32.gmra.mrb[0].mxu0 %v1654
    %v1735 = vpop.f32.mrb[0].mxu0
    %v1736 = vadd.f32 %v1645, %v1735
    %v1737 = vpop.f32.mrb[0].mxu0
    %1738 = vmatprep.mubr.f32.mxu0 0.0
    %1739 = vmatmul.mubr.f32.gmra.mrb[0].mxu0 %v1657
    %v1740 = vpop.f32.mrb[0].mxu0
    %v1741 = vadd.f32 %v1645, %v1740
    %v1742 = vpop.f32.mrb[0].mxu0
    %1743 = vdwg.mxu0
    %v1744 = vld [vmem:[%s12] sm:$0xff]
    %v1745 = vld [vmem:[%s12 + $0x8] sm:$0xff]
    %v1746 = vld [vmem:[%s12 + $0x10] sm:$0xff]
    %v1747 = vld [vmem:[%s12 + $0x18] sm:$0xff]
    %v1748 = vld [vmem:[#allocation6] sm:$0x1]
    %v1750 = vlaneseq
    %v1751 = vshrl.u32 %v1750, 7
    %v1752 = vsub.s32 0, %v1751
    %v1753 = vrot.slane %v1748, %v1752
    %v1756 = vsel %vm363, %v1630, 0
    %v1759 = vsel %vm363, %v1631, 0
    %1761 = vmatprep.subr.mxu0 0.0
    %1762 = vmatpush1.msra.mxu0 %v1744
    %1763 = vmatprep.subr.mxu0 0.0
    %1764 = vmatpush1.msra.mxu0 %v1745
    %1765 = vmatprep.subr.mxu0 0.0
    %1766 = vmatpush1.msra.mxu0 %v1746
    %1767 = vmatprep.subr.mxu0 0.0
    %1768 = vmatpush1.msra.mxu0 %v1747
    %1769 = vmatprep.subr.mxu0 0.0
    %1770 = vmatpush1.msra.mxu0 0.0
    %1771 = vmatprep.subr.mxu0 0.0
    %1772 = vmatpush1.msra.mxu0 0.0
    %1773 = vmatprep.subr.mxu0 0.0
    %1774 = vmatpush1.msra.mxu0 0.0
    %1775 = vmatprep.subr.mxu0 0.0
    %1776 = vmatpush1.msra.mxu0 0.0
    %1777 = vmatprep.subr.mxu0 0.0
    %1778 = vmatpush1.msra.mxu0 0.0
    %1779 = vmatprep.subr.mxu0 0.0
    %1780 = vmatpush1.msra.mxu0 0.0
    %1781 = vmatprep.subr.mxu0 0.0
    %1782 = vmatpush1.msra.mxu0 0.0
    %1783 = vmatprep.subr.mxu0 0.0
    %1784 = vmatpush1.msra.mxu0 0.0
    %1785 = vmatprep.subr.mxu0 0.0
    %1786 = vmatpush1.msra.mxu0 0.0
    %1787 = vmatprep.subr.mxu0 0.0
    %1788 = vmatpush1.msra.mxu0 0.0
    %1789 = vmatprep.subr.mxu0 0.0
    %1790 = vmatpush1.msra.mxu0 0.0
    %1791 = vmatprep.subr.mxu0 0.0
    %1792 = vmatpush1.msra.mxu0 0.0
    %1793 = vmatprep.subr.mxu0 0.0
    %1794 = vmatpush1.msra.mxu0 0.0
    %1795 = vmatprep.subr.mxu0 0.0
    %1796 = vmatpush1.msra.mxu0 0.0
    %1797 = vmatprep.subr.mxu0 0.0
    %1798 = vmatpush1.msra.mxu0 0.0
    %1799 = vmatprep.subr.mxu0 0.0
    %1800 = vmatpush1.msra.mxu0 0.0
    %1801 = vmatprep.subr.mxu0 0.0
    %1802 = vmatpush1.msra.mxu0 0.0
    %1803 = vmatprep.subr.mxu0 0.0
    %1804 = vmatpush1.msra.mxu0 0.0
    %1805 = vmatprep.subr.mxu0 0.0
    %1806 = vmatpush1.msra.mxu0 0.0
    %1807 = vmatprep.subr.mxu0 0.0
    %1808 = vmatpush1.msra.mxu0 0.0
    %1809 = vmatprep.subr.mxu0 0.0
    %1810 = vmatpush1.msra.mxu0 0.0
    %1811 = vmatprep.subr.mxu0 0.0
    %1812 = vmatpush1.msra.mxu0 0.0
    %1813 = vmatprep.subr.mxu0 0.0
    %1814 = vmatpush1.msra.mxu0 0.0
    %1815 = vmatprep.subr.mxu0 0.0
    %1816 = vmatpush1.msra.mxu0 0.0
    %1817 = vmatprep.subr.mxu0 0.0
    %1818 = vmatpush1.msra.mxu0 0.0
    %1819 = vmatprep.subr.mxu0 0.0
    %1820 = vmatpush1.msra.mxu0 0.0
    %1821 = vmatprep.subr.mxu0 0.0
    %1822 = vmatpush1.msra.mxu0 0.0
    %1823 = vmatprep.subr.mxu0 0.0
    %1824 = vmatpush1.msra.mxu0 0.0
    %1825 = vmatprep.mubr.f32.mxu0 0.0
    %1826 = vmatmul.mubr.f32.gmra.mrb[0].mxu0 %v1756
    %v1827 = vpop.f32.mrb[0].mxu0
    %v1828 = vadd.f32 %v1753, %v1827
    %v1829 = vpop.f32.mrb[0].mxu0
    %1830 = vmatprep.mubr.f32.mxu0 0.0
    %1831 = vmatmul.mubr.f32.gmra.mrb[0].mxu0 %v1759
    %v1832 = vpop.f32.mrb[0].mxu0
    %v1833 = vadd.f32 %v1753, %v1832
    %v1834 = vpop.f32.mrb[0].mxu0
    %1835 = vdwg.mxu0
    %v1836 = vld [vmem:[%s16] sm:$0xff]
    %v1837 = vld [vmem:[%s16 + $0x8] sm:$0xff]
    %v1838 = vld [vmem:[%s16 + $0x10] sm:$0xff]
    %v1839 = vld [vmem:[%s16 + $0x18] sm:$0xff]
    %v1840 = vld [vmem:[#allocation10] sm:$0x1]
    %v1842 = vsel %vm456, %v1828, 0
    %v1845 = vsel %vm456, %v1833, 0
    %v1848 = vsel %vm456, %v1726, 0
    %v1851 = vsel %vm456, %v1731, 0
    %v1854 = vsel %vm456, %v1736, 0
    %v1857 = vsel %vm456, %v1741, 0
    %1859 = vmatprep.subr.mxu0 0.0
    %1860 = vmatpush1.xpose.msra.mxu0 %v1848
    %1861 = vmatprep.subr.mxu0 0.0
    %1862 = vmatpush1.xpose.msra.mxu0 %v1851
    %1863 = vmatprep.subr.mxu0 0.0
    %1864 = vmatpush1.xpose.msra.mxu0 %v1854
    %1865 = vmatprep.subr.mxu0 0.0
    %1866 = vmatpush1.xpose.msra.mxu0 %v1857
    %1867 = vmatprep.subr.mxu0 0.0
    %1868 = vmatpush1.xpose.msra.mxu0 0.0
    %1869 = vmatprep.subr.mxu0 0.0
    %1870 = vmatpush1.xpose.msra.mxu0 0.0
    %1871 = vmatprep.subr.mxu0 0.0
    %1872 = vmatpush1.xpose.msra.mxu0 0.0
    %1873 = vmatprep.subr.mxu0 0.0
    %1874 = vmatpush1.xpose.msra.mxu0 0.0
    %1875 = vmatprep.subr.mxu0 0.0
    %1876 = vmatpush1.xpose.msra.mxu0 0.0
    %1877 = vmatprep.subr.mxu0 0.0
    %1878 = vmatpush1.xpose.msra.mxu0 0.0
    %1879 = vmatprep.subr.mxu0 0.0
    %1880 = vmatpush1.xpose.msra.mxu0 0.0
    %1881 = vmatprep.subr.mxu0 0.0
    %1882 = vmatpush1.xpose.msra.mxu0 0.0
    %1883 = vmatprep.subr.mxu0 0.0
    %1884 = vmatpush1.xpose.msra.mxu0 0.0
    %1885 = vmatprep.subr.mxu0 0.0
    %1886 = vmatpush1.xpose.msra.mxu0 0.0
    %1887 = vmatprep.subr.mxu0 0.0
    %1888 = vmatpush1.xpose.msra.mxu0 0.0
    %1889 = vmatprep.subr.mxu0 0.0
    %1890 = vmatpush1.xpose.msra.mxu0 0.0
    %1891 = vmatprep.subr.mxu0 0.0
    %1892 = vmatpush1.xpose.msra.mxu0 0.0
    %1893 = vmatprep.subr.mxu0 0.0
    %1894 = vmatpush1.xpose.msra.mxu0 0.0
    %1895 = vmatprep.subr.mxu0 0.0
    %1896 = vmatpush1.xpose.msra.mxu0 0.0
    %1897 = vmatprep.subr.mxu0 0.0
    %1898 = vmatpush1.xpose.msra.mxu0 0.0
    %1899 = vmatprep.subr.mxu0 0.0
    %1900 = vmatpush1.xpose.msra.mxu0 0.0
    %1901 = vmatprep.subr.mxu0 0.0
    %1902 = vmatpush1.xpose.msra.mxu0 0.0
    %1903 = vmatprep.subr.mxu0 0.0
    %1904 = vmatpush1.xpose.msra.mxu0 0.0
    %1905 = vmatprep.subr.mxu0 0.0
    %1906 = vmatpush1.xpose.msra.mxu0 0.0
    %1907 = vmatprep.subr.mxu0 0.0
    %1908 = vmatpush1.xpose.msra.mxu0 0.0
    %1909 = vmatprep.subr.mxu0 0.0
    %1910 = vmatpush1.xpose.msra.mxu0 0.0
    %1911 = vmatprep.subr.mxu0 0.0
    %1912 = vmatpush1.xpose.msra.mxu0 0.0
    %1913 = vmatprep.subr.mxu0 0.0
    %1914 = vmatpush1.xpose.msra.mxu0 0.0
    %1915 = vmatprep.subr.mxu0 0.0
    %1916 = vmatpush1.xpose.msra.mxu0 0.0
    %1917 = vmatprep.subr.mxu0 0.0
    %1918 = vmatpush1.xpose.msra.mxu0 0.0
    %1919 = vmatprep.subr.mxu0 0.0
    %1920 = vmatpush1.xpose.msra.mxu0 0.0
    %1921 = vmatprep.subr.mxu0 0.0
    %1922 = vmatpush1.xpose.msra.mxu0 0.0
    %1923 = vmatprep.mubr.f32.mxu0 0.0
    %1924 = vmatmul.mubr.f32.gmra.mrb[0].mxu0 %v1842
    %v1925 = vpop.f32.mrb[0].mxu0
    %v1926 = vadd.f32 %v350, %v1925
    %v1927 = vpop.f32.mrb[0].mxu0
    %1928 = vmatprep.mubr.f32.mxu0 0.0
    %1929 = vmatmul.mubr.f32.gmra.mrb[0].mxu0 %v1845
    %v1930 = vpop.f32.mrb[0].mxu0
    %v1931 = vadd.f32 %v351, %v1930
    %v1932 = vpop.f32.mrb[0].mxu0
    %1933 = vdwg.mxu0
    %v1934 = vsel %vm363, %v1926, -inf
    %1935 = vmax.xlane.f32.xlu0 %v1934
    %v1936 = vpop.xlane.xlu0 %1935
    %v1937 = vsel %vm363, %v1931, -inf
    %1938 = vmax.xlane.f32.xlu0 %v1937
    %v1939 = vpop.xlane.xlu0 %1938
    %v1940 = vsub.f32 %v1926, %v1936
    %v1941 = vsub.f32 %v1931, %v1939
    %v1942 = vmul.f32 %v1940, 1.442695
    %v1943 = vpow.pop %v1942
    %v1944 = vmul.f32 %v1941, 1.442695
    %v1945 = vpow.pop %v1944
    %v1946 = vsel %vm363, %v1943, 0.0
    %1947 = vadd.xlane.f32.xlu0 %v1946
    %v1948 = vpop.xlane.xlu0 %1947
    %v1949 = vsel %vm363, %v1945, 0.0
    %1950 = vadd.xlane.f32.xlu0 %v1949
    %v1951 = vpop.xlane.xlu0 %1950
    %v1952 = vrcp.pop %v1948
    %v1953 = vrcp.pop %v1951
    %v1954 = vmul.f32 %v1943, %v1952
    %v1955 = vmul.f32 %v1945, %v1953
    %1956 = vrot.lane.b32.xlu0 %v1726, 96
    %v1957 = vpop.permute.xlu0 %1956
    %1958 = vrot.lane.b32.xlu0 %v1731, 96
    %v1959 = vpop.permute.xlu0 %1958
    %1960 = vrot.lane.b32.xlu0 %v1736, 96
    %v1961 = vpop.permute.xlu0 %1960
    %1962 = vrot.lane.b32.xlu0 %v1741, 96
    %v1963 = vpop.permute.xlu0 %1962
    %v1969 = vsel %vm363, %v1954, 0
    %v1972 = vsel %vm363, %v1955, 0
    %1974 = vmatprep.subr.mxu0 0.0
    %1975 = vmatpush1.msra.mxu0 %v1957
    %1976 = vmatprep.subr.mxu0 0.0
    %1977 = vmatpush1.msra.mxu0 %v1959
    %1978 = vmatprep.subr.mxu0 0.0
    %1979 = vmatpush1.msra.mxu0 %v1961
    %1980 = vmatprep.subr.mxu0 0.0
    %1981 = vmatpush1.msra.mxu0 %v1963
    %1982 = vmatprep.subr.mxu0 0.0
    %1983 = vmatpush1.msra.mxu0 0.0
    %1984 = vmatprep.subr.mxu0 0.0
    %1985 = vmatpush1.msra.mxu0 0.0
    %1986 = vmatprep.subr.mxu0 0.0
    %1987 = vmatpush1.msra.mxu0 0.0
    %1988 = vmatprep.subr.mxu0 0.0
    %1989 = vmatpush1.msra.mxu0 0.0
    %1990 = vmatprep.subr.mxu0 0.0
    %1991 = vmatpush1.msra.mxu0 0.0
    %1992 = vmatprep.subr.mxu0 0.0
    %1993 = vmatpush1.msra.mxu0 0.0
    %1994 = vmatprep.subr.mxu0 0.0
    %1995 = vmatpush1.msra.mxu0 0.0
    %1996 = vmatprep.subr.mxu0 0.0
    %1997 = vmatpush1.msra.mxu0 0.0
    %1998 = vmatprep.subr.mxu0 0.0
    %1999 = vmatpush1.msra.mxu0 0.0
    %2000 = vmatprep.subr.mxu0 0.0
    %2001 = vmatpush1.msra.mxu0 0.0
    %2002 = vmatprep.subr.mxu0 0.0
    %2003 = vmatpush1.msra.mxu0 0.0
    %2004 = vmatprep.subr.mxu0 0.0
    %2005 = vmatpush1.msra.mxu0 0.0
    %2006 = vmatprep.subr.mxu0 0.0
    %2007 = vmatpush1.msra.mxu0 0.0
    %2008 = vmatprep.subr.mxu0 0.0
    %2009 = vmatpush1.msra.mxu0 0.0
    %2010 = vmatprep.subr.mxu0 0.0
    %2011 = vmatpush1.msra.mxu0 0.0
    %2012 = vmatprep.subr.mxu0 0.0
    %2013 = vmatpush1.msra.mxu0 0.0
    %2014 = vmatprep.subr.mxu0 0.0
    %2015 = vmatpush1.msra.mxu0 0.0
    %2016 = vmatprep.subr.mxu0 0.0
    %2017 = vmatpush1.msra.mxu0 0.0
    %2018 = vmatprep.subr.mxu0 0.0
    %2019 = vmatpush1.msra.mxu0 0.0
    %2020 = vmatprep.subr.mxu0 0.0
    %2021 = vmatpush1.msra.mxu0 0.0
    %2022 = vmatprep.subr.mxu0 0.0
    %2023 = vmatpush1.msra.mxu0 0.0
    %2024 = vmatprep.subr.mxu0 0.0
    %2025 = vmatpush1.msra.mxu0 0.0
    %2026 = vmatprep.subr.mxu0 0.0
    %2027 = vmatpush1.msra.mxu0 0.0
    %2028 = vmatprep.subr.mxu0 0.0
    %2029 = vmatpush1.msra.mxu0 0.0
    %2030 = vmatprep.subr.mxu0 0.0
    %2031 = vmatpush1.msra.mxu0 0.0
    %2032 = vmatprep.subr.mxu0 0.0
    %2033 = vmatpush1.msra.mxu0 0.0
    %2034 = vmatprep.subr.mxu0 0.0
    %2035 = vmatpush1.msra.mxu0 0.0
    %2036 = vmatprep.subr.mxu0 0.0
    %2037 = vmatpush1.msra.mxu0 0.0
    %2038 = vmatprep.mubr.f32.mxu0 0.0
    %2039 = vmatmul.mubr.f32.gmra.mrb[0].mxu0 %v1969
    %v2040 = vpop.f32.mrb[0].mxu0
    %v2041 = vadd.f32 0.0, %v2040
    %v2042 = vpop.f32.mrb[0].mxu0
    %2043 = vmatprep.mubr.f32.mxu0 0.0
    %2044 = vmatmul.mubr.f32.gmra.mrb[0].mxu0 %v1972
    %v2045 = vpop.f32.mrb[0].mxu0
    %v2046 = vadd.f32 0.0, %v2045
    %v2047 = vpop.f32.mrb[0].mxu0
    %2048 = vdwg.mxu0
    %2049 = vrot.lane.b32.xlu0 %v1828, 120
    %v2050 = vpop.permute.xlu0 %2049
    %2051 = vrot.lane.b32.xlu0 %v1833, 120
    %v2052 = vpop.permute.xlu0 %2051
    %2053 = vrot.lane.b32.xlu0 %v1726, 120
    %v2054 = vpop.permute.xlu0 %2053
    %2055 = vrot.lane.b32.xlu0 %v1731, 120
    %v2056 = vpop.permute.xlu0 %2055
    %2057 = vrot.lane.b32.xlu0 %v1736, 120
    %v2058 = vpop.permute.xlu0 %2057
    %2059 = vrot.lane.b32.xlu0 %v1741, 120
    %v2060 = vpop.permute.xlu0 %2059
    %v2061 = vsel %vm456, %v2050, 0
    %v2063 = vsel %vm456, %v2052, 0
    %v2065 = vsel %vm456, %v2054, 0
    %v2067 = vsel %vm456, %v2056, 0
    %v2069 = vsel %vm456, %v2058, 0
    %v2071 = vsel %vm456, %v2060, 0
    %2073 = vmatprep.subr.mxu0 0.0
    %2074 = vmatpush1.xpose.msra.mxu0 %v2065
    %2075 = vmatprep.subr.mxu0 0.0
    %2076 = vmatpush1.xpose.msra.mxu0 %v2067
    %2077 = vmatprep.subr.mxu0 0.0
    %2078 = vmatpush1.xpose.msra.mxu0 %v2069
    %2079 = vmatprep.subr.mxu0 0.0
    %2080 = vmatpush1.xpose.msra.mxu0 %v2071
    %2081 = vmatprep.subr.mxu0 0.0
    %2082 = vmatpush1.xpose.msra.mxu0 0.0
    %2083 = vmatprep.subr.mxu0 0.0
    %2084 = vmatpush1.xpose.msra.mxu0 0.0
    %2085 = vmatprep.subr.mxu0 0.0
    %2086 = vmatpush1.xpose.msra.mxu0 0.0
    %2087 = vmatprep.subr.mxu0 0.0
    %2088 = vmatpush1.xpose.msra.mxu0 0.0
    %2089 = vmatprep.subr.mxu0 0.0
    %2090 = vmatpush1.xpose.msra.mxu0 0.0
    %2091 = vmatprep.subr.mxu0 0.0
    %2092 = vmatpush1.xpose.msra.mxu0 0.0
    %2093 = vmatprep.subr.mxu0 0.0
    %2094 = vmatpush1.xpose.msra.mxu0 0.0
    %2095 = vmatprep.subr.mxu0 0.0
    %2096 = vmatpush1.xpose.msra.mxu0 0.0
    %2097 = vmatprep.subr.mxu0 0.0
    %2098 = vmatpush1.xpose.msra.mxu0 0.0
    %2099 = vmatprep.subr.mxu0 0.0
    %2100 = vmatpush1.xpose.msra.mxu0 0.0
    %2101 = vmatprep.subr.mxu0 0.0
    %2102 = vmatpush1.xpose.msra.mxu0 0.0
    %2103 = vmatprep.subr.mxu0 0.0
    %2104 = vmatpush1.xpose.msra.mxu0 0.0
    %2105 = vmatprep.subr.mxu0 0.0
    %2106 = vmatpush1.xpose.msra.mxu0 0.0
    %2107 = vmatprep.subr.mxu0 0.0
    %2108 = vmatpush1.xpose.msra.mxu0 0.0
    %2109 = vmatprep.subr.mxu0 0.0
    %2110 = vmatpush1.xpose.msra.mxu0 0.0
    %2111 = vmatprep.subr.mxu0 0.0
    %2112 = vmatpush1.xpose.msra.mxu0 0.0
    %2113 = vmatprep.subr.mxu0 0.0
    %2114 = vmatpush1.xpose.msra.mxu0 0.0
    %2115 = vmatprep.subr.mxu0 0.0
    %2116 = vmatpush1.xpose.msra.mxu0 0.0
    %2117 = vmatprep.subr.mxu0 0.0
    %2118 = vmatpush1.xpose.msra.mxu0 0.0
    %2119 = vmatprep.subr.mxu0 0.0
    %2120 = vmatpush1.xpose.msra.mxu0 0.0
    %2121 = vmatprep.subr.mxu0 0.0
    %2122 = vmatpush1.xpose.msra.mxu0 0.0
    %2123 = vmatprep.subr.mxu0 0.0
    %2124 = vmatpush1.xpose.msra.mxu0 0.0
    %2125 = vmatprep.subr.mxu0 0.0
    %2126 = vmatpush1.xpose.msra.mxu0 0.0
    %2127 = vmatprep.subr.mxu0 0.0
    %2128 = vmatpush1.xpose.msra.mxu0 0.0
    %2129 = vmatprep.subr.mxu0 0.0
    %2130 = vmatpush1.xpose.msra.mxu0 0.0
    %2131 = vmatprep.subr.mxu0 0.0
    %2132 = vmatpush1.xpose.msra.mxu0 0.0
    %2133 = vmatprep.subr.mxu0 0.0
    %2134 = vmatpush1.xpose.msra.mxu0 0.0
    %2135 = vmatprep.subr.mxu0 0.0
    %2136 = vmatpush1.xpose.msra.mxu0 0.0
    %2137 = vmatprep.mubr.f32.mxu0 0.0
    %2138 = vmatmul.mubr.f32.gmra.mrb[0].mxu0 %v2061
    %v2139 = vpop.f32.mrb[0].mxu0
    %v2140 = vadd.f32 %v350, %v2139
    %v2141 = vpop.f32.mrb[0].mxu0
    %2142 = vmatprep.mubr.f32.mxu0 0.0
    %2143 = vmatmul.mubr.f32.gmra.mrb[0].mxu0 %v2063
    %v2144 = vpop.f32.mrb[0].mxu0
    %v2145 = vadd.f32 %v351, %v2144
    %v2146 = vpop.f32.mrb[0].mxu0
    %2147 = vdwg.mxu0
    %v2148 = vsel %vm363, %v2140, -inf
    %2149 = vmax.xlane.f32.xlu0 %v2148
    %v2150 = vpop.xlane.xlu0 %2149
    %v2151 = vsel %vm363, %v2145, -inf
    %2152 = vmax.xlane.f32.xlu0 %v2151
    %v2153 = vpop.xlane.xlu0 %2152
    %v2154 = vsub.f32 %v2140, %v2150
    %v2155 = vsub.f32 %v2145, %v2153
    %v2156 = vmul.f32 %v2154, 1.442695
    %v2157 = vpow.pop %v2156
    %v2158 = vmul.f32 %v2155, 1.442695
    %v2159 = vpow.pop %v2158
    %v2160 = vsel %vm363, %v2157, 0.0
    %2161 = vadd.xlane.f32.xlu0 %v2160
    %v2162 = vpop.xlane.xlu0 %2161
    %v2163 = vsel %vm363, %v2159, 0.0
    %2164 = vadd.xlane.f32.xlu0 %v2163
    %v2165 = vpop.xlane.xlu0 %2164
    %v2166 = vrcp.pop %v2162
    %v2167 = vrcp.pop %v2165
    %v2168 = vmul.f32 %v2157, %v2166
    %v2169 = vmul.f32 %v2159, %v2167
    %2170 = vrot.lane.b32.xlu0 %v1726, 88
    %v2171 = vpop.permute.xlu0 %2170
    %2172 = vrot.lane.b32.xlu0 %v1731, 88
    %v2173 = vpop.permute.xlu0 %2172
    %2174 = vrot.lane.b32.xlu0 %v1736, 88
    %v2175 = vpop.permute.xlu0 %2174
    %2176 = vrot.lane.b32.xlu0 %v1741, 88
    %v2177 = vpop.permute.xlu0 %2176
    %v2183 = vsel %vm363, %v2168, 0
    %v2186 = vsel %vm363, %v2169, 0
    %2188 = vmatprep.subr.mxu0 0.0
    %2189 = vmatpush1.msra.mxu0 %v2171
    %2190 = vmatprep.subr.mxu0 0.0
    %2191 = vmatpush1.msra.mxu0 %v2173
    %2192 = vmatprep.subr.mxu0 0.0
    %2193 = vmatpush1.msra.mxu0 %v2175
    %2194 = vmatprep.subr.mxu0 0.0
    %2195 = vmatpush1.msra.mxu0 %v2177
    %2196 = vmatprep.subr.mxu0 0.0
    %2197 = vmatpush1.msra.mxu0 0.0
    %2198 = vmatprep.subr.mxu0 0.0
    %2199 = vmatpush1.msra.mxu0 0.0
    %2200 = vmatprep.subr.mxu0 0.0
    %2201 = vmatpush1.msra.mxu0 0.0
    %2202 = vmatprep.subr.mxu0 0.0
    %2203 = vmatpush1.msra.mxu0 0.0
    %2204 = vmatprep.subr.mxu0 0.0
    %2205 = vmatpush1.msra.mxu0 0.0
    %2206 = vmatprep.subr.mxu0 0.0
    %2207 = vmatpush1.msra.mxu0 0.0
    %2208 = vmatprep.subr.mxu0 0.0
    %2209 = vmatpush1.msra.mxu0 0.0
    %2210 = vmatprep.subr.mxu0 0.0
    %2211 = vmatpush1.msra.mxu0 0.0
    %2212 = vmatprep.subr.mxu0 0.0
    %2213 = vmatpush1.msra.mxu0 0.0
    %2214 = vmatprep.subr.mxu0 0.0
    %2215 = vmatpush1.msra.mxu0 0.0
    %2216 = vmatprep.subr.mxu0 0.0
    %2217 = vmatpush1.msra.mxu0 0.0
    %2218 = vmatprep.subr.mxu0 0.0
    %2219 = vmatpush1.msra.mxu0 0.0
    %2220 = vmatprep.subr.mxu0 0.0
    %2221 = vmatpush1.msra.mxu0 0.0
    %2222 = vmatprep.subr.mxu0 0.0
    %2223 = vmatpush1.msra.mxu0 0.0
    %2224 = vmatprep.subr.mxu0 0.0
    %2225 = vmatpush1.msra.mxu0 0.0
    %2226 = vmatprep.subr.mxu0 0.0
    %2227 = vmatpush1.msra.mxu0 0.0
    %2228 = vmatprep.subr.mxu0 0.0
    %2229 = vmatpush1.msra.mxu0 0.0
    %2230 = vmatprep.subr.mxu0 0.0
    %2231 = vmatpush1.msra.mxu0 0.0
    %2232 = vmatprep.subr.mxu0 0.0
    %2233 = vmatpush1.msra.mxu0 0.0
    %2234 = vmatprep.subr.mxu0 0.0
    %2235 = vmatpush1.msra.mxu0 0.0
    %2236 = vmatprep.subr.mxu0 0.0
    %2237 = vmatpush1.msra.mxu0 0.0
    %2238 = vmatprep.subr.mxu0 0.0
    %2239 = vmatpush1.msra.mxu0 0.0
    %2240 = vmatprep.subr.mxu0 0.0
    %2241 = vmatpush1.msra.mxu0 0.0
    %2242 = vmatprep.subr.mxu0 0.0
    %2243 = vmatpush1.msra.mxu0 0.0
    %2244 = vmatprep.subr.mxu0 0.0
    %2245 = vmatpush1.msra.mxu0 0.0
    %2246 = vmatprep.subr.mxu0 0.0
    %2247 = vmatpush1.msra.mxu0 0.0
    %2248 = vmatprep.subr.mxu0 0.0
    %2249 = vmatpush1.msra.mxu0 0.0
    %2250 = vmatprep.subr.mxu0 0.0
    %2251 = vmatpush1.msra.mxu0 0.0
    %2252 = vmatprep.mubr.f32.mxu0 0.0
    %2253 = vmatmul.mubr.f32.gmra.mrb[0].mxu0 %v2183
    %v2254 = vpop.f32.mrb[0].mxu0
    %v2255 = vadd.f32 0.0, %v2254
    %v2256 = vpop.f32.mrb[0].mxu0
    %2257 = vmatprep.mubr.f32.mxu0 0.0
    %2258 = vmatmul.mubr.f32.gmra.mrb[0].mxu0 %v2186
    %v2259 = vpop.f32.mrb[0].mxu0
    %v2260 = vadd.f32 0.0, %v2259
    %v2261 = vpop.f32.mrb[0].mxu0
    %2262 = vdwg.mxu0
    %v2264 = vsel %vm456, %v2255, 0
    %v2267 = vsel %vm456, %v2260, 0
    %2269 = vmatprep.subr.mxu0 0.0
    %2270 = vmatpush1.msra.mxu0 %v1837
    %2271 = vmatprep.subr.mxu0 0.0
    %2272 = vmatpush1.msra.mxu0 0.0
    %2273 = vmatprep.subr.mxu0 0.0
    %2274 = vmatpush1.msra.mxu0 0.0
    %2275 = vmatprep.subr.mxu0 0.0
    %2276 = vmatpush1.msra.mxu0 0.0
    %2277 = vmatprep.subr.mxu0 0.0
    %2278 = vmatpush1.msra.mxu0 0.0
    %2279 = vmatprep.subr.mxu0 0.0
    %2280 = vmatpush1.msra.mxu0 0.0
    %2281 = vmatprep.subr.mxu0 0.0
    %2282 = vmatpush1.msra.mxu0 0.0
    %2283 = vmatprep.subr.mxu0 0.0
    %2284 = vmatpush1.msra.mxu0 0.0
    %2285 = vmatprep.subr.mxu0 0.0
    %2286 = vmatpush1.msra.mxu0 0.0
    %2287 = vmatprep.subr.mxu0 0.0
    %2288 = vmatpush1.msra.mxu0 0.0
    %2289 = vmatprep.subr.mxu0 0.0
    %2290 = vmatpush1.msra.mxu0 0.0
    %2291 = vmatprep.subr.mxu0 0.0
    %2292 = vmatpush1.msra.mxu0 0.0
    %2293 = vmatprep.subr.mxu0 0.0
    %2294 = vmatpush1.msra.mxu0 0.0
    %2295 = vmatprep.subr.mxu0 0.0
    %2296 = vmatpush1.msra.mxu0 0.0
    %2297 = vmatprep.subr.mxu0 0.0
    %2298 = vmatpush1.msra.mxu0 0.0
    %2299 = vmatprep.subr.mxu0 0.0
    %2300 = vmatpush1.msra.mxu0 0.0
    %2301 = vmatprep.subr.mxu0 0.0
    %2302 = vmatpush1.msra.mxu0 0.0
    %2303 = vmatprep.subr.mxu0 0.0
    %2304 = vmatpush1.msra.mxu0 0.0
    %2305 = vmatprep.subr.mxu0 0.0
    %2306 = vmatpush1.msra.mxu0 0.0
    %2307 = vmatprep.subr.mxu0 0.0
    %2308 = vmatpush1.msra.mxu0 0.0
    %2309 = vmatprep.subr.mxu0 0.0
    %2310 = vmatpush1.msra.mxu0 0.0
    %2311 = vmatprep.subr.mxu0 0.0
    %2312 = vmatpush1.msra.mxu0 0.0
    %2313 = vmatprep.subr.mxu0 0.0
    %2314 = vmatpush1.msra.mxu0 0.0
    %2315 = vmatprep.subr.mxu0 0.0
    %2316 = vmatpush1.msra.mxu0 0.0
    %2317 = vmatprep.subr.mxu0 0.0
    %2318 = vmatpush1.msra.mxu0 0.0
    %2319 = vmatprep.subr.mxu0 0.0
    %2320 = vmatpush1.msra.mxu0 0.0
    %2321 = vmatprep.subr.mxu0 0.0
    %2322 = vmatpush1.msra.mxu0 0.0
    %2323 = vmatprep.subr.mxu0 0.0
    %2324 = vmatpush1.msra.mxu0 0.0
    %2325 = vmatprep.subr.mxu0 0.0
    %2326 = vmatpush1.msra.mxu0 0.0
    %2327 = vmatprep.subr.mxu0 0.0
    %2328 = vmatpush1.msra.mxu0 0.0
    %2329 = vmatprep.subr.mxu0 0.0
    %2330 = vmatpush1.msra.mxu0 0.0
    %2331 = vmatprep.subr.mxu0 0.0
    %2332 = vmatpush1.msra.mxu0 0.0
    %2333 = vmatprep.mubr.f32.mxu0 0.0
    %2334 = vmatmul.mubr.f32.gmra.mrb[0].mxu0 %v2264
    %v2335 = vpop.f32.mrb[0].mxu0
    %v2336 = vadd.f32 0.0, %v2335
    %v2337 = vpop.f32.mrb[0].mxu0
    %2338 = vmatprep.mubr.f32.mxu0 0.0
    %2339 = vmatmul.mubr.f32.gmra.mrb[0].mxu0 %v2267
    %v2340 = vpop.f32.mrb[0].mxu0
    %v2341 = vadd.f32 0.0, %v2340
    %v2342 = vpop.f32.mrb[0].mxu0
    %2343 = vdwg.mxu0
    %v2345 = vsel %vm456, %v2041, 0
    %v2348 = vsel %vm456, %v2046, 0
    %2350 = vmatprep.subr.mxu0 0.0
    %2351 = vmatpush1.msra.mxu0 %v1836
    %2352 = vmatprep.subr.mxu0 0.0
    %2353 = vmatpush1.msra.mxu0 0.0
    %2354 = vmatprep.subr.mxu0 0.0
    %2355 = vmatpush1.msra.mxu0 0.0
    %2356 = vmatprep.subr.mxu0 0.0
    %2357 = vmatpush1.msra.mxu0 0.0
    %2358 = vmatprep.subr.mxu0 0.0
    %2359 = vmatpush1.msra.mxu0 0.0
    %2360 = vmatprep.subr.mxu0 0.0
    %2361 = vmatpush1.msra.mxu0 0.0
    %2362 = vmatprep.subr.mxu0 0.0
    %2363 = vmatpush1.msra.mxu0 0.0
    %2364 = vmatprep.subr.mxu0 0.0
    %2365 = vmatpush1.msra.mxu0 0.0
    %2366 = vmatprep.subr.mxu0 0.0
    %2367 = vmatpush1.msra.mxu0 0.0
    %2368 = vmatprep.subr.mxu0 0.0
    %2369 = vmatpush1.msra.mxu0 0.0
    %2370 = vmatprep.subr.mxu0 0.0
    %2371 = vmatpush1.msra.mxu0 0.0
    %2372 = vmatprep.subr.mxu0 0.0
    %2373 = vmatpush1.msra.mxu0 0.0
    %2374 = vmatprep.subr.mxu0 0.0
    %2375 = vmatpush1.msra.mxu0 0.0
    %2376 = vmatprep.subr.mxu0 0.0
    %2377 = vmatpush1.msra.mxu0 0.0
    %2378 = vmatprep.subr.mxu0 0.0
    %2379 = vmatpush1.msra.mxu0 0.0
    %2380 = vmatprep.subr.mxu0 0.0
    %2381 = vmatpush1.msra.mxu0 0.0
    %2382 = vmatprep.subr.mxu0 0.0
    %2383 = vmatpush1.msra.mxu0 0.0
    %2384 = vmatprep.subr.mxu0 0.0
    %2385 = vmatpush1.msra.mxu0 0.0
    %2386 = vmatprep.subr.mxu0 0.0
    %2387 = vmatpush1.msra.mxu0 0.0
    %2388 = vmatprep.subr.mxu0 0.0
    %2389 = vmatpush1.msra.mxu0 0.0
    %2390 = vmatprep.subr.mxu0 0.0
    %2391 = vmatpush1.msra.mxu0 0.0
    %2392 = vmatprep.subr.mxu0 0.0
    %2393 = vmatpush1.msra.mxu0 0.0
    %2394 = vmatprep.subr.mxu0 0.0
    %2395 = vmatpush1.msra.mxu0 0.0
    %2396 = vmatprep.subr.mxu0 0.0
    %2397 = vmatpush1.msra.mxu0 0.0
    %2398 = vmatprep.subr.mxu0 0.0
    %2399 = vmatpush1.msra.mxu0 0.0
    %2400 = vmatprep.subr.mxu0 0.0
    %2401 = vmatpush1.msra.mxu0 0.0
    %2402 = vmatprep.subr.mxu0 0.0
    %2403 = vmatpush1.msra.mxu0 0.0
    %2404 = vmatprep.subr.mxu0 0.0
    %2405 = vmatpush1.msra.mxu0 0.0
    %2406 = vmatprep.subr.mxu0 0.0
    %2407 = vmatpush1.msra.mxu0 0.0
    %2408 = vmatprep.subr.mxu0 0.0
    %2409 = vmatpush1.msra.mxu0 0.0
    %2410 = vmatprep.subr.mxu0 0.0
    %2411 = vmatpush1.msra.mxu0 0.0
    %2412 = vmatprep.subr.mxu0 0.0
    %2413 = vmatpush1.msra.mxu0 0.0
    %2414 = vmatprep.mubr.f32.mxu0 0.0
    %2415 = vmatmul.mubr.f32.gmra.mrb[0].mxu0 %v2345
    %v2416 = vpop.f32.mrb[0].mxu0
    %v2417 = vadd.f32 %v2336, %v2416
    %v2418 = vpop.f32.mrb[0].mxu0
    %2419 = vmatprep.mubr.f32.mxu0 0.0
    %2420 = vmatmul.mubr.f32.gmra.mrb[0].mxu0 %v2348
    %v2421 = vpop.f32.mrb[0].mxu0
    %v2422 = vadd.f32 %v2341, %v2421
    %v2423 = vpop.f32.mrb[0].mxu0
    %2424 = vdwg.mxu0
    %2425 = vrot.lane.b32.xlu0 %v1828, 112
    %v2426 = vpop.permute.xlu0 %2425
    %2427 = vrot.lane.b32.xlu0 %v1833, 112
    %v2428 = vpop.permute.xlu0 %2427
    %2429 = vrot.lane.b32.xlu0 %v1726, 112
    %v2430 = vpop.permute.xlu0 %2429
    %2431 = vrot.lane.b32.xlu0 %v1731, 112
    %v2432 = vpop.permute.xlu0 %2431
    %2433 = vrot.lane.b32.xlu0 %v1736, 112
    %v2434 = vpop.permute.xlu0 %2433
    %2435 = vrot.lane.b32.xlu0 %v1741, 112
    %v2436 = vpop.permute.xlu0 %2435
    %v2437 = vsel %vm456, %v2426, 0
    %v2439 = vsel %vm456, %v2428, 0
    %v2441 = vsel %vm456, %v2430, 0
    %v2443 = vsel %vm456, %v2432, 0
    %v2445 = vsel %vm456, %v2434, 0
    %v2447 = vsel %vm456, %v2436, 0
    %2449 = vmatprep.subr.mxu0 0.0
    %2450 = vmatpush1.xpose.msra.mxu0 %v2441
    %2451 = vmatprep.subr.mxu0 0.0
    %2452 = vmatpush1.xpose.msra.mxu0 %v2443
    %2453 = vmatprep.subr.mxu0 0.0
    %2454 = vmatpush1.xpose.msra.mxu0 %v2445
    %2455 = vmatprep.subr.mxu0 0.0
    %2456 = vmatpush1.xpose.msra.mxu0 %v2447
    %2457 = vmatprep.subr.mxu0 0.0
    %2458 = vmatpush1.xpose.msra.mxu0 0.0
    %2459 = vmatprep.subr.mxu0 0.0
    %2460 = vmatpush1.xpose.msra.mxu0 0.0
    %2461 = vmatprep.subr.mxu0 0.0
    %2462 = vmatpush1.xpose.msra.mxu0 0.0
    %2463 = vmatprep.subr.mxu0 0.0
    %2464 = vmatpush1.xpose.msra.mxu0 0.0
    %2465 = vmatprep.subr.mxu0 0.0
    %2466 = vmatpush1.xpose.msra.mxu0 0.0
    %2467 = vmatprep.subr.mxu0 0.0
    %2468 = vmatpush1.xpose.msra.mxu0 0.0
    %2469 = vmatprep.subr.mxu0 0.0
    %2470 = vmatpush1.xpose.msra.mxu0 0.0
    %2471 = vmatprep.subr.mxu0 0.0
    %2472 = vmatpush1.xpose.msra.mxu0 0.0
    %2473 = vmatprep.subr.mxu0 0.0
    %2474 = vmatpush1.xpose.msra.mxu0 0.0
    %2475 = vmatprep.subr.mxu0 0.0
    %2476 = vmatpush1.xpose.msra.mxu0 0.0
    %2477 = vmatprep.subr.mxu0 0.0
    %2478 = vmatpush1.xpose.msra.mxu0 0.0
    %2479 = vmatprep.subr.mxu0 0.0
    %2480 = vmatpush1.xpose.msra.mxu0 0.0
    %2481 = vmatprep.subr.mxu0 0.0
    %2482 = vmatpush1.xpose.msra.mxu0 0.0
    %2483 = vmatprep.subr.mxu0 0.0
    %2484 = vmatpush1.xpose.msra.mxu0 0.0
    %2485 = vmatprep.subr.mxu0 0.0
    %2486 = vmatpush1.xpose.msra.mxu0 0.0
    %2487 = vmatprep.subr.mxu0 0.0
    %2488 = vmatpush1.xpose.msra.mxu0 0.0
    %2489 = vmatprep.subr.mxu0 0.0
    %2490 = vmatpush1.xpose.msra.mxu0 0.0
    %2491 = vmatprep.subr.mxu0 0.0
    %2492 = vmatpush1.xpose.msra.mxu0 0.0
    %2493 = vmatprep.subr.mxu0 0.0
    %2494 = vmatpush1.xpose.msra.mxu0 0.0
    %2495 = vmatprep.subr.mxu0 0.0
    %2496 = vmatpush1.xpose.msra.mxu0 0.0
    %2497 = vmatprep.subr.mxu0 0.0
    %2498 = vmatpush1.xpose.msra.mxu0 0.0
    %2499 = vmatprep.subr.mxu0 0.0
    %2500 = vmatpush1.xpose.msra.mxu0 0.0
    %2501 = vmatprep.subr.mxu0 0.0
    %2502 = vmatpush1.xpose.msra.mxu0 0.0
    %2503 = vmatprep.subr.mxu0 0.0
    %2504 = vmatpush1.xpose.msra.mxu0 0.0
    %2505 = vmatprep.subr.mxu0 0.0
    %2506 = vmatpush1.xpose.msra.mxu0 0.0
    %2507 = vmatprep.subr.mxu0 0.0
    %2508 = vmatpush1.xpose.msra.mxu0 0.0
    %2509 = vmatprep.subr.mxu0 0.0
    %2510 = vmatpush1.xpose.msra.mxu0 0.0
    %2511 = vmatprep.subr.mxu0 0.0
    %2512 = vmatpush1.xpose.msra.mxu0 0.0
    %2513 = vmatprep.mubr.f32.mxu0 0.0
    %2514 = vmatmul.mubr.f32.gmra.mrb[0].mxu0 %v2437
    %v2515 = vpop.f32.mrb[0].mxu0
    %v2516 = vadd.f32 %v350, %v2515
    %v2517 = vpop.f32.mrb[0].mxu0
    %2518 = vmatprep.mubr.f32.mxu0 0.0
    %2519 = vmatmul.mubr.f32.gmra.mrb[0].mxu0 %v2439
    %v2520 = vpop.f32.mrb[0].mxu0
    %v2521 = vadd.f32 %v351, %v2520
    %v2522 = vpop.f32.mrb[0].mxu0
    %2523 = vdwg.mxu0
    %v2524 = vsel %vm363, %v2516, -inf
    %2525 = vmax.xlane.f32.xlu0 %v2524
    %v2526 = vpop.xlane.xlu0 %2525
    %v2527 = vsel %vm363, %v2521, -inf
    %2528 = vmax.xlane.f32.xlu0 %v2527
    %v2529 = vpop.xlane.xlu0 %2528
    %v2530 = vsub.f32 %v2516, %v2526
    %v2531 = vsub.f32 %v2521, %v2529
    %v2532 = vmul.f32 %v2530, 1.442695
    %v2533 = vpow.pop %v2532
    %v2534 = vmul.f32 %v2531, 1.442695
    %v2535 = vpow.pop %v2534
    %v2536 = vsel %vm363, %v2533, 0.0
    %2537 = vadd.xlane.f32.xlu0 %v2536
    %v2538 = vpop.xlane.xlu0 %2537
    %v2539 = vsel %vm363, %v2535, 0.0
    %2540 = vadd.xlane.f32.xlu0 %v2539
    %v2541 = vpop.xlane.xlu0 %2540
    %v2542 = vrcp.pop %v2538
    %v2543 = vrcp.pop %v2541
    %v2544 = vmul.f32 %v2533, %v2542
    %v2545 = vmul.f32 %v2535, %v2543
    %2546 = vrot.lane.b32.xlu0 %v1726, 80
    %v2547 = vpop.permute.xlu0 %2546
    %2548 = vrot.lane.b32.xlu0 %v1731, 80
    %v2549 = vpop.permute.xlu0 %2548
    %2550 = vrot.lane.b32.xlu0 %v1736, 80
    %v2551 = vpop.permute.xlu0 %2550
    %2552 = vrot.lane.b32.xlu0 %v1741, 80
    %v2553 = vpop.permute.xlu0 %2552
    %v2559 = vsel %vm363, %v2544, 0
    %v2562 = vsel %vm363, %v2545, 0
    %2564 = vmatprep.subr.mxu0 0.0
    %2565 = vmatpush1.msra.mxu0 %v2547
    %2566 = vmatprep.subr.mxu0 0.0
    %2567 = vmatpush1.msra.mxu0 %v2549
    %2568 = vmatprep.subr.mxu0 0.0
    %2569 = vmatpush1.msra.mxu0 %v2551
    %2570 = vmatprep.subr.mxu0 0.0
    %2571 = vmatpush1.msra.mxu0 %v2553
    %2572 = vmatprep.subr.mxu0 0.0
    %2573 = vmatpush1.msra.mxu0 0.0
    %2574 = vmatprep.subr.mxu0 0.0
    %2575 = vmatpush1.msra.mxu0 0.0
    %2576 = vmatprep.subr.mxu0 0.0
    %2577 = vmatpush1.msra.mxu0 0.0
    %2578 = vmatprep.subr.mxu0 0.0
    %2579 = vmatpush1.msra.mxu0 0.0
    %2580 = vmatprep.subr.mxu0 0.0
    %2581 = vmatpush1.msra.mxu0 0.0
    %2582 = vmatprep.subr.mxu0 0.0
    %2583 = vmatpush1.msra.mxu0 0.0
    %2584 = vmatprep.subr.mxu0 0.0
    %2585 = vmatpush1.msra.mxu0 0.0
    %2586 = vmatprep.subr.mxu0 0.0
    %2587 = vmatpush1.msra.mxu0 0.0
    %2588 = vmatprep.subr.mxu0 0.0
    %2589 = vmatpush1.msra.mxu0 0.0
    %2590 = vmatprep.subr.mxu0 0.0
    %2591 = vmatpush1.msra.mxu0 0.0
    %2592 = vmatprep.subr.mxu0 0.0
    %2593 = vmatpush1.msra.mxu0 0.0
    %2594 = vmatprep.subr.mxu0 0.0
    %2595 = vmatpush1.msra.mxu0 0.0
    %2596 = vmatprep.subr.mxu0 0.0
    %2597 = vmatpush1.msra.mxu0 0.0
    %2598 = vmatprep.subr.mxu0 0.0
    %2599 = vmatpush1.msra.mxu0 0.0
    %2600 = vmatprep.subr.mxu0 0.0
    %2601 = vmatpush1.msra.mxu0 0.0
    %2602 = vmatprep.subr.mxu0 0.0
    %2603 = vmatpush1.msra.mxu0 0.0
    %2604 = vmatprep.subr.mxu0 0.0
    %2605 = vmatpush1.msra.mxu0 0.0
    %2606 = vmatprep.subr.mxu0 0.0
    %2607 = vmatpush1.msra.mxu0 0.0
    %2608 = vmatprep.subr.mxu0 0.0
    %2609 = vmatpush1.msra.mxu0 0.0
    %2610 = vmatprep.subr.mxu0 0.0
    %2611 = vmatpush1.msra.mxu0 0.0
    %2612 = vmatprep.subr.mxu0 0.0
    %2613 = vmatpush1.msra.mxu0 0.0
    %2614 = vmatprep.subr.mxu0 0.0
    %2615 = vmatpush1.msra.mxu0 0.0
    %2616 = vmatprep.subr.mxu0 0.0
    %2617 = vmatpush1.msra.mxu0 0.0
    %2618 = vmatprep.subr.mxu0 0.0
    %2619 = vmatpush1.msra.mxu0 0.0
    %2620 = vmatprep.subr.mxu0 0.0
    %2621 = vmatpush1.msra.mxu0 0.0
    %2622 = vmatprep.subr.mxu0 0.0
    %2623 = vmatpush1.msra.mxu0 0.0
    %2624 = vmatprep.subr.mxu0 0.0
    %2625 = vmatpush1.msra.mxu0 0.0
    %2626 = vmatprep.subr.mxu0 0.0
    %2627 = vmatpush1.msra.mxu0 0.0
    %2628 = vmatprep.mubr.f32.mxu0 0.0
    %2629 = vmatmul.mubr.f32.gmra.mrb[0].mxu0 %v2559
    %v2630 = vpop.f32.mrb[0].mxu0
    %v2631 = vadd.f32 0.0, %v2630
    %v2632 = vpop.f32.mrb[0].mxu0
    %2633 = vmatprep.mubr.f32.mxu0 0.0
    %2634 = vmatmul.mubr.f32.gmra.mrb[0].mxu0 %v2562
    %v2635 = vpop.f32.mrb[0].mxu0
    %v2636 = vadd.f32 0.0, %v2635
    %v2637 = vpop.f32.mrb[0].mxu0
    %2638 = vdwg.mxu0
    %v2640 = vsel %vm456, %v2631, 0
    %v2643 = vsel %vm456, %v2636, 0
    %2645 = vmatprep.subr.mxu0 0.0
    %2646 = vmatpush1.msra.mxu0 %v1838
    %2647 = vmatprep.subr.mxu0 0.0
    %2648 = vmatpush1.msra.mxu0 0.0
    %2649 = vmatprep.subr.mxu0 0.0
    %2650 = vmatpush1.msra.mxu0 0.0
    %2651 = vmatprep.subr.mxu0 0.0
    %2652 = vmatpush1.msra.mxu0 0.0
    %2653 = vmatprep.subr.mxu0 0.0
    %2654 = vmatpush1.msra.mxu0 0.0
    %2655 = vmatprep.subr.mxu0 0.0
    %2656 = vmatpush1.msra.mxu0 0.0
    %2657 = vmatprep.subr.mxu0 0.0
    %2658 = vmatpush1.msra.mxu0 0.0
    %2659 = vmatprep.subr.mxu0 0.0
    %2660 = vmatpush1.msra.mxu0 0.0
    %2661 = vmatprep.subr.mxu0 0.0
    %2662 = vmatpush1.msra.mxu0 0.0
    %2663 = vmatprep.subr.mxu0 0.0
    %2664 = vmatpush1.msra.mxu0 0.0
    %2665 = vmatprep.subr.mxu0 0.0
    %2666 = vmatpush1.msra.mxu0 0.0
    %2667 = vmatprep.subr.mxu0 0.0
    %2668 = vmatpush1.msra.mxu0 0.0
    %2669 = vmatprep.subr.mxu0 0.0
    %2670 = vmatpush1.msra.mxu0 0.0
    %2671 = vmatprep.subr.mxu0 0.0
    %2672 = vmatpush1.msra.mxu0 0.0
    %2673 = vmatprep.subr.mxu0 0.0
    %2674 = vmatpush1.msra.mxu0 0.0
    %2675 = vmatprep.subr.mxu0 0.0
    %2676 = vmatpush1.msra.mxu0 0.0
    %2677 = vmatprep.subr.mxu0 0.0
    %2678 = vmatpush1.msra.mxu0 0.0
    %2679 = vmatprep.subr.mxu0 0.0
    %2680 = vmatpush1.msra.mxu0 0.0
    %2681 = vmatprep.subr.mxu0 0.0
    %2682 = vmatpush1.msra.mxu0 0.0
    %2683 = vmatprep.subr.mxu0 0.0
    %2684 = vmatpush1.msra.mxu0 0.0
    %2685 = vmatprep.subr.mxu0 0.0
    %2686 = vmatpush1.msra.mxu0 0.0
    %2687 = vmatprep.subr.mxu0 0.0
    %2688 = vmatpush1.msra.mxu0 0.0
    %2689 = vmatprep.subr.mxu0 0.0
    %2690 = vmatpush1.msra.mxu0 0.0
    %2691 = vmatprep.subr.mxu0 0.0
    %2692 = vmatpush1.msra.mxu0 0.0
    %2693 = vmatprep.subr.mxu0 0.0
    %2694 = vmatpush1.msra.mxu0 0.0
    %2695 = vmatprep.subr.mxu0 0.0
    %2696 = vmatpush1.msra.mxu0 0.0
    %2697 = vmatprep.subr.mxu0 0.0
    %2698 = vmatpush1.msra.mxu0 0.0
    %2699 = vmatprep.subr.mxu0 0.0
    %2700 = vmatpush1.msra.mxu0 0.0
    %2701 = vmatprep.subr.mxu0 0.0
    %2702 = vmatpush1.msra.mxu0 0.0
    %2703 = vmatprep.subr.mxu0 0.0
    %2704 = vmatpush1.msra.mxu0 0.0
    %2705 = vmatprep.subr.mxu0 0.0
    %2706 = vmatpush1.msra.mxu0 0.0
    %2707 = vmatprep.subr.mxu0 0.0
    %2708 = vmatpush1.msra.mxu0 0.0
    %2709 = vmatprep.mubr.f32.mxu0 0.0
    %2710 = vmatmul.mubr.f32.gmra.mrb[0].mxu0 %v2640
    %v2711 = vpop.f32.mrb[0].mxu0
    %v2712 = vadd.f32 0.0, %v2711
    %v2713 = vpop.f32.mrb[0].mxu0
    %2714 = vmatprep.mubr.f32.mxu0 0.0
    %2715 = vmatmul.mubr.f32.gmra.mrb[0].mxu0 %v2643
    %v2716 = vpop.f32.mrb[0].mxu0
    %v2717 = vadd.f32 0.0, %v2716
    %v2718 = vpop.f32.mrb[0].mxu0
    %2719 = vdwg.mxu0
    %v2720 = vadd.f32 %v2417, %v2712
    %v2721 = vadd.f32 %v2422, %v2717
    %2722 = vrot.lane.b32.xlu0 %v1828, 104
    %v2723 = vpop.permute.xlu0 %2722
    %2724 = vrot.lane.b32.xlu0 %v1833, 104
    %v2725 = vpop.permute.xlu0 %2724
    %2726 = vrot.lane.b32.xlu0 %v1726, 104
    %v2727 = vpop.permute.xlu0 %2726
    %2728 = vrot.lane.b32.xlu0 %v1731, 104
    %v2729 = vpop.permute.xlu0 %2728
    %2730 = vrot.lane.b32.xlu0 %v1736, 104
    %v2731 = vpop.permute.xlu0 %2730
    %2732 = vrot.lane.b32.xlu0 %v1741, 104
    %v2733 = vpop.permute.xlu0 %2732
    %v2734 = vsel %vm456, %v2723, 0
    %v2736 = vsel %vm456, %v2725, 0
    %v2738 = vsel %vm456, %v2727, 0
    %v2740 = vsel %vm456, %v2729, 0
    %v2742 = vsel %vm456, %v2731, 0
    %v2744 = vsel %vm456, %v2733, 0
    %2746 = vmatprep.subr.mxu0 0.0
    %2747 = vmatpush1.xpose.msra.mxu0 %v2738
    %2748 = vmatprep.subr.mxu0 0.0
    %2749 = vmatpush1.xpose.msra.mxu0 %v2740
    %2750 = vmatprep.subr.mxu0 0.0
    %2751 = vmatpush1.xpose.msra.mxu0 %v2742
    %2752 = vmatprep.subr.mxu0 0.0
    %2753 = vmatpush1.xpose.msra.mxu0 %v2744
    %2754 = vmatprep.subr.mxu0 0.0
    %2755 = vmatpush1.xpose.msra.mxu0 0.0
    %2756 = vmatprep.subr.mxu0 0.0
    %2757 = vmatpush1.xpose.msra.mxu0 0.0
    %2758 = vmatprep.subr.mxu0 0.0
    %2759 = vmatpush1.xpose.msra.mxu0 0.0
    %2760 = vmatprep.subr.mxu0 0.0
    %2761 = vmatpush1.xpose.msra.mxu0 0.0
    %2762 = vmatprep.subr.mxu0 0.0
    %2763 = vmatpush1.xpose.msra.mxu0 0.0
    %2764 = vmatprep.subr.mxu0 0.0
    %2765 = vmatpush1.xpose.msra.mxu0 0.0
    %2766 = vmatprep.subr.mxu0 0.0
    %2767 = vmatpush1.xpose.msra.mxu0 0.0
    %2768 = vmatprep.subr.mxu0 0.0
    %2769 = vmatpush1.xpose.msra.mxu0 0.0
    %2770 = vmatprep.subr.mxu0 0.0
    %2771 = vmatpush1.xpose.msra.mxu0 0.0
    %2772 = vmatprep.subr.mxu0 0.0
    %2773 = vmatpush1.xpose.msra.mxu0 0.0
    %2774 = vmatprep.subr.mxu0 0.0
    %2775 = vmatpush1.xpose.msra.mxu0 0.0
    %2776 = vmatprep.subr.mxu0 0.0
    %2777 = vmatpush1.xpose.msra.mxu0 0.0
    %2778 = vmatprep.subr.mxu0 0.0
    %2779 = vmatpush1.xpose.msra.mxu0 0.0
    %2780 = vmatprep.subr.mxu0 0.0
    %2781 = vmatpush1.xpose.msra.mxu0 0.0
    %2782 = vmatprep.subr.mxu0 0.0
    %2783 = vmatpush1.xpose.msra.mxu0 0.0
    %2784 = vmatprep.subr.mxu0 0.0
    %2785 = vmatpush1.xpose.msra.mxu0 0.0
    %2786 = vmatprep.subr.mxu0 0.0
    %2787 = vmatpush1.xpose.msra.mxu0 0.0
    %2788 = vmatprep.subr.mxu0 0.0
    %2789 = vmatpush1.xpose.msra.mxu0 0.0
    %2790 = vmatprep.subr.mxu0 0.0
    %2791 = vmatpush1.xpose.msra.mxu0 0.0
    %2792 = vmatprep.subr.mxu0 0.0
    %2793 = vmatpush1.xpose.msra.mxu0 0.0
    %2794 = vmatprep.subr.mxu0 0.0
    %2795 = vmatpush1.xpose.msra.mxu0 0.0
    %2796 = vmatprep.subr.mxu0 0.0
    %2797 = vmatpush1.xpose.msra.mxu0 0.0
    %2798 = vmatprep.subr.mxu0 0.0
    %2799 = vmatpush1.xpose.msra.mxu0 0.0
    %2800 = vmatprep.subr.mxu0 0.0
    %2801 = vmatpush1.xpose.msra.mxu0 0.0
    %2802 = vmatprep.subr.mxu0 0.0
    %2803 = vmatpush1.xpose.msra.mxu0 0.0
    %2804 = vmatprep.subr.mxu0 0.0
    %2805 = vmatpush1.xpose.msra.mxu0 0.0
    %2806 = vmatprep.subr.mxu0 0.0
    %2807 = vmatpush1.xpose.msra.mxu0 0.0
    %2808 = vmatprep.subr.mxu0 0.0
    %2809 = vmatpush1.xpose.msra.mxu0 0.0
    %2810 = vmatprep.mubr.f32.mxu0 0.0
    %2811 = vmatmul.mubr.f32.gmra.mrb[0].mxu0 %v2734
    %v2812 = vpop.f32.mrb[0].mxu0
    %v2813 = vadd.f32 %v350, %v2812
    %v2814 = vpop.f32.mrb[0].mxu0
    %2815 = vmatprep.mubr.f32.mxu0 0.0
    %2816 = vmatmul.mubr.f32.gmra.mrb[0].mxu0 %v2736
    %v2817 = vpop.f32.mrb[0].mxu0
    %v2818 = vadd.f32 %v351, %v2817
    %v2819 = vpop.f32.mrb[0].mxu0
    %2820 = vdwg.mxu0
    %v2821 = vsel %vm363, %v2813, -inf
    %2822 = vmax.xlane.f32.xlu0 %v2821
    %v2823 = vpop.xlane.xlu0 %2822
    %v2824 = vsel %vm363, %v2818, -inf
    %2825 = vmax.xlane.f32.xlu0 %v2824
    %v2826 = vpop.xlane.xlu0 %2825
    %v2827 = vsub.f32 %v2813, %v2823
    %v2828 = vsub.f32 %v2818, %v2826
    %v2829 = vmul.f32 %v2827, 1.442695
    %v2830 = vpow.pop %v2829
    %v2831 = vmul.f32 %v2828, 1.442695
    %v2832 = vpow.pop %v2831
    %v2833 = vsel %vm363, %v2830, 0.0
    %2834 = vadd.xlane.f32.xlu0 %v2833
    %v2835 = vpop.xlane.xlu0 %2834
    %v2836 = vsel %vm363, %v2832, 0.0
    %2837 = vadd.xlane.f32.xlu0 %v2836
    %v2838 = vpop.xlane.xlu0 %2837
    %v2839 = vrcp.pop %v2835
    %v2840 = vrcp.pop %v2838
    %v2841 = vmul.f32 %v2830, %v2839
    %v2842 = vmul.f32 %v2832, %v2840
    %2843 = vrot.lane.b32.xlu0 %v1726, 72
    %v2844 = vpop.permute.xlu0 %2843
    %2845 = vrot.lane.b32.xlu0 %v1731, 72
    %v2846 = vpop.permute.xlu0 %2845
    %2847 = vrot.lane.b32.xlu0 %v1736, 72
    %v2848 = vpop.permute.xlu0 %2847
    %2849 = vrot.lane.b32.xlu0 %v1741, 72
    %v2850 = vpop.permute.xlu0 %2849
    %v2856 = vsel %vm363, %v2841, 0
    %v2859 = vsel %vm363, %v2842, 0
    %2861 = vmatprep.subr.mxu0 0.0
    %2862 = vmatpush1.msra.mxu0 %v2844
    %2863 = vmatprep.subr.mxu0 0.0
    %2864 = vmatpush1.msra.mxu0 %v2846
    %2865 = vmatprep.subr.mxu0 0.0
    %2866 = vmatpush1.msra.mxu0 %v2848
    %2867 = vmatprep.subr.mxu0 0.0
    %2868 = vmatpush1.msra.mxu0 %v2850
    %2869 = vmatprep.subr.mxu0 0.0
    %2870 = vmatpush1.msra.mxu0 0.0
    %2871 = vmatprep.subr.mxu0 0.0
    %2872 = vmatpush1.msra.mxu0 0.0
    %2873 = vmatprep.subr.mxu0 0.0
    %2874 = vmatpush1.msra.mxu0 0.0
    %2875 = vmatprep.subr.mxu0 0.0
    %2876 = vmatpush1.msra.mxu0 0.0
    %2877 = vmatprep.subr.mxu0 0.0
    %2878 = vmatpush1.msra.mxu0 0.0
    %2879 = vmatprep.subr.mxu0 0.0
    %2880 = vmatpush1.msra.mxu0 0.0
    %2881 = vmatprep.subr.mxu0 0.0
    %2882 = vmatpush1.msra.mxu0 0.0
    %2883 = vmatprep.subr.mxu0 0.0
    %2884 = vmatpush1.msra.mxu0 0.0
    %2885 = vmatprep.subr.mxu0 0.0
    %2886 = vmatpush1.msra.mxu0 0.0
    %2887 = vmatprep.subr.mxu0 0.0
    %2888 = vmatpush1.msra.mxu0 0.0
    %2889 = vmatprep.subr.mxu0 0.0
    %2890 = vmatpush1.msra.mxu0 0.0
    %2891 = vmatprep.subr.mxu0 0.0
    %2892 = vmatpush1.msra.mxu0 0.0
    %2893 = vmatprep.subr.mxu0 0.0
    %2894 = vmatpush1.msra.mxu0 0.0
    %2895 = vmatprep.subr.mxu0 0.0
    %2896 = vmatpush1.msra.mxu0 0.0
    %2897 = vmatprep.subr.mxu0 0.0
    %2898 = vmatpush1.msra.mxu0 0.0
    %2899 = vmatprep.subr.mxu0 0.0
    %2900 = vmatpush1.msra.mxu0 0.0
    %2901 = vmatprep.subr.mxu0 0.0
    %2902 = vmatpush1.msra.mxu0 0.0
    %2903 = vmatprep.subr.mxu0 0.0
    %2904 = vmatpush1.msra.mxu0 0.0
    %2905 = vmatprep.subr.mxu0 0.0
    %2906 = vmatpush1.msra.mxu0 0.0
    %2907 = vmatprep.subr.mxu0 0.0
    %2908 = vmatpush1.msra.mxu0 0.0
    %2909 = vmatprep.subr.mxu0 0.0
    %2910 = vmatpush1.msra.mxu0 0.0
    %2911 = vmatprep.subr.mxu0 0.0
    %2912 = vmatpush1.msra.mxu0 0.0
    %2913 = vmatprep.subr.mxu0 0.0
    %2914 = vmatpush1.msra.mxu0 0.0
    %2915 = vmatprep.subr.mxu0 0.0
    %2916 = vmatpush1.msra.mxu0 0.0
    %2917 = vmatprep.subr.mxu0 0.0
    %2918 = vmatpush1.msra.mxu0 0.0
    %2919 = vmatprep.subr.mxu0 0.0
    %2920 = vmatpush1.msra.mxu0 0.0
    %2921 = vmatprep.subr.mxu0 0.0
    %2922 = vmatpush1.msra.mxu0 0.0
    %2923 = vmatprep.subr.mxu0 0.0
    %2924 = vmatpush1.msra.mxu0 0.0
    %2925 = vmatprep.mubr.f32.mxu0 0.0
    %2926 = vmatmul.mubr.f32.gmra.mrb[0].mxu0 %v2856
    %v2927 = vpop.f32.mrb[0].mxu0
    %v2928 = vadd.f32 0.0, %v2927
    %v2929 = vpop.f32.mrb[0].mxu0
    %2930 = vmatprep.mubr.f32.mxu0 0.0
    %2931 = vmatmul.mubr.f32.gmra.mrb[0].mxu0 %v2859
    %v2932 = vpop.f32.mrb[0].mxu0
    %v2933 = vadd.f32 0.0, %v2932
    %v2934 = vpop.f32.mrb[0].mxu0
    %2935 = vdwg.mxu0
    %v2937 = vsel %vm456, %v2928, 0
    %v2940 = vsel %vm456, %v2933, 0
    %2942 = vmatprep.subr.mxu0 0.0
    %2943 = vmatpush1.msra.mxu0 %v1839
    %2944 = vmatprep.subr.mxu0 0.0
    %2945 = vmatpush1.msra.mxu0 0.0
    %2946 = vmatprep.subr.mxu0 0.0
    %2947 = vmatpush1.msra.mxu0 0.0
    %2948 = vmatprep.subr.mxu0 0.0
    %2949 = vmatpush1.msra.mxu0 0.0
    %2950 = vmatprep.subr.mxu0 0.0
    %2951 = vmatpush1.msra.mxu0 0.0
    %2952 = vmatprep.subr.mxu0 0.0
    %2953 = vmatpush1.msra.mxu0 0.0
    %2954 = vmatprep.subr.mxu0 0.0
    %2955 = vmatpush1.msra.mxu0 0.0
    %2956 = vmatprep.subr.mxu0 0.0
    %2957 = vmatpush1.msra.mxu0 0.0
    %2958 = vmatprep.subr.mxu0 0.0
    %2959 = vmatpush1.msra.mxu0 0.0
    %2960 = vmatprep.subr.mxu0 0.0
    %2961 = vmatpush1.msra.mxu0 0.0
    %2962 = vmatprep.subr.mxu0 0.0
    %2963 = vmatpush1.msra.mxu0 0.0
    %2964 = vmatprep.subr.mxu0 0.0
    %2965 = vmatpush1.msra.mxu0 0.0
    %2966 = vmatprep.subr.mxu0 0.0
    %2967 = vmatpush1.msra.mxu0 0.0
    %2968 = vmatprep.subr.mxu0 0.0
    %2969 = vmatpush1.msra.mxu0 0.0
    %2970 = vmatprep.subr.mxu0 0.0
    %2971 = vmatpush1.msra.mxu0 0.0
    %2972 = vmatprep.subr.mxu0 0.0
    %2973 = vmatpush1.msra.mxu0 0.0
    %2974 = vmatprep.subr.mxu0 0.0
    %2975 = vmatpush1.msra.mxu0 0.0
    %2976 = vmatprep.subr.mxu0 0.0
    %2977 = vmatpush1.msra.mxu0 0.0
    %2978 = vmatprep.subr.mxu0 0.0
    %2979 = vmatpush1.msra.mxu0 0.0
    %2980 = vmatprep.subr.mxu0 0.0
    %2981 = vmatpush1.msra.mxu0 0.0
    %2982 = vmatprep.subr.mxu0 0.0
    %2983 = vmatpush1.msra.mxu0 0.0
    %2984 = vmatprep.subr.mxu0 0.0
    %2985 = vmatpush1.msra.mxu0 0.0
    %2986 = vmatprep.subr.mxu0 0.0
    %2987 = vmatpush1.msra.mxu0 0.0
    %2988 = vmatprep.subr.mxu0 0.0
    %2989 = vmatpush1.msra.mxu0 0.0
    %2990 = vmatprep.subr.mxu0 0.0
    %2991 = vmatpush1.msra.mxu0 0.0
    %2992 = vmatprep.subr.mxu0 0.0
    %2993 = vmatpush1.msra.mxu0 0.0
    %2994 = vmatprep.subr.mxu0 0.0
    %2995 = vmatpush1.msra.mxu0 0.0
    %2996 = vmatprep.subr.mxu0 0.0
    %2997 = vmatpush1.msra.mxu0 0.0
    %2998 = vmatprep.subr.mxu0 0.0
    %2999 = vmatpush1.msra.mxu0 0.0
    %3000 = vmatprep.subr.mxu0 0.0
    %3001 = vmatpush1.msra.mxu0 0.0
    %3002 = vmatprep.subr.mxu0 0.0
    %3003 = vmatpush1.msra.mxu0 0.0
    %3004 = vmatprep.subr.mxu0 0.0
    %3005 = vmatpush1.msra.mxu0 0.0
    %3006 = vmatprep.mubr.f32.mxu0 0.0
    %3007 = vmatmul.mubr.f32.gmra.mrb[0].mxu0 %v2937
    %v3008 = vpop.f32.mrb[0].mxu0
    %v3009 = vadd.f32 0.0, %v3008
    %v3010 = vpop.f32.mrb[0].mxu0
    %3011 = vmatprep.mubr.f32.mxu0 0.0
    %3012 = vmatmul.mubr.f32.gmra.mrb[0].mxu0 %v2940
    %v3013 = vpop.f32.mrb[0].mxu0
    %v3014 = vadd.f32 0.0, %v3013
    %v3015 = vpop.f32.mrb[0].mxu0
    %3016 = vdwg.mxu0
    %v3017 = vadd.f32 %v2720, %v3009
    %v3018 = vadd.f32 %v2721, %v3014
    %v3020 = vlaneseq
    %v3021 = vshrl.u32 %v3020, 7
    %v3022 = vsub.s32 0, %v3021
    %v3023 = vrot.slane %v1840, %v3022
    %v3025 = vadd.f32 %v3017, %v3023
    %v3026 = vadd.f32 %v3018, %v3023
    %v3027 = vld [vmem:[%s18] sm:$0x1]
    %v3028 = vld [vmem:[#allocation12] sm:$0x1]
    %v3029 = vadd.f32 %v3025, %v1630
    %v3030 = vadd.f32 %v3026, %v1631
    %v3031 = vsel %vm363, %v3029, 0.0
    %3032 = vadd.xlane.f32.xlu0 %v3031
    %v3033 = vpop.xlane.xlu0 %3032
    %v3034 = vsel %vm363, %v3030, 0.0
    %3035 = vadd.xlane.f32.xlu0 %v3034
    %v3036 = vpop.xlane.xlu0 %3035
    %v3037 = vmul.f32 %v3033, %v1595
    %v3038 = vmul.f32 %v3036, %v1595
    %v3039 = vsub.f32 %v3029, %v3037
    %v3040 = vsub.f32 %v3030, %v3038
    %v3041 = vmul.f32 %v3039, %v3039
    %v3042 = vmul.f32 %v3040, %v3040
    %v3043 = vsel %vm363, %v3041, 0.0
    %3044 = vadd.xlane.f32.xlu0 %v3043
    %v3045 = vpop.xlane.xlu0 %3044
    %v3046 = vsel %vm363, %v3042, 0.0
    %3047 = vadd.xlane.f32.xlu0 %v3046
    %v3048 = vpop.xlane.xlu0 %3047
    %v3049 = vmul.f32 %v3045, %v1595
    %v3050 = vmul.f32 %v3048, %v1595
    %v3051 = vadd.f32 %v3049, 1e-05
    %v3052 = vadd.f32 %v3050, 1e-05
    %v3053 = vrsqrt.pop %v3051
    %v3054 = vrsqrt.pop %v3052
    %v3055 = vmul.f32 %v3039, %v3053
    %v3056 = vmul.f32 %v3040, %v3054
    %v3058 = vlaneseq
    %v3059 = vshrl.u32 %v3058, 7
    %v3060 = vsub.s32 0, %v3059
    %v3061 = vrot.slane %v3027, %v3060
    %v3063 = vmul.f32 %v3055, %v3061
    %v3064 = vmul.f32 %v3056, %v3061
    %v3066 = vlaneseq
    %v3067 = vshrl.u32 %v3066, 7
    %v3068 = vsub.s32 0, %v3067
    %v3069 = vrot.slane %v3028, %v3068
    %v3071 = vadd.f32 %v3063, %v3069
    %v3072 = vadd.f32 %v3064, %v3069
    %v3073 = vld [vmem:[%s22] sm:$0xff]
    %v3074 = vld [vmem:[%s22 + $0x8] sm:$0xff]
    %v3075 = vld [vmem:[%s22 + $0x10] sm:$0xff]
    %v3076 = vld [vmem:[%s22 + $0x18] sm:$0xff]
    %v3077 = vld [vmem:[#allocation15] sm:$0x1]
    %v3079 = vlaneseq
    %v3080 = vshrl.u32 %v3079, 7
    %v3081 = vsub.s32 0, %v3080
    %v3082 = vrot.slane %v3077, %v3081
    %v3085 = vsel %vm363, %v3071, 0
    %v3088 = vsel %vm363, %v3072, 0
    %3090 = vmatprep.subr.mxu0 0.0
    %3091 = vmatpush1.msra.mxu0 %v3073
    %3092 = vmatprep.subr.mxu0 0.0
    %3093 = vmatpush1.msra.mxu0 %v3074
    %3094 = vmatprep.subr.mxu0 0.0
    %3095 = vmatpush1.msra.mxu0 %v3075
    %3096 = vmatprep.subr.mxu0 0.0
    %3097 = vmatpush1.msra.mxu0 %v3076
    %3098 = vmatprep.subr.mxu0 0.0
    %3099 = vmatpush1.msra.mxu0 0.0
    %3100 = vmatprep.subr.mxu0 0.0
    %3101 = vmatpush1.msra.mxu0 0.0
    %3102 = vmatprep.subr.mxu0 0.0
    %3103 = vmatpush1.msra.mxu0 0.0
    %3104 = vmatprep.subr.mxu0 0.0
    %3105 = vmatpush1.msra.mxu0 0.0
    %3106 = vmatprep.subr.mxu0 0.0
    %3107 = vmatpush1.msra.mxu0 0.0
    %3108 = vmatprep.subr.mxu0 0.0
    %3109 = vmatpush1.msra.mxu0 0.0
    %3110 = vmatprep.subr.mxu0 0.0
    %3111 = vmatpush1.msra.mxu0 0.0
    %3112 = vmatprep.subr.mxu0 0.0
    %3113 = vmatpush1.msra.mxu0 0.0
    %3114 = vmatprep.subr.mxu0 0.0
    %3115 = vmatpush1.msra.mxu0 0.0
    %3116 = vmatprep.subr.mxu0 0.0
    %3117 = vmatpush1.msra.mxu0 0.0
    %3118 = vmatprep.subr.mxu0 0.0
    %3119 = vmatpush1.msra.mxu0 0.0
    %3120 = vmatprep.subr.mxu0 0.0
    %3121 = vmatpush1.msra.mxu0 0.0
    %3122 = vmatprep.subr.mxu0 0.0
    %3123 = vmatpush1.msra.mxu0 0.0
    %3124 = vmatprep.subr.mxu0 0.0
    %3125 = vmatpush1.msra.mxu0 0.0
    %3126 = vmatprep.subr.mxu0 0.0
    %3127 = vmatpush1.msra.mxu0 0.0
    %3128 = vmatprep.subr.mxu0 0.0
    %3129 = vmatpush1.msra.mxu0 0.0
    %3130 = vmatprep.subr.mxu0 0.0
    %3131 = vmatpush1.msra.mxu0 0.0
    %3132 = vmatprep.subr.mxu0 0.0
    %3133 = vmatpush1.msra.mxu0 0.0
    %3134 = vmatprep.subr.mxu0 0.0
    %3135 = vmatpush1.msra.mxu0 0.0
    %3136 = vmatprep.subr.mxu0 0.0
    %3137 = vmatpush1.msra.mxu0 0.0
    %3138 = vmatprep.subr.mxu0 0.0
    %3139 = vmatpush1.msra.mxu0 0.0
    %3140 = vmatprep.subr.mxu0 0.0
    %3141 = vmatpush1.msra.mxu0 0.0
    %3142 = vmatprep.subr.mxu0 0.0
    %3143 = vmatpush1.msra.mxu0 0.0
    %3144 = vmatprep.subr.mxu0 0.0
    %3145 = vmatpush1.msra.mxu0 0.0
    %3146 = vmatprep.subr.mxu0 0.0
    %3147 = vmatpush1.msra.mxu0 0.0
    %3148 = vmatprep.subr.mxu0 0.0
    %3149 = vmatpush1.msra.mxu0 0.0
    %3150 = vmatprep.subr.mxu0 0.0
    %3151 = vmatpush1.msra.mxu0 0.0
    %3152 = vmatprep.subr.mxu0 0.0
    %3153 = vmatpush1.msra.mxu0 0.0
    %3154 = vmatprep.mubr.f32.mxu0 0.0
    %3155 = vmatmul.mubr.f32.gmra.mrb[0].mxu0 %v3085
    %v3156 = vpop.f32.mrb[0].mxu0
    %v3157 = vadd.f32 %v3082, %v3156
    %v3158 = vpop.f32.mrb[0].mxu0
    %3159 = vmatprep.mubr.f32.mxu0 0.0
    %3160 = vmatmul.mubr.f32.gmra.mrb[0].mxu0 %v3088
    %v3161 = vpop.f32.mrb[0].mxu0
    %v3162 = vadd.f32 %v3082, %v3161
    %v3163 = vpop.f32.mrb[0].mxu0
    %3164 = vdwg.mxu0
    %v3165 = vmax.f32 %v3157, 0.0
    %v3166 = vmax.f32 %v3162, 0.0
    %v3167 = vld [vmem:[%s24] sm:$0xff]
    %v3168 = vld [vmem:[%s24 + $0x8] sm:$0xff]
    %v3169 = vld [vmem:[%s24 + $0x10] sm:$0xff]
    %v3170 = vld [vmem:[%s24 + $0x18] sm:$0xff]
    %v3171 = vld [vmem:[%s24 + $0x20] sm:$0xff]
    %v3172 = vld [vmem:[%s24 + $0x28] sm:$0xff]
    %v3173 = vld [vmem:[%s24 + $0x30] sm:$0xff]
    %v3174 = vld [vmem:[%s24 + $0x38] sm:$0xff]
    %v3175 = vld [vmem:[#allocation16] sm:$0x1]
    %v3177 = vlaneseq
    %v3178 = vshrl.u32 %v3177, 7
    %v3179 = vsub.s32 0, %v3178
    %v3180 = vrot.slane %v3175, %v3179
    %vm3182 = vcmask 523264
    %v3184 = vsel %vm3182, %v3165, 0
    %v3187 = vsel %vm3182, %v3166, 0
    %3189 = vmatprep.subr.mxu0 0.0
    %3190 = vmatpush1.msra.mxu0 %v3167
    %3191 = vmatprep.subr.mxu0 0.0
    %3192 = vmatpush1.msra.mxu0 %v3168
    %3193 = vmatprep.subr.mxu0 0.0
    %3194 = vmatpush1.msra.mxu0 %v3169
    %3195 = vmatprep.subr.mxu0 0.0
    %3196 = vmatpush1.msra.mxu0 %v3170
    %3197 = vmatprep.subr.mxu0 0.0
    %3198 = vmatpush1.msra.mxu0 %v3171
    %3199 = vmatprep.subr.mxu0 0.0
    %3200 = vmatpush1.msra.mxu0 %v3172
    %3201 = vmatprep.subr.mxu0 0.0
    %3202 = vmatpush1.msra.mxu0 %v3173
    %3203 = vmatprep.subr.mxu0 0.0
    %3204 = vmatpush1.msra.mxu0 %v3174
    %3205 = vmatprep.subr.mxu0 0.0
    %3206 = vmatpush1.msra.mxu0 0.0
    %3207 = vmatprep.subr.mxu0 0.0
    %3208 = vmatpush1.msra.mxu0 0.0
    %3209 = vmatprep.subr.mxu0 0.0
    %3210 = vmatpush1.msra.mxu0 0.0
    %3211 = vmatprep.subr.mxu0 0.0
    %3212 = vmatpush1.msra.mxu0 0.0
    %3213 = vmatprep.subr.mxu0 0.0
    %3214 = vmatpush1.msra.mxu0 0.0
    %3215 = vmatprep.subr.mxu0 0.0
    %3216 = vmatpush1.msra.mxu0 0.0
    %3217 = vmatprep.subr.mxu0 0.0
    %3218 = vmatpush1.msra.mxu0 0.0
    %3219 = vmatprep.subr.mxu0 0.0
    %3220 = vmatpush1.msra.mxu0 0.0
    %3221 = vmatprep.subr.mxu0 0.0
    %3222 = vmatpush1.msra.mxu0 0.0
    %3223 = vmatprep.subr.mxu0 0.0
    %3224 = vmatpush1.msra.mxu0 0.0
    %3225 = vmatprep.subr.mxu0 0.0
    %3226 = vmatpush1.msra.mxu0 0.0
    %3227 = vmatprep.subr.mxu0 0.0
    %3228 = vmatpush1.msra.mxu0 0.0
    %3229 = vmatprep.subr.mxu0 0.0
    %3230 = vmatpush1.msra.mxu0 0.0
    %3231 = vmatprep.subr.mxu0 0.0
    %3232 = vmatpush1.msra.mxu0 0.0
    %3233 = vmatprep.subr.mxu0 0.0
    %3234 = vmatpush1.msra.mxu0 0.0
    %3235 = vmatprep.subr.mxu0 0.0
    %3236 = vmatpush1.msra.mxu0 0.0
    %3237 = vmatprep.subr.mxu0 0.0
    %3238 = vmatpush1.msra.mxu0 0.0
    %3239 = vmatprep.subr.mxu0 0.0
    %3240 = vmatpush1.msra.mxu0 0.0
    %3241 = vmatprep.subr.mxu0 0.0
    %3242 = vmatpush1.msra.mxu0 0.0
    %3243 = vmatprep.subr.mxu0 0.0
    %3244 = vmatpush1.msra.mxu0 0.0
    %3245 = vmatprep.subr.mxu0 0.0
    %3246 = vmatpush1.msra.mxu0 0.0
    %3247 = vmatprep.subr.mxu0 0.0
    %3248 = vmatpush1.msra.mxu0 0.0
    %3249 = vmatprep.subr.mxu0 0.0
    %3250 = vmatpush1.msra.mxu0 0.0
    %3251 = vmatprep.subr.mxu0 0.0
    %3252 = vmatpush1.msra.mxu0 0.0
    %3253 = vmatprep.mubr.f32.mxu0 0.0
    %3254 = vmatmul.mubr.f32.gmra.mrb[0].mxu0 %v3184
    %v3255 = vpop.f32.mrb[0].mxu0
    %v3256 = vadd.f32 %v3180, %v3255
    %v3257 = vpop.f32.mrb[0].mxu0
    %3258 = vmatprep.mubr.f32.mxu0 0.0
    %3259 = vmatmul.mubr.f32.gmra.mrb[0].mxu0 %v3187
    %v3260 = vpop.f32.mrb[0].mxu0
    %v3261 = vadd.f32 %v3180, %v3260
    %v3262 = vpop.f32.mrb[0].mxu0
    %3263 = vdwg.mxu0
    %v3264 = vld [vmem:[%s20] sm:$0x1]
    %v3265 = vld [vmem:[#allocation13] sm:$0x1]
    %v3266 = vadd.f32 %v3256, %v3071
    %v3267 = vadd.f32 %v3261, %v3072
    %v3268 = vsel %vm363, %v3266, 0.0
    %3269 = vadd.xlane.f32.xlu0 %v3268
    %v3270 = vpop.xlane.xlu0 %3269
    %v3271 = vsel %vm363, %v3267, 0.0
    %3272 = vadd.xlane.f32.xlu0 %v3271
    %v3273 = vpop.xlane.xlu0 %3272
    %v3274 = vmul.f32 %v3270, %v1595
    %v3275 = vmul.f32 %v3273, %v1595
    %v3276 = vsub.f32 %v3266, %v3274
    %v3277 = vsub.f32 %v3267, %v3275
    %v3278 = vmul.f32 %v3276, %v3276
    %v3279 = vmul.f32 %v3277, %v3277
    %v3280 = vsel %vm363, %v3278, 0.0
    %3281 = vadd.xlane.f32.xlu0 %v3280
    %v3282 = vpop.xlane.xlu0 %3281
    %v3283 = vsel %vm363, %v3279, 0.0
    %3284 = vadd.xlane.f32.xlu0 %v3283
    %v3285 = vpop.xlane.xlu0 %3284
    %v3286 = vmul.f32 %v3282, %v1595
    %v3287 = vmul.f32 %v3285, %v1595
    %v3288 = vadd.f32 %v3286, 1e-05
    %v3289 = vadd.f32 %v3287, 1e-05
    %v3290 = vrsqrt.pop %v3288
    %v3291 = vrsqrt.pop %v3289
    %v3292 = vmul.f32 %v3276, %v3290
    %v3293 = vmul.f32 %v3277, %v3291
    %v3295 = vlaneseq
    %v3296 = vshrl.u32 %v3295, 7
    %v3297 = vsub.s32 0, %v3296
    %v3298 = vrot.slane %v3264, %v3297
    %v3300 = vmul.f32 %v3292, %v3298
    %v3301 = vmul.f32 %v3293, %v3298
    %v3303 = vlaneseq
    %v3304 = vshrl.u32 %v3303, 7
    %v3305 = vsub.s32 0, %v3304
    %v3306 = vrot.slane %v3265, %v3305
    %v3308 = vadd.f32 %v3300, %v3306
    %v3309 = vadd.f32 %v3301, %v3306
    %s3310 = scalar_lea.vmem %s12, 32
    %v3311 = vld [vmem:[%s3310] sm:$0xff]
    %v3312 = vld [vmem:[%s3310 + $0x8] sm:$0xff]
    %v3313 = vld [vmem:[%s3310 + $0x10] sm:$0xff]
    %v3314 = vld [vmem:[%s3310 + $0x18] sm:$0xff]
    %s3315 = scalar_lea.vmem [#allocation6], 1
    %v3316 = vld [vmem:[%s3315] sm:$0x1]
    %v3318 = vlaneseq
    %v3319 = vshrl.u32 %v3318, 7
    %v3320 = vsub.s32 0, %v3319
    %v3321 = vrot.slane %v3316, %v3320
    %v3324 = vsel %vm363, %v3308, 0
    %v3327 = vsel %vm363, %v3309, 0
    %3329 = vmatprep.subr.mxu0 0.0
    %3330 = vmatpush1.msra.mxu0 %v3311
    %3331 = vmatprep.subr.mxu0 0.0
    %3332 = vmatpush1.msra.mxu0 %v3312
    %3333 = vmatprep.subr.mxu0 0.0
    %3334 = vmatpush1.msra.mxu0 %v3313
    %3335 = vmatprep.subr.mxu0 0.0
    %3336 = vmatpush1.msra.mxu0 %v3314
    %3337 = vmatprep.subr.mxu0 0.0
    %3338 = vmatpush1.msra.mxu0 0.0
    %3339 = vmatprep.subr.mxu0 0.0
    %3340 = vmatpush1.msra.mxu0 0.0
    %3341 = vmatprep.subr.mxu0 0.0
    %3342 = vmatpush1.msra.mxu0 0.0
    %3343 = vmatprep.subr.mxu0 0.0
    %3344 = vmatpush1.msra.mxu0 0.0
    %3345 = vmatprep.subr.mxu0 0.0
    %3346 = vmatpush1.msra.mxu0 0.0
    %3347 = vmatprep.subr.mxu0 0.0
    %3348 = vmatpush1.msra.mxu0 0.0
    %3349 = vmatprep.subr.mxu0 0.0
    %3350 = vmatpush1.msra.mxu0 0.0
    %3351 = vmatprep.subr.mxu0 0.0
    %3352 = vmatpush1.msra.mxu0 0.0
    %3353 = vmatprep.subr.mxu0 0.0
    %3354 = vmatpush1.msra.mxu0 0.0
    %3355 = vmatprep.subr.mxu0 0.0
    %3356 = vmatpush1.msra.mxu0 0.0
    %3357 = vmatprep.subr.mxu0 0.0
    %3358 = vmatpush1.msra.mxu0 0.0
    %3359 = vmatprep.subr.mxu0 0.0
    %3360 = vmatpush1.msra.mxu0 0.0
    %3361 = vmatprep.subr.mxu0 0.0
    %3362 = vmatpush1.msra.mxu0 0.0
    %3363 = vmatprep.subr.mxu0 0.0
    %3364 = vmatpush1.msra.mxu0 0.0
    %3365 = vmatprep.subr.mxu0 0.0
    %3366 = vmatpush1.msra.mxu0 0.0
    %3367 = vmatprep.subr.mxu0 0.0
    %3368 = vmatpush1.msra.mxu0 0.0
    %3369 = vmatprep.subr.mxu0 0.0
    %3370 = vmatpush1.msra.mxu0 0.0
    %3371 = vmatprep.subr.mxu0 0.0
    %3372 = vmatpush1.msra.mxu0 0.0
    %3373 = vmatprep.subr.mxu0 0.0
    %3374 = vmatpush1.msra.mxu0 0.0
    %3375 = vmatprep.subr.mxu0 0.0
    %3376 = vmatpush1.msra.mxu0 0.0
    %3377 = vmatprep.subr.mxu0 0.0
    %3378 = vmatpush1.msra.mxu0 0.0
    %3379 = vmatprep.subr.mxu0 0.0
    %3380 = vmatpush1.msra.mxu0 0.0
    %3381 = vmatprep.subr.mxu0 0.0
    %3382 = vmatpush1.msra.mxu0 0.0
    %3383 = vmatprep.subr.mxu0 0.0
    %3384 = vmatpush1.msra.mxu0 0.0
    %3385 = vmatprep.subr.mxu0 0.0
    %3386 = vmatpush1.msra.mxu0 0.0
    %3387 = vmatprep.subr.mxu0 0.0
    %3388 = vmatpush1.msra.mxu0 0.0
    %3389 = vmatprep.subr.mxu0 0.0
    %3390 = vmatpush1.msra.mxu0 0.0
    %3391 = vmatprep.subr.mxu0 0.0
    %3392 = vmatpush1.msra.mxu0 0.0
    %3393 = vmatprep.mubr.f32.mxu0 0.0
    %3394 = vmatmul.mubr.f32.gmra.mrb[0].mxu0 %v3324
    %v3395 = vpop.f32.mrb[0].mxu0
    %v3396 = vadd.f32 %v3321, %v3395
    %v3397 = vpop.f32.mrb[0].mxu0
    %3398 = vmatprep.mubr.f32.mxu0 0.0
    %3399 = vmatmul.mubr.f32.gmra.mrb[0].mxu0 %v3327
    %v3400 = vpop.f32.mrb[0].mxu0
    %v3401 = vadd.f32 %v3321, %v3400
    %v3402 = vpop.f32.mrb[0].mxu0
    %3403 = vdwg.mxu0
    %s3404 = scalar_lea.vmem %s16, 32
    %v3405 = vld [vmem:[%s3404] sm:$0xff]
    %v3406 = vld [vmem:[%s3404 + $0x8] sm:$0xff]
    %v3407 = vld [vmem:[%s3404 + $0x10] sm:$0xff]
    %v3408 = vld [vmem:[%s3404 + $0x18] sm:$0xff]
    %s3409 = scalar_lea.vmem [#allocation10], 1
    %v3410 = vld [vmem:[%s3409] sm:$0x1]
    %3411 = vrot.lane.b32.xlu0 %v1726, 64
    %v3412 = vpop.permute.xlu0 %3411
    %3413 = vrot.lane.b32.xlu0 %v1731, 64
    %v3414 = vpop.permute.xlu0 %3413
    %3415 = vrot.lane.b32.xlu0 %v1736, 64
    %v3416 = vpop.permute.xlu0 %3415
    %3417 = vrot.lane.b32.xlu0 %v1741, 64
    %v3418 = vpop.permute.xlu0 %3417
    %v3420 = vsel %vm456, %v3396, 0
    %v3423 = vsel %vm456, %v3401, 0
    %v3425 = vsel %vm456, %v3412, 0
    %v3427 = vsel %vm456, %v3414, 0
    %v3429 = vsel %vm456, %v3416, 0
    %v3431 = vsel %vm456, %v3418, 0
    %3433 = vmatprep.subr.mxu0 0.0
    %3434 = vmatpush1.xpose.msra.mxu0 %v3425
    %3435 = vmatprep.subr.mxu0 0.0
    %3436 = vmatpush1.xpose.msra.mxu0 %v3427
    %3437 = vmatprep.subr.mxu0 0.0
    %3438 = vmatpush1.xpose.msra.mxu0 %v3429
    %3439 = vmatprep.subr.mxu0 0.0
    %3440 = vmatpush1.xpose.msra.mxu0 %v3431
    %3441 = vmatprep.subr.mxu0 0.0
    %3442 = vmatpush1.xpose.msra.mxu0 0.0
    %3443 = vmatprep.subr.mxu0 0.0
    %3444 = vmatpush1.xpose.msra.mxu0 0.0
    %3445 = vmatprep.subr.mxu0 0.0
    %3446 = vmatpush1.xpose.msra.mxu0 0.0
    %3447 = vmatprep.subr.mxu0 0.0
    %3448 = vmatpush1.xpose.msra.mxu0 0.0
    %3449 = vmatprep.subr.mxu0 0.0
    %3450 = vmatpush1.xpose.msra.mxu0 0.0
    %3451 = vmatprep.subr.mxu0 0.0
    %3452 = vmatpush1.xpose.msra.mxu0 0.0
    %3453 = vmatprep.subr.mxu0 0.0
    %3454 = vmatpush1.xpose.msra.mxu0 0.0
    %3455 = vmatprep.subr.mxu0 0.0
    %3456 = vmatpush1.xpose.msra.mxu0 0.0
    %3457 = vmatprep.subr.mxu0 0.0
    %3458 = vmatpush1.xpose.msra.mxu0 0.0
    %3459 = vmatprep.subr.mxu0 0.0
    %3460 = vmatpush1.xpose.msra.mxu0 0.0
    %3461 = vmatprep.subr.mxu0 0.0
    %3462 = vmatpush1.xpose.msra.mxu0 0.0
    %3463 = vmatprep.subr.mxu0 0.0
    %3464 = vmatpush1.xpose.msra.mxu0 0.0
    %3465 = vmatprep.subr.mxu0 0.0
    %3466 = vmatpush1.xpose.msra.mxu0 0.0
    %3467 = vmatprep.subr.mxu0 0.0
    %3468 = vmatpush1.xpose.msra.mxu0 0.0
    %3469 = vmatprep.subr.mxu0 0.0
    %3470 = vmatpush1.xpose.msra.mxu0 0.0
    %3471 = vmatprep.subr.mxu0 0.0
    %3472 = vmatpush1.xpose.msra.mxu0 0.0
    %3473 = vmatprep.subr.mxu0 0.0
    %3474 = vmatpush1.xpose.msra.mxu0 0.0
    %3475 = vmatprep.subr.mxu0 0.0
    %3476 = vmatpush1.xpose.msra.mxu0 0.0
    %3477 = vmatprep.subr.mxu0 0.0
    %3478 = vmatpush1.xpose.msra.mxu0 0.0
    %3479 = vmatprep.subr.mxu0 0.0
    %3480 = vmatpush1.xpose.msra.mxu0 0.0
    %3481 = vmatprep.subr.mxu0 0.0
    %3482 = vmatpush1.xpose.msra.mxu0 0.0
    %3483 = vmatprep.subr.mxu0 0.0
    %3484 = vmatpush1.xpose.msra.mxu0 0.0
    %3485 = vmatprep.subr.mxu0 0.0
    %3486 = vmatpush1.xpose.msra.mxu0 0.0
    %3487 = vmatprep.subr.mxu0 0.0
    %3488 = vmatpush1.xpose.msra.mxu0 0.0
    %3489 = vmatprep.subr.mxu0 0.0
    %3490 = vmatpush1.xpose.msra.mxu0 0.0
    %3491 = vmatprep.subr.mxu0 0.0
    %3492 = vmatpush1.xpose.msra.mxu0 0.0
    %3493 = vmatprep.subr.mxu0 0.0
    %3494 = vmatpush1.xpose.msra.mxu0 0.0
    %3495 = vmatprep.subr.mxu0 0.0
    %3496 = vmatpush1.xpose.msra.mxu0 0.0
    %3497 = vmatprep.mubr.f32.mxu0 0.0
    %3498 = vmatmul.mubr.f32.gmra.mrb[0].mxu0 %v3420
    %v3499 = vpop.f32.mrb[0].mxu0
    %v3500 = vadd.f32 %v350, %v3499
    %v3501 = vpop.f32.mrb[0].mxu0
    %3502 = vmatprep.mubr.f32.mxu0 0.0
    %3503 = vmatmul.mubr.f32.gmra.mrb[0].mxu0 %v3423
    %v3504 = vpop.f32.mrb[0].mxu0
    %v3505 = vadd.f32 %v351, %v3504
    %v3506 = vpop.f32.mrb[0].mxu0
    %3507 = vdwg.mxu0
    %v3508 = vsel %vm363, %v3500, -inf
    %3509 = vmax.xlane.f32.xlu0 %v3508
    %v3510 = vpop.xlane.xlu0 %3509
    %v3511 = vsel %vm363, %v3505, -inf
    %3512 = vmax.xlane.f32.xlu0 %v3511
    %v3513 = vpop.xlane.xlu0 %3512
    %v3514 = vsub.f32 %v3500, %v3510
    %v3515 = vsub.f32 %v3505, %v3513
    %v3516 = vmul.f32 %v3514, 1.442695
    %v3517 = vpow.pop %v3516
    %v3518 = vmul.f32 %v3515, 1.442695
    %v3519 = vpow.pop %v3518
    %v3520 = vsel %vm363, %v3517, 0.0
    %3521 = vadd.xlane.f32.xlu0 %v3520
    %v3522 = vpop.xlane.xlu0 %3521
    %v3523 = vsel %vm363, %v3519, 0.0
    %3524 = vadd.xlane.f32.xlu0 %v3523
    %v3525 = vpop.xlane.xlu0 %3524
    %v3526 = vrcp.pop %v3522
    %v3527 = vrcp.pop %v3525
    %v3528 = vmul.f32 %v3517, %v3526
    %v3529 = vmul.f32 %v3519, %v3527
    %3530 = vrot.lane.b32.xlu0 %v1726, 32
    %v3531 = vpop.permute.xlu0 %3530
    %3532 = vrot.lane.b32.xlu0 %v1731, 32
    %v3533 = vpop.permute.xlu0 %3532
    %3534 = vrot.lane.b32.xlu0 %v1736, 32
    %v3535 = vpop.permute.xlu0 %3534
    %3536 = vrot.lane.b32.xlu0 %v1741, 32
    %v3537 = vpop.permute.xlu0 %3536
    %v3543 = vsel %vm363, %v3528, 0
    %v3546 = vsel %vm363, %v3529, 0
    %3548 = vmatprep.subr.mxu0 0.0
    %3549 = vmatpush1.msra.mxu0 %v3531
    %3550 = vmatprep.subr.mxu0 0.0
    %3551 = vmatpush1.msra.mxu0 %v3533
    %3552 = vmatprep.subr.mxu0 0.0
    %3553 = vmatpush1.msra.mxu0 %v3535
    %3554 = vmatprep.subr.mxu0 0.0
    %3555 = vmatpush1.msra.mxu0 %v3537
    %3556 = vmatprep.subr.mxu0 0.0
    %3557 = vmatpush1.msra.mxu0 0.0
    %3558 = vmatprep.subr.mxu0 0.0
    %3559 = vmatpush1.msra.mxu0 0.0
    %3560 = vmatprep.subr.mxu0 0.0
    %3561 = vmatpush1.msra.mxu0 0.0
    %3562 = vmatprep.subr.mxu0 0.0
    %3563 = vmatpush1.msra.mxu0 0.0
    %3564 = vmatprep.subr.mxu0 0.0
    %3565 = vmatpush1.msra.mxu0 0.0
    %3566 = vmatprep.subr.mxu0 0.0
    %3567 = vmatpush1.msra.mxu0 0.0
    %3568 = vmatprep.subr.mxu0 0.0
    %3569 = vmatpush1.msra.mxu0 0.0
    %3570 = vmatprep.subr.mxu0 0.0
    %3571 = vmatpush1.msra.mxu0 0.0
    %3572 = vmatprep.subr.mxu0 0.0
    %3573 = vmatpush1.msra.mxu0 0.0
    %3574 = vmatprep.subr.mxu0 0.0
    %3575 = vmatpush1.msra.mxu0 0.0
    %3576 = vmatprep.subr.mxu0 0.0
    %3577 = vmatpush1.msra.mxu0 0.0
    %3578 = vmatprep.subr.mxu0 0.0
    %3579 = vmatpush1.msra.mxu0 0.0
    %3580 = vmatprep.subr.mxu0 0.0
    %3581 = vmatpush1.msra.mxu0 0.0
    %3582 = vmatprep.subr.mxu0 0.0
    %3583 = vmatpush1.msra.mxu0 0.0
    %3584 = vmatprep.subr.mxu0 0.0
    %3585 = vmatpush1.msra.mxu0 0.0
    %3586 = vmatprep.subr.mxu0 0.0
    %3587 = vmatpush1.msra.mxu0 0.0
    %3588 = vmatprep.subr.mxu0 0.0
    %3589 = vmatpush1.msra.mxu0 0.0
    %3590 = vmatprep.subr.mxu0 0.0
    %3591 = vmatpush1.msra.mxu0 0.0
    %3592 = vmatprep.subr.mxu0 0.0
    %3593 = vmatpush1.msra.mxu0 0.0
    %3594 = vmatprep.subr.mxu0 0.0
    %3595 = vmatpush1.msra.mxu0 0.0
    %3596 = vmatprep.subr.mxu0 0.0
    %3597 = vmatpush1.msra.mxu0 0.0
    %3598 = vmatprep.subr.mxu0 0.0
    %3599 = vmatpush1.msra.mxu0 0.0
    %3600 = vmatprep.subr.mxu0 0.0
    %3601 = vmatpush1.msra.mxu0 0.0
    %3602 = vmatprep.subr.mxu0 0.0
    %3603 = vmatpush1.msra.mxu0 0.0
    %3604 = vmatprep.subr.mxu0 0.0
    %3605 = vmatpush1.msra.mxu0 0.0
    %3606 = vmatprep.subr.mxu0 0.0
    %3607 = vmatpush1.msra.mxu0 0.0
    %3608 = vmatprep.subr.mxu0 0.0
    %3609 = vmatpush1.msra.mxu0 0.0
    %3610 = vmatprep.subr.mxu0 0.0
    %3611 = vmatpush1.msra.mxu0 0.0
    %3612 = vmatprep.mubr.f32.mxu0 0.0
    %3613 = vmatmul.mubr.f32.gmra.mrb[0].mxu0 %v3543
    %v3614 = vpop.f32.mrb[0].mxu0
    %v3615 = vadd.f32 0.0, %v3614
    %v3616 = vpop.f32.mrb[0].mxu0
    %3617 = vmatprep.mubr.f32.mxu0 0.0
    %3618 = vmatmul.mubr.f32.gmra.mrb[0].mxu0 %v3546
    %v3619 = vpop.f32.mrb[0].mxu0
    %v3620 = vadd.f32 0.0, %v3619
    %v3621 = vpop.f32.mrb[0].mxu0
    %3622 = vdwg.mxu0
    %3623 = vrot.lane.b32.xlu0 %v3396, 120
    %v3624 = vpop.permute.xlu0 %3623
    %3625 = vrot.lane.b32.xlu0 %v3401, 120
    %v3626 = vpop.permute.xlu0 %3625
    %3627 = vrot.lane.b32.xlu0 %v1726, 56
    %v3628 = vpop.permute.xlu0 %3627
    %3629 = vrot.lane.b32.xlu0 %v1731, 56
    %v3630 = vpop.permute.xlu0 %3629
    %3631 = vrot.lane.b32.xlu0 %v1736, 56
    %v3632 = vpop.permute.xlu0 %3631
    %3633 = vrot.lane.b32.xlu0 %v1741, 56
    %v3634 = vpop.permute.xlu0 %3633
    %v3635 = vsel %vm456, %v3624, 0
    %v3637 = vsel %vm456, %v3626, 0
    %v3639 = vsel %vm456, %v3628, 0
    %v3641 = vsel %vm456, %v3630, 0
    %v3643 = vsel %vm456, %v3632, 0
    %v3645 = vsel %vm456, %v3634, 0
    %3647 = vmatprep.subr.mxu0 0.0
    %3648 = vmatpush1.xpose.msra.mxu0 %v3639
    %3649 = vmatprep.subr.mxu0 0.0
    %3650 = vmatpush1.xpose.msra.mxu0 %v3641
    %3651 = vmatprep.subr.mxu0 0.0
    %3652 = vmatpush1.xpose.msra.mxu0 %v3643
    %3653 = vmatprep.subr.mxu0 0.0
    %3654 = vmatpush1.xpose.msra.mxu0 %v3645
    %3655 = vmatprep.subr.mxu0 0.0
    %3656 = vmatpush1.xpose.msra.mxu0 0.0
    %3657 = vmatprep.subr.mxu0 0.0
    %3658 = vmatpush1.xpose.msra.mxu0 0.0
    %3659 = vmatprep.subr.mxu0 0.0
    %3660 = vmatpush1.xpose.msra.mxu0 0.0
    %3661 = vmatprep.subr.mxu0 0.0
    %3662 = vmatpush1.xpose.msra.mxu0 0.0
    %3663 = vmatprep.subr.mxu0 0.0
    %3664 = vmatpush1.xpose.msra.mxu0 0.0
    %3665 = vmatprep.subr.mxu0 0.0
    %3666 = vmatpush1.xpose.msra.mxu0 0.0
    %3667 = vmatprep.subr.mxu0 0.0
    %3668 = vmatpush1.xpose.msra.mxu0 0.0
    %3669 = vmatprep.subr.mxu0 0.0
    %3670 = vmatpush1.xpose.msra.mxu0 0.0
    %3671 = vmatprep.subr.mxu0 0.0
    %3672 = vmatpush1.xpose.msra.mxu0 0.0
    %3673 = vmatprep.subr.mxu0 0.0
    %3674 = vmatpush1.xpose.msra.mxu0 0.0
    %3675 = vmatprep.subr.mxu0 0.0
    %3676 = vmatpush1.xpose.msra.mxu0 0.0
    %3677 = vmatprep.subr.mxu0 0.0
    %3678 = vmatpush1.xpose.msra.mxu0 0.0
    %3679 = vmatprep.subr.mxu0 0.0
    %3680 = vmatpush1.xpose.msra.mxu0 0.0
    %3681 = vmatprep.subr.mxu0 0.0
    %3682 = vmatpush1.xpose.msra.mxu0 0.0
    %3683 = vmatprep.subr.mxu0 0.0
    %3684 = vmatpush1.xpose.msra.mxu0 0.0
    %3685 = vmatprep.subr.mxu0 0.0
    %3686 = vmatpush1.xpose.msra.mxu0 0.0
    %3687 = vmatprep.subr.mxu0 0.0
    %3688 = vmatpush1.xpose.msra.mxu0 0.0
    %3689 = vmatprep.subr.mxu0 0.0
    %3690 = vmatpush1.xpose.msra.mxu0 0.0
    %3691 = vmatprep.subr.mxu0 0.0
    %3692 = vmatpush1.xpose.msra.mxu0 0.0
    %3693 = vmatprep.subr.mxu0 0.0
    %3694 = vmatpush1.xpose.msra.mxu0 0.0
    %3695 = vmatprep.subr.mxu0 0.0
    %3696 = vmatpush1.xpose.msra.mxu0 0.0
    %3697 = vmatprep.subr.mxu0 0.0
    %3698 = vmatpush1.xpose.msra.mxu0 0.0
    %3699 = vmatprep.subr.mxu0 0.0
    %3700 = vmatpush1.xpose.msra.mxu0 0.0
    %3701 = vmatprep.subr.mxu0 0.0
    %3702 = vmatpush1.xpose.msra.mxu0 0.0
    %3703 = vmatprep.subr.mxu0 0.0
    %3704 = vmatpush1.xpose.msra.mxu0 0.0
    %3705 = vmatprep.subr.mxu0 0.0
    %3706 = vmatpush1.xpose.msra.mxu0 0.0
    %3707 = vmatprep.subr.mxu0 0.0
    %3708 = vmatpush1.xpose.msra.mxu0 0.0
    %3709 = vmatprep.subr.mxu0 0.0
    %3710 = vmatpush1.xpose.msra.mxu0 0.0
    %3711 = vmatprep.mubr.f32.mxu0 0.0
    %3712 = vmatmul.mubr.f32.gmra.mrb[0].mxu0 %v3635
    %v3713 = vpop.f32.mrb[0].mxu0
    %v3714 = vadd.f32 %v350, %v3713
    %v3715 = vpop.f32.mrb[0].mxu0
    %3716 = vmatprep.mubr.f32.mxu0 0.0
    %3717 = vmatmul.mubr.f32.gmra.mrb[0].mxu0 %v3637
    %v3718 = vpop.f32.mrb[0].mxu0
    %v3719 = vadd.f32 %v351, %v3718
    %v3720 = vpop.f32.mrb[0].mxu0
    %3721 = vdwg.mxu0
    %v3722 = vsel %vm363, %v3714, -inf
    %3723 = vmax.xlane.f32.xlu0 %v3722
    %v3724 = vpop.xlane.xlu0 %3723
    %v3725 = vsel %vm363, %v3719, -inf
    %3726 = vmax.xlane.f32.xlu0 %v3725
    %v3727 = vpop.xlane.xlu0 %3726
    %v3728 = vsub.f32 %v3714, %v3724
    %v3729 = vsub.f32 %v3719, %v3727
    %v3730 = vmul.f32 %v3728, 1.442695
    %v3731 = vpow.pop %v3730
    %v3732 = vmul.f32 %v3729, 1.442695
    %v3733 = vpow.pop %v3732
    %v3734 = vsel %vm363, %v3731, 0.0
    %3735 = vadd.xlane.f32.xlu0 %v3734
    %v3736 = vpop.xlane.xlu0 %3735
    %v3737 = vsel %vm363, %v3733, 0.0
    %3738 = vadd.xlane.f32.xlu0 %v3737
    %v3739 = vpop.xlane.xlu0 %3738
    %v3740 = vrcp.pop %v3736
    %v3741 = vrcp.pop %v3739
    %v3742 = vmul.f32 %v3731, %v3740
    %v3743 = vmul.f32 %v3733, %v3741
    %3744 = vrot.lane.b32.xlu0 %v1726, 24
    %v3745 = vpop.permute.xlu0 %3744
    %3746 = vrot.lane.b32.xlu0 %v1731, 24
    %v3747 = vpop.permute.xlu0 %3746
    %3748 = vrot.lane.b32.xlu0 %v1736, 24
    %v3749 = vpop.permute.xlu0 %3748
    %3750 = vrot.lane.b32.xlu0 %v1741, 24
    %v3751 = vpop.permute.xlu0 %3750
    %v3757 = vsel %vm363, %v3742, 0
    %v3760 = vsel %vm363, %v3743, 0
    %3762 = vmatprep.subr.mxu0 0.0
    %3763 = vmatpush1.msra.mxu0 %v3745
    %3764 = vmatprep.subr.mxu0 0.0
    %3765 = vmatpush1.msra.mxu0 %v3747
    %3766 = vmatprep.subr.mxu0 0.0
    %3767 = vmatpush1.msra.mxu0 %v3749
    %3768 = vmatprep.subr.mxu0 0.0
    %3769 = vmatpush1.msra.mxu0 %v3751
    %3770 = vmatprep.subr.mxu0 0.0
    %3771 = vmatpush1.msra.mxu0 0.0
    %3772 = vmatprep.subr.mxu0 0.0
    %3773 = vmatpush1.msra.mxu0 0.0
    %3774 = vmatprep.subr.mxu0 0.0
    %3775 = vmatpush1.msra.mxu0 0.0
    %3776 = vmatprep.subr.mxu0 0.0
    %3777 = vmatpush1.msra.mxu0 0.0
    %3778 = vmatprep.subr.mxu0 0.0
    %3779 = vmatpush1.msra.mxu0 0.0
    %3780 = vmatprep.subr.mxu0 0.0
    %3781 = vmatpush1.msra.mxu0 0.0
    %3782 = vmatprep.subr.mxu0 0.0
    %3783 = vmatpush1.msra.mxu0 0.0
    %3784 = vmatprep.subr.mxu0 0.0
    %3785 = vmatpush1.msra.mxu0 0.0
    %3786 = vmatprep.subr.mxu0 0.0
    %3787 = vmatpush1.msra.mxu0 0.0
    %3788 = vmatprep.subr.mxu0 0.0
    %3789 = vmatpush1.msra.mxu0 0.0
    %3790 = vmatprep.subr.mxu0 0.0
    %3791 = vmatpush1.msra.mxu0 0.0
    %3792 = vmatprep.subr.mxu0 0.0
    %3793 = vmatpush1.msra.mxu0 0.0
    %3794 = vmatprep.subr.mxu0 0.0
    %3795 = vmatpush1.msra.mxu0 0.0
    %3796 = vmatprep.subr.mxu0 0.0
    %3797 = vmatpush1.msra.mxu0 0.0
    %3798 = vmatprep.subr.mxu0 0.0
    %3799 = vmatpush1.msra.mxu0 0.0
    %3800 = vmatprep.subr.mxu0 0.0
    %3801 = vmatpush1.msra.mxu0 0.0
    %3802 = vmatprep.subr.mxu0 0.0
    %3803 = vmatpush1.msra.mxu0 0.0
    %3804 = vmatprep.subr.mxu0 0.0
    %3805 = vmatpush1.msra.mxu0 0.0
    %3806 = vmatprep.subr.mxu0 0.0
    %3807 = vmatpush1.msra.mxu0 0.0
    %3808 = vmatprep.subr.mxu0 0.0
    %3809 = vmatpush1.msra.mxu0 0.0
    %3810 = vmatprep.subr.mxu0 0.0
    %3811 = vmatpush1.msra.mxu0 0.0
    %3812 = vmatprep.subr.mxu0 0.0
    %3813 = vmatpush1.msra.mxu0 0.0
    %3814 = vmatprep.subr.mxu0 0.0
    %3815 = vmatpush1.msra.mxu0 0.0
    %3816 = vmatprep.subr.mxu0 0.0
    %3817 = vmatpush1.msra.mxu0 0.0
    %3818 = vmatprep.subr.mxu0 0.0
    %3819 = vmatpush1.msra.mxu0 0.0
    %3820 = vmatprep.subr.mxu0 0.0
    %3821 = vmatpush1.msra.mxu0 0.0
    %3822 = vmatprep.subr.mxu0 0.0
    %3823 = vmatpush1.msra.mxu0 0.0
    %3824 = vmatprep.subr.mxu0 0.0
    %3825 = vmatpush1.msra.mxu0 0.0
    %3826 = vmatprep.mubr.f32.mxu0 0.0
    %3827 = vmatmul.mubr.f32.gmra.mrb[0].mxu0 %v3757
    %v3828 = vpop.f32.mrb[0].mxu0
    %v3829 = vadd.f32 0.0, %v3828
    %v3830 = vpop.f32.mrb[0].mxu0
    %3831 = vmatprep.mubr.f32.mxu0 0.0
    %3832 = vmatmul.mubr.f32.gmra.mrb[0].mxu0 %v3760
    %v3833 = vpop.f32.mrb[0].mxu0
    %v3834 = vadd.f32 0.0, %v3833
    %v3835 = vpop.f32.mrb[0].mxu0
    %3836 = vdwg.mxu0
    %v3838 = vsel %vm456, %v3829, 0
    %v3841 = vsel %vm456, %v3834, 0
    %3843 = vmatprep.subr.mxu0 0.0
    %3844 = vmatpush1.msra.mxu0 %v3406
    %3845 = vmatprep.subr.mxu0 0.0
    %3846 = vmatpush1.msra.mxu0 0.0
    %3847 = vmatprep.subr.mxu0 0.0
    %3848 = vmatpush1.msra.mxu0 0.0
    %3849 = vmatprep.subr.mxu0 0.0
    %3850 = vmatpush1.msra.mxu0 0.0
    %3851 = vmatprep.subr.mxu0 0.0
    %3852 = vmatpush1.msra.mxu0 0.0
    %3853 = vmatprep.subr.mxu0 0.0
    %3854 = vmatpush1.msra.mxu0 0.0
    %3855 = vmatprep.subr.mxu0 0.0
    %3856 = vmatpush1.msra.mxu0 0.0
    %3857 = vmatprep.subr.mxu0 0.0
    %3858 = vmatpush1.msra.mxu0 0.0
    %3859 = vmatprep.subr.mxu0 0.0
    %3860 = vmatpush1.msra.mxu0 0.0
    %3861 = vmatprep.subr.mxu0 0.0
    %3862 = vmatpush1.msra.mxu0 0.0
    %3863 = vmatprep.subr.mxu0 0.0
    %3864 = vmatpush1.msra.mxu0 0.0
    %3865 = vmatprep.subr.mxu0 0.0
    %3866 = vmatpush1.msra.mxu0 0.0
    %3867 = vmatprep.subr.mxu0 0.0
    %3868 = vmatpush1.msra.mxu0 0.0
    %3869 = vmatprep.subr.mxu0 0.0
    %3870 = vmatpush1.msra.mxu0 0.0
    %3871 = vmatprep.subr.mxu0 0.0
    %3872 = vmatpush1.msra.mxu0 0.0
    %3873 = vmatprep.subr.mxu0 0.0
    %3874 = vmatpush1.msra.mxu0 0.0
    %3875 = vmatprep.subr.mxu0 0.0
    %3876 = vmatpush1.msra.mxu0 0.0
    %3877 = vmatprep.subr.mxu0 0.0
    %3878 = vmatpush1.msra.mxu0 0.0
    %3879 = vmatprep.subr.mxu0 0.0
    %3880 = vmatpush1.msra.mxu0 0.0
    %3881 = vmatprep.subr.mxu0 0.0
    %3882 = vmatpush1.msra.mxu0 0.0
    %3883 = vmatprep.subr.mxu0 0.0
    %3884 = vmatpush1.msra.mxu0 0.0
    %3885 = vmatprep.subr.mxu0 0.0
    %3886 = vmatpush1.msra.mxu0 0.0
    %3887 = vmatprep.subr.mxu0 0.0
    %3888 = vmatpush1.msra.mxu0 0.0
    %3889 = vmatprep.subr.mxu0 0.0
    %3890 = vmatpush1.msra.mxu0 0.0
    %3891 = vmatprep.subr.mxu0 0.0
    %3892 = vmatpush1.msra.mxu0 0.0
    %3893 = vmatprep.subr.mxu0 0.0
    %3894 = vmatpush1.msra.mxu0 0.0
    %3895 = vmatprep.subr.mxu0 0.0
    %3896 = vmatpush1.msra.mxu0 0.0
    %3897 = vmatprep.subr.mxu0 0.0
    %3898 = vmatpush1.msra.mxu0 0.0
    %3899 = vmatprep.subr.mxu0 0.0
    %3900 = vmatpush1.msra.mxu0 0.0
    %3901 = vmatprep.subr.mxu0 0.0
    %3902 = vmatpush1.msra.mxu0 0.0
    %3903 = vmatprep.subr.mxu0 0.0
    %3904 = vmatpush1.msra.mxu0 0.0
    %3905 = vmatprep.subr.mxu0 0.0
    %3906 = vmatpush1.msra.mxu0 0.0
    %3907 = vmatprep.mubr.f32.mxu0 0.0
    %3908 = vmatmul.mubr.f32.gmra.mrb[0].mxu0 %v3838
    %v3909 = vpop.f32.mrb[0].mxu0
    %v3910 = vadd.f32 0.0, %v3909
    %v3911 = vpop.f32.mrb[0].mxu0
    %3912 = vmatprep.mubr.f32.mxu0 0.0
    %3913 = vmatmul.mubr.f32.gmra.mrb[0].mxu0 %v3841
    %v3914 = vpop.f32.mrb[0].mxu0
    %v3915 = vadd.f32 0.0, %v3914
    %v3916 = vpop.f32.mrb[0].mxu0
    %3917 = vdwg.mxu0
    %v3919 = vsel %vm456, %v3615, 0
    %v3922 = vsel %vm456, %v3620, 0
    %3924 = vmatprep.subr.mxu0 0.0
    %3925 = vmatpush1.msra.mxu0 %v3405
    %3926 = vmatprep.subr.mxu0 0.0
    %3927 = vmatpush1.msra.mxu0 0.0
    %3928 = vmatprep.subr.mxu0 0.0
    %3929 = vmatpush1.msra.mxu0 0.0
    %3930 = vmatprep.subr.mxu0 0.0
    %3931 = vmatpush1.msra.mxu0 0.0
    %3932 = vmatprep.subr.mxu0 0.0
    %3933 = vmatpush1.msra.mxu0 0.0
    %3934 = vmatprep.subr.mxu0 0.0
    %3935 = vmatpush1.msra.mxu0 0.0
    %3936 = vmatprep.subr.mxu0 0.0
    %3937 = vmatpush1.msra.mxu0 0.0
    %3938 = vmatprep.subr.mxu0 0.0
    %3939 = vmatpush1.msra.mxu0 0.0
    %3940 = vmatprep.subr.mxu0 0.0
    %3941 = vmatpush1.msra.mxu0 0.0
    %3942 = vmatprep.subr.mxu0 0.0
    %3943 = vmatpush1.msra.mxu0 0.0
    %3944 = vmatprep.subr.mxu0 0.0
    %3945 = vmatpush1.msra.mxu0 0.0
    %3946 = vmatprep.subr.mxu0 0.0
    %3947 = vmatpush1.msra.mxu0 0.0
    %3948 = vmatprep.subr.mxu0 0.0
    %3949 = vmatpush1.msra.mxu0 0.0
    %3950 = vmatprep.subr.mxu0 0.0
    %3951 = vmatpush1.msra.mxu0 0.0
    %3952 = vmatprep.subr.mxu0 0.0
    %3953 = vmatpush1.msra.mxu0 0.0
    %3954 = vmatprep.subr.mxu0 0.0
    %3955 = vmatpush1.msra.mxu0 0.0
    %3956 = vmatprep.subr.mxu0 0.0
    %3957 = vmatpush1.msra.mxu0 0.0
    %3958 = vmatprep.subr.mxu0 0.0
    %3959 = vmatpush1.msra.mxu0 0.0
    %3960 = vmatprep.subr.mxu0 0.0
    %3961 = vmatpush1.msra.mxu0 0.0
    %3962 = vmatprep.subr.mxu0 0.0
    %3963 = vmatpush1.msra.mxu0 0.0
    %3964 = vmatprep.subr.mxu0 0.0
    %3965 = vmatpush1.msra.mxu0 0.0
    %3966 = vmatprep.subr.mxu0 0.0
    %3967 = vmatpush1.msra.mxu0 0.0
    %3968 = vmatprep.subr.mxu0 0.0
    %3969 = vmatpush1.msra.mxu0 0.0
    %3970 = vmatprep.subr.mxu0 0.0
    %3971 = vmatpush1.msra.mxu0 0.0
    %3972 = vmatprep.subr.mxu0 0.0
    %3973 = vmatpush1.msra.mxu0 0.0
    %3974 = vmatprep.subr.mxu0 0.0
    %3975 = vmatpush1.msra.mxu0 0.0
    %3976 = vmatprep.subr.mxu0 0.0
    %3977 = vmatpush1.msra.mxu0 0.0
    %3978 = vmatprep.subr.mxu0 0.0
    %3979 = vmatpush1.msra.mxu0 0.0
    %3980 = vmatprep.subr.mxu0 0.0
    %3981 = vmatpush1.msra.mxu0 0.0
    %3982 = vmatprep.subr.mxu0 0.0
    %3983 = vmatpush1.msra.mxu0 0.0
    %3984 = vmatprep.subr.mxu0 0.0
    %3985 = vmatpush1.msra.mxu0 0.0
    %3986 = vmatprep.subr.mxu0 0.0
    %3987 = vmatpush1.msra.mxu0 0.0
    %3988 = vmatprep.mubr.f32.mxu0 0.0
    %3989 = vmatmul.mubr.f32.gmra.mrb[0].mxu0 %v3919
    %v3990 = vpop.f32.mrb[0].mxu0
    %v3991 = vadd.f32 %v3910, %v3990
    %v3992 = vpop.f32.mrb[0].mxu0
    %3993 = vmatprep.mubr.f32.mxu0 0.0
    %3994 = vmatmul.mubr.f32.gmra.mrb[0].mxu0 %v3922
    %v3995 = vpop.f32.mrb[0].mxu0
    %v3996 = vadd.f32 %v3915, %v3995
    %v3997 = vpop.f32.mrb[0].mxu0
    %3998 = vdwg.mxu0
    %3999 = vrot.lane.b32.xlu0 %v3396, 112
    %v4000 = vpop.permute.xlu0 %3999
    %4001 = vrot.lane.b32.xlu0 %v3401, 112
    %v4002 = vpop.permute.xlu0 %4001
    %4003 = vrot.lane.b32.xlu0 %v1726, 48
    %v4004 = vpop.permute.xlu0 %4003
    %4005 = vrot.lane.b32.xlu0 %v1731, 48
    %v4006 = vpop.permute.xlu0 %4005
    %4007 = vrot.lane.b32.xlu0 %v1736, 48
    %v4008 = vpop.permute.xlu0 %4007
    %4009 = vrot.lane.b32.xlu0 %v1741, 48
    %v4010 = vpop.permute.xlu0 %4009
    %v4011 = vsel %vm456, %v4000, 0
    %v4013 = vsel %vm456, %v4002, 0
    %v4015 = vsel %vm456, %v4004, 0
    %v4017 = vsel %vm456, %v4006, 0
    %v4019 = vsel %vm456, %v4008, 0
    %v4021 = vsel %vm456, %v4010, 0
    %4023 = vmatprep.subr.mxu0 0.0
    %4024 = vmatpush1.xpose.msra.mxu0 %v4015
    %4025 = vmatprep.subr.mxu0 0.0
    %4026 = vmatpush1.xpose.msra.mxu0 %v4017
    %4027 = vmatprep.subr.mxu0 0.0
    %4028 = vmatpush1.xpose.msra.mxu0 %v4019
    %4029 = vmatprep.subr.mxu0 0.0
    %4030 = vmatpush1.xpose.msra.mxu0 %v4021
    %4031 = vmatprep.subr.mxu0 0.0
    %4032 = vmatpush1.xpose.msra.mxu0 0.0
    %4033 = vmatprep.subr.mxu0 0.0
    %4034 = vmatpush1.xpose.msra.mxu0 0.0
    %4035 = vmatprep.subr.mxu0 0.0
    %4036 = vmatpush1.xpose.msra.mxu0 0.0
    %4037 = vmatprep.subr.mxu0 0.0
    %4038 = vmatpush1.xpose.msra.mxu0 0.0
    %4039 = vmatprep.subr.mxu0 0.0
    %4040 = vmatpush1.xpose.msra.mxu0 0.0
    %4041 = vmatprep.subr.mxu0 0.0
    %4042 = vmatpush1.xpose.msra.mxu0 0.0
    %4043 = vmatprep.subr.mxu0 0.0
    %4044 = vmatpush1.xpose.msra.mxu0 0.0
    %4045 = vmatprep.subr.mxu0 0.0
    %4046 = vmatpush1.xpose.msra.mxu0 0.0
    %4047 = vmatprep.subr.mxu0 0.0
    %4048 = vmatpush1.xpose.msra.mxu0 0.0
    %4049 = vmatprep.subr.mxu0 0.0
    %4050 = vmatpush1.xpose.msra.mxu0 0.0
    %4051 = vmatprep.subr.mxu0 0.0
    %4052 = vmatpush1.xpose.msra.mxu0 0.0
    %4053 = vmatprep.subr.mxu0 0.0
    %4054 = vmatpush1.xpose.msra.mxu0 0.0
    %4055 = vmatprep.subr.mxu0 0.0
    %4056 = vmatpush1.xpose.msra.mxu0 0.0
    %4057 = vmatprep.subr.mxu0 0.0
    %4058 = vmatpush1.xpose.msra.mxu0 0.0
    %4059 = vmatprep.subr.mxu0 0.0
    %4060 = vmatpush1.xpose.msra.mxu0 0.0
    %4061 = vmatprep.subr.mxu0 0.0
    %4062 = vmatpush1.xpose.msra.mxu0 0.0
    %4063 = vmatprep.subr.mxu0 0.0
    %4064 = vmatpush1.xpose.msra.mxu0 0.0
    %4065 = vmatprep.subr.mxu0 0.0
    %4066 = vmatpush1.xpose.msra.mxu0 0.0
    %4067 = vmatprep.subr.mxu0 0.0
    %4068 = vmatpush1.xpose.msra.mxu0 0.0
    %4069 = vmatprep.subr.mxu0 0.0
    %4070 = vmatpush1.xpose.msra.mxu0 0.0
    %4071 = vmatprep.subr.mxu0 0.0
    %4072 = vmatpush1.xpose.msra.mxu0 0.0
    %4073 = vmatprep.subr.mxu0 0.0
    %4074 = vmatpush1.xpose.msra.mxu0 0.0
    %4075 = vmatprep.subr.mxu0 0.0
    %4076 = vmatpush1.xpose.msra.mxu0 0.0
    %4077 = vmatprep.subr.mxu0 0.0
    %4078 = vmatpush1.xpose.msra.mxu0 0.0
    %4079 = vmatprep.subr.mxu0 0.0
    %4080 = vmatpush1.xpose.msra.mxu0 0.0
    %4081 = vmatprep.subr.mxu0 0.0
    %4082 = vmatpush1.xpose.msra.mxu0 0.0
    %4083 = vmatprep.subr.mxu0 0.0
    %4084 = vmatpush1.xpose.msra.mxu0 0.0
    %4085 = vmatprep.subr.mxu0 0.0
    %4086 = vmatpush1.xpose.msra.mxu0 0.0
    %4087 = vmatprep.mubr.f32.mxu0 0.0
    %4088 = vmatmul.mubr.f32.gmra.mrb[0].mxu0 %v4011
    %v4089 = vpop.f32.mrb[0].mxu0
    %v4090 = vadd.f32 %v350, %v4089
    %v4091 = vpop.f32.mrb[0].mxu0
    %4092 = vmatprep.mubr.f32.mxu0 0.0
    %4093 = vmatmul.mubr.f32.gmra.mrb[0].mxu0 %v4013
    %v4094 = vpop.f32.mrb[0].mxu0
    %v4095 = vadd.f32 %v351, %v4094
    %v4096 = vpop.f32.mrb[0].mxu0
    %4097 = vdwg.mxu0
    %v4098 = vsel %vm363, %v4090, -inf
    %4099 = vmax.xlane.f32.xlu0 %v4098
    %v4100 = vpop.xlane.xlu0 %4099
    %v4101 = vsel %vm363, %v4095, -inf
    %4102 = vmax.xlane.f32.xlu0 %v4101
    %v4103 = vpop.xlane.xlu0 %4102
    %v4104 = vsub.f32 %v4090, %v4100
    %v4105 = vsub.f32 %v4095, %v4103
    %v4106 = vmul.f32 %v4104, 1.442695
    %v4107 = vpow.pop %v4106
    %v4108 = vmul.f32 %v4105, 1.442695
    %v4109 = vpow.pop %v4108
    %v4110 = vsel %vm363, %v4107, 0.0
    %4111 = vadd.xlane.f32.xlu0 %v4110
    %v4112 = vpop.xlane.xlu0 %4111
    %v4113 = vsel %vm363, %v4109, 0.0
    %4114 = vadd.xlane.f32.xlu0 %v4113
    %v4115 = vpop.xlane.xlu0 %4114
    %v4116 = vrcp.pop %v4112
    %v4117 = vrcp.pop %v4115
    %v4118 = vmul.f32 %v4107, %v4116
    %v4119 = vmul.f32 %v4109, %v4117
    %4120 = vrot.lane.b32.xlu0 %v1726, 16
    %v4121 = vpop.permute.xlu0 %4120
    %4122 = vrot.lane.b32.xlu0 %v1731, 16
    %v4123 = vpop.permute.xlu0 %4122
    %4124 = vrot.lane.b32.xlu0 %v1736, 16
    %v4125 = vpop.permute.xlu0 %4124
    %4126 = vrot.lane.b32.xlu0 %v1741, 16
    %v4127 = vpop.permute.xlu0 %4126
    %v4133 = vsel %vm363, %v4118, 0
    %v4136 = vsel %vm363, %v4119, 0
    %4138 = vmatprep.subr.mxu0 0.0
    %4139 = vmatpush1.msra.mxu0 %v4121
    %4140 = vmatprep.subr.mxu0 0.0
    %4141 = vmatpush1.msra.mxu0 %v4123
    %4142 = vmatprep.subr.mxu0 0.0
    %4143 = vmatpush1.msra.mxu0 %v4125
    %4144 = vmatprep.subr.mxu0 0.0
    %4145 = vmatpush1.msra.mxu0 %v4127
    %4146 = vmatprep.subr.mxu0 0.0
    %4147 = vmatpush1.msra.mxu0 0.0
    %4148 = vmatprep.subr.mxu0 0.0
    %4149 = vmatpush1.msra.mxu0 0.0
    %4150 = vmatprep.subr.mxu0 0.0
    %4151 = vmatpush1.msra.mxu0 0.0
    %4152 = vmatprep.subr.mxu0 0.0
    %4153 = vmatpush1.msra.mxu0 0.0
    %4154 = vmatprep.subr.mxu0 0.0
    %4155 = vmatpush1.msra.mxu0 0.0
    %4156 = vmatprep.subr.mxu0 0.0
    %4157 = vmatpush1.msra.mxu0 0.0
    %4158 = vmatprep.subr.mxu0 0.0
    %4159 = vmatpush1.msra.mxu0 0.0
    %4160 = vmatprep.subr.mxu0 0.0
    %4161 = vmatpush1.msra.mxu0 0.0
    %4162 = vmatprep.subr.mxu0 0.0
    %4163 = vmatpush1.msra.mxu0 0.0
    %4164 = vmatprep.subr.mxu0 0.0
    %4165 = vmatpush1.msra.mxu0 0.0
    %4166 = vmatprep.subr.mxu0 0.0
    %4167 = vmatpush1.msra.mxu0 0.0
    %4168 = vmatprep.subr.mxu0 0.0
    %4169 = vmatpush1.msra.mxu0 0.0
    %4170 = vmatprep.subr.mxu0 0.0
    %4171 = vmatpush1.msra.mxu0 0.0
    %4172 = vmatprep.subr.mxu0 0.0
    %4173 = vmatpush1.msra.mxu0 0.0
    %4174 = vmatprep.subr.mxu0 0.0
    %4175 = vmatpush1.msra.mxu0 0.0
    %4176 = vmatprep.subr.mxu0 0.0
    %4177 = vmatpush1.msra.mxu0 0.0
    %4178 = vmatprep.subr.mxu0 0.0
    %4179 = vmatpush1.msra.mxu0 0.0
    %4180 = vmatprep.subr.mxu0 0.0
    %4181 = vmatpush1.msra.mxu0 0.0
    %4182 = vmatprep.subr.mxu0 0.0
    %4183 = vmatpush1.msra.mxu0 0.0
    %4184 = vmatprep.subr.mxu0 0.0
    %4185 = vmatpush1.msra.mxu0 0.0
    %4186 = vmatprep.subr.mxu0 0.0
    %4187 = vmatpush1.msra.mxu0 0.0
    %4188 = vmatprep.subr.mxu0 0.0
    %4189 = vmatpush1.msra.mxu0 0.0
    %4190 = vmatprep.subr.mxu0 0.0
    %4191 = vmatpush1.msra.mxu0 0.0
    %4192 = vmatprep.subr.mxu0 0.0
    %4193 = vmatpush1.msra.mxu0 0.0
    %4194 = vmatprep.subr.mxu0 0.0
    %4195 = vmatpush1.msra.mxu0 0.0
    %4196 = vmatprep.subr.mxu0 0.0
    %4197 = vmatpush1.msra.mxu0 0.0
    %4198 = vmatprep.subr.mxu0 0.0
    %4199 = vmatpush1.msra.mxu0 0.0
    %4200 = vmatprep.subr.mxu0 0.0
    %4201 = vmatpush1.msra.mxu0 0.0
    %4202 = vmatprep.mubr.f32.mxu0 0.0
    %4203 = vmatmul.mubr.f32.gmra.mrb[0].mxu0 %v4133
    %v4204 = vpop.f32.mrb[0].mxu0
    %v4205 = vadd.f32 0.0, %v4204
    %v4206 = vpop.f32.mrb[0].mxu0
    %4207 = vmatprep.mubr.f32.mxu0 0.0
    %4208 = vmatmul.mubr.f32.gmra.mrb[0].mxu0 %v4136
    %v4209 = vpop.f32.mrb[0].mxu0
    %v4210 = vadd.f32 0.0, %v4209
    %v4211 = vpop.f32.mrb[0].mxu0
    %4212 = vdwg.mxu0
    %v4214 = vsel %vm456, %v4205, 0
    %v4217 = vsel %vm456, %v4210, 0
    %4219 = vmatprep.subr.mxu0 0.0
    %4220 = vmatpush1.msra.mxu0 %v3407
    %4221 = vmatprep.subr.mxu0 0.0
    %4222 = vmatpush1.msra.mxu0 0.0
    %4223 = vmatprep.subr.mxu0 0.0
    %4224 = vmatpush1.msra.mxu0 0.0
    %4225 = vmatprep.subr.mxu0 0.0
    %4226 = vmatpush1.msra.mxu0 0.0
    %4227 = vmatprep.subr.mxu0 0.0
    %4228 = vmatpush1.msra.mxu0 0.0
    %4229 = vmatprep.subr.mxu0 0.0
    %4230 = vmatpush1.msra.mxu0 0.0
    %4231 = vmatprep.subr.mxu0 0.0
    %4232 = vmatpush1.msra.mxu0 0.0
    %4233 = vmatprep.subr.mxu0 0.0
    %4234 = vmatpush1.msra.mxu0 0.0
    %4235 = vmatprep.subr.mxu0 0.0
    %4236 = vmatpush1.msra.mxu0 0.0
    %4237 = vmatprep.subr.mxu0 0.0
    %4238 = vmatpush1.msra.mxu0 0.0
    %4239 = vmatprep.subr.mxu0 0.0
    %4240 = vmatpush1.msra.mxu0 0.0
    %4241 = vmatprep.subr.mxu0 0.0
    %4242 = vmatpush1.msra.mxu0 0.0
    %4243 = vmatprep.subr.mxu0 0.0
    %4244 = vmatpush1.msra.mxu0 0.0
    %4245 = vmatprep.subr.mxu0 0.0
    %4246 = vmatpush1.msra.mxu0 0.0
    %4247 = vmatprep.subr.mxu0 0.0
    %4248 = vmatpush1.msra.mxu0 0.0
    %4249 = vmatprep.subr.mxu0 0.0
    %4250 = vmatpush1.msra.mxu0 0.0
    %4251 = vmatprep.subr.mxu0 0.0
    %4252 = vmatpush1.msra.mxu0 0.0
    %4253 = vmatprep.subr.mxu0 0.0
    %4254 = vmatpush1.msra.mxu0 0.0
    %4255 = vmatprep.subr.mxu0 0.0
    %4256 = vmatpush1.msra.mxu0 0.0
    %4257 = vmatprep.subr.mxu0 0.0
    %4258 = vmatpush1.msra.mxu0 0.0
    %4259 = vmatprep.subr.mxu0 0.0
    %4260 = vmatpush1.msra.mxu0 0.0
    %4261 = vmatprep.subr.mxu0 0.0
    %4262 = vmatpush1.msra.mxu0 0.0
    %4263 = vmatprep.subr.mxu0 0.0
    %4264 = vmatpush1.msra.mxu0 0.0
    %4265 = vmatprep.subr.mxu0 0.0
    %4266 = vmatpush1.msra.mxu0 0.0
    %4267 = vmatprep.subr.mxu0 0.0
    %4268 = vmatpush1.msra.mxu0 0.0
    %4269 = vmatprep.subr.mxu0 0.0
    %4270 = vmatpush1.msra.mxu0 0.0
    %4271 = vmatprep.subr.mxu0 0.0
    %4272 = vmatpush1.msra.mxu0 0.0
    %4273 = vmatprep.subr.mxu0 0.0
    %4274 = vmatpush1.msra.mxu0 0.0
    %4275 = vmatprep.subr.mxu0 0.0
    %4276 = vmatpush1.msra.mxu0 0.0
    %4277 = vmatprep.subr.mxu0 0.0
    %4278 = vmatpush1.msra.mxu0 0.0
    %4279 = vmatprep.subr.mxu0 0.0
    %4280 = vmatpush1.msra.mxu0 0.0
    %4281 = vmatprep.subr.mxu0 0.0
    %4282 = vmatpush1.msra.mxu0 0.0
    %4283 = vmatprep.mubr.f32.mxu0 0.0
    %4284 = vmatmul.mubr.f32.gmra.mrb[0].mxu0 %v4214
    %v4285 = vpop.f32.mrb[0].mxu0
    %v4286 = vadd.f32 0.0, %v4285
    %v4287 = vpop.f32.mrb[0].mxu0
    %4288 = vmatprep.mubr.f32.mxu0 0.0
    %4289 = vmatmul.mubr.f32.gmra.mrb[0].mxu0 %v4217
    %v4290 = vpop.f32.mrb[0].mxu0
    %v4291 = vadd.f32 0.0, %v4290
    %v4292 = vpop.f32.mrb[0].mxu0
    %4293 = vdwg.mxu0
    %v4294 = vadd.f32 %v3991, %v4286
    %v4295 = vadd.f32 %v3996, %v4291
    %4296 = vrot.lane.b32.xlu0 %v3396, 104
    %v4297 = vpop.permute.xlu0 %4296
    %4298 = vrot.lane.b32.xlu0 %v3401, 104
    %v4299 = vpop.permute.xlu0 %4298
    %4300 = vrot.lane.b32.xlu0 %v1726, 40
    %v4301 = vpop.permute.xlu0 %4300
    %4302 = vrot.lane.b32.xlu0 %v1731, 40
    %v4303 = vpop.permute.xlu0 %4302
    %4304 = vrot.lane.b32.xlu0 %v1736, 40
    %v4305 = vpop.permute.xlu0 %4304
    %4306 = vrot.lane.b32.xlu0 %v1741, 40
    %v4307 = vpop.permute.xlu0 %4306
    %v4308 = vsel %vm456, %v4297, 0
    %v4310 = vsel %vm456, %v4299, 0
    %v4312 = vsel %vm456, %v4301, 0
    %v4314 = vsel %vm456, %v4303, 0
    %v4316 = vsel %vm456, %v4305, 0
    %v4318 = vsel %vm456, %v4307, 0
    %4320 = vmatprep.subr.mxu0 0.0
    %4321 = vmatpush1.xpose.msra.mxu0 %v4312
    %4322 = vmatprep.subr.mxu0 0.0
    %4323 = vmatpush1.xpose.msra.mxu0 %v4314
    %4324 = vmatprep.subr.mxu0 0.0
    %4325 = vmatpush1.xpose.msra.mxu0 %v4316
    %4326 = vmatprep.subr.mxu0 0.0
    %4327 = vmatpush1.xpose.msra.mxu0 %v4318
    %4328 = vmatprep.subr.mxu0 0.0
    %4329 = vmatpush1.xpose.msra.mxu0 0.0
    %4330 = vmatprep.subr.mxu0 0.0
    %4331 = vmatpush1.xpose.msra.mxu0 0.0
    %4332 = vmatprep.subr.mxu0 0.0
    %4333 = vmatpush1.xpose.msra.mxu0 0.0
    %4334 = vmatprep.subr.mxu0 0.0
    %4335 = vmatpush1.xpose.msra.mxu0 0.0
    %4336 = vmatprep.subr.mxu0 0.0
    %4337 = vmatpush1.xpose.msra.mxu0 0.0
    %4338 = vmatprep.subr.mxu0 0.0
    %4339 = vmatpush1.xpose.msra.mxu0 0.0
    %4340 = vmatprep.subr.mxu0 0.0
    %4341 = vmatpush1.xpose.msra.mxu0 0.0
    %4342 = vmatprep.subr.mxu0 0.0
    %4343 = vmatpush1.xpose.msra.mxu0 0.0
    %4344 = vmatprep.subr.mxu0 0.0
    %4345 = vmatpush1.xpose.msra.mxu0 0.0
    %4346 = vmatprep.subr.mxu0 0.0
    %4347 = vmatpush1.xpose.msra.mxu0 0.0
    %4348 = vmatprep.subr.mxu0 0.0
    %4349 = vmatpush1.xpose.msra.mxu0 0.0
    %4350 = vmatprep.subr.mxu0 0.0
    %4351 = vmatpush1.xpose.msra.mxu0 0.0
    %4352 = vmatprep.subr.mxu0 0.0
    %4353 = vmatpush1.xpose.msra.mxu0 0.0
    %4354 = vmatprep.subr.mxu0 0.0
    %4355 = vmatpush1.xpose.msra.mxu0 0.0
    %4356 = vmatprep.subr.mxu0 0.0
    %4357 = vmatpush1.xpose.msra.mxu0 0.0
    %4358 = vmatprep.subr.mxu0 0.0
    %4359 = vmatpush1.xpose.msra.mxu0 0.0
    %4360 = vmatprep.subr.mxu0 0.0
    %4361 = vmatpush1.xpose.msra.mxu0 0.0
    %4362 = vmatprep.subr.mxu0 0.0
    %4363 = vmatpush1.xpose.msra.mxu0 0.0
    %4364 = vmatprep.subr.mxu0 0.0
    %4365 = vmatpush1.xpose.msra.mxu0 0.0
    %4366 = vmatprep.subr.mxu0 0.0
    %4367 = vmatpush1.xpose.msra.mxu0 0.0
    %4368 = vmatprep.subr.mxu0 0.0
    %4369 = vmatpush1.xpose.msra.mxu0 0.0
    %4370 = vmatprep.subr.mxu0 0.0
    %4371 = vmatpush1.xpose.msra.mxu0 0.0
    %4372 = vmatprep.subr.mxu0 0.0
    %4373 = vmatpush1.xpose.msra.mxu0 0.0
    %4374 = vmatprep.subr.mxu0 0.0
    %4375 = vmatpush1.xpose.msra.mxu0 0.0
    %4376 = vmatprep.subr.mxu0 0.0
    %4377 = vmatpush1.xpose.msra.mxu0 0.0
    %4378 = vmatprep.subr.mxu0 0.0
    %4379 = vmatpush1.xpose.msra.mxu0 0.0
    %4380 = vmatprep.subr.mxu0 0.0
    %4381 = vmatpush1.xpose.msra.mxu0 0.0
    %4382 = vmatprep.subr.mxu0 0.0
    %4383 = vmatpush1.xpose.msra.mxu0 0.0
    %4384 = vmatprep.mubr.f32.mxu0 0.0
    %4385 = vmatmul.mubr.f32.gmra.mrb[0].mxu0 %v4308
    %v4386 = vpop.f32.mrb[0].mxu0
    %v4387 = vadd.f32 %v350, %v4386
    %v4388 = vpop.f32.mrb[0].mxu0
    %4389 = vmatprep.mubr.f32.mxu0 0.0
    %4390 = vmatmul.mubr.f32.gmra.mrb[0].mxu0 %v4310
    %v4391 = vpop.f32.mrb[0].mxu0
    %v4392 = vadd.f32 %v351, %v4391
    %v4393 = vpop.f32.mrb[0].mxu0
    %4394 = vdwg.mxu0
    %v4395 = vsel %vm363, %v4387, -inf
    %4396 = vmax.xlane.f32.xlu0 %v4395
    %v4397 = vpop.xlane.xlu0 %4396
    %v4398 = vsel %vm363, %v4392, -inf
    %4399 = vmax.xlane.f32.xlu0 %v4398
    %v4400 = vpop.xlane.xlu0 %4399
    %v4401 = vsub.f32 %v4387, %v4397
    %v4402 = vsub.f32 %v4392, %v4400
    %v4403 = vmul.f32 %v4401, 1.442695
    %v4404 = vpow.pop %v4403
    %v4405 = vmul.f32 %v4402, 1.442695
    %v4406 = vpow.pop %v4405
    %v4407 = vsel %vm363, %v4404, 0.0
    %4408 = vadd.xlane.f32.xlu0 %v4407
    %v4409 = vpop.xlane.xlu0 %4408
    %v4410 = vsel %vm363, %v4406, 0.0
    %4411 = vadd.xlane.f32.xlu0 %v4410
    %v4412 = vpop.xlane.xlu0 %4411
    %v4413 = vrcp.pop %v4409
    %v4414 = vrcp.pop %v4412
    %v4415 = vmul.f32 %v4404, %v4413
    %v4416 = vmul.f32 %v4406, %v4414
    %4417 = vrot.lane.b32.xlu0 %v1726, 8
    %v4418 = vpop.permute.xlu0 %4417
    %4419 = vrot.lane.b32.xlu0 %v1731, 8
    %v4420 = vpop.permute.xlu0 %4419
    %4421 = vrot.lane.b32.xlu0 %v1736, 8
    %v4422 = vpop.permute.xlu0 %4421
    %4423 = vrot.lane.b32.xlu0 %v1741, 8
    %v4424 = vpop.permute.xlu0 %4423
    %v4430 = vsel %vm363, %v4415, 0
    %v4433 = vsel %vm363, %v4416, 0
    %4435 = vmatprep.subr.mxu0 0.0
    %4436 = vmatpush1.msra.mxu0 %v4418
    %4437 = vmatprep.subr.mxu0 0.0
    %4438 = vmatpush1.msra.mxu0 %v4420
    %4439 = vmatprep.subr.mxu0 0.0
    %4440 = vmatpush1.msra.mxu0 %v4422
    %4441 = vmatprep.subr.mxu0 0.0
    %4442 = vmatpush1.msra.mxu0 %v4424
    %4443 = vmatprep.subr.mxu0 0.0
    %4444 = vmatpush1.msra.mxu0 0.0
    %4445 = vmatprep.subr.mxu0 0.0
    %4446 = vmatpush1.msra.mxu0 0.0
    %4447 = vmatprep.subr.mxu0 0.0
    %4448 = vmatpush1.msra.mxu0 0.0
    %4449 = vmatprep.subr.mxu0 0.0
    %4450 = vmatpush1.msra.mxu0 0.0
    %4451 = vmatprep.subr.mxu0 0.0
    %4452 = vmatpush1.msra.mxu0 0.0
    %4453 = vmatprep.subr.mxu0 0.0
    %4454 = vmatpush1.msra.mxu0 0.0
    %4455 = vmatprep.subr.mxu0 0.0
    %4456 = vmatpush1.msra.mxu0 0.0
    %4457 = vmatprep.subr.mxu0 0.0
    %4458 = vmatpush1.msra.mxu0 0.0
    %4459 = vmatprep.subr.mxu0 0.0
    %4460 = vmatpush1.msra.mxu0 0.0
    %4461 = vmatprep.subr.mxu0 0.0
    %4462 = vmatpush1.msra.mxu0 0.0
    %4463 = vmatprep.subr.mxu0 0.0
    %4464 = vmatpush1.msra.mxu0 0.0
    %4465 = vmatprep.subr.mxu0 0.0
    %4466 = vmatpush1.msra.mxu0 0.0
    %4467 = vmatprep.subr.mxu0 0.0
    %4468 = vmatpush1.msra.mxu0 0.0
    %4469 = vmatprep.subr.mxu0 0.0
    %4470 = vmatpush1.msra.mxu0 0.0
    %4471 = vmatprep.subr.mxu0 0.0
    %4472 = vmatpush1.msra.mxu0 0.0
    %4473 = vmatprep.subr.mxu0 0.0
    %4474 = vmatpush1.msra.mxu0 0.0
    %4475 = vmatprep.subr.mxu0 0.0
    %4476 = vmatpush1.msra.mxu0 0.0
    %4477 = vmatprep.subr.mxu0 0.0
    %4478 = vmatpush1.msra.mxu0 0.0
    %4479 = vmatprep.subr.mxu0 0.0
    %4480 = vmatpush1.msra.mxu0 0.0
    %4481 = vmatprep.subr.mxu0 0.0
    %4482 = vmatpush1.msra.mxu0 0.0
    %4483 = vmatprep.subr.mxu0 0.0
    %4484 = vmatpush1.msra.mxu0 0.0
    %4485 = vmatprep.subr.mxu0 0.0
    %4486 = vmatpush1.msra.mxu0 0.0
    %4487 = vmatprep.subr.mxu0 0.0
    %4488 = vmatpush1.msra.mxu0 0.0
    %4489 = vmatprep.subr.mxu0 0.0
    %4490 = vmatpush1.msra.mxu0 0.0
    %4491 = vmatprep.subr.mxu0 0.0
    %4492 = vmatpush1.msra.mxu0 0.0
    %4493 = vmatprep.subr.mxu0 0.0
    %4494 = vmatpush1.msra.mxu0 0.0
    %4495 = vmatprep.subr.mxu0 0.0
    %4496 = vmatpush1.msra.mxu0 0.0
    %4497 = vmatprep.subr.mxu0 0.0
    %4498 = vmatpush1.msra.mxu0 0.0
    %4499 = vmatprep.mubr.f32.mxu0 0.0
    %4500 = vmatmul.mubr.f32.gmra.mrb[0].mxu0 %v4430
    %v4501 = vpop.f32.mrb[0].mxu0
    %v4502 = vadd.f32 0.0, %v4501
    %v4503 = vpop.f32.mrb[0].mxu0
    %4504 = vmatprep.mubr.f32.mxu0 0.0
    %4505 = vmatmul.mubr.f32.gmra.mrb[0].mxu0 %v4433
    %v4506 = vpop.f32.mrb[0].mxu0
    %v4507 = vadd.f32 0.0, %v4506
    %v4508 = vpop.f32.mrb[0].mxu0
    %4509 = vdwg.mxu0
    %v4511 = vsel %vm456, %v4502, 0
    %v4514 = vsel %vm456, %v4507, 0
    %4516 = vmatprep.subr.mxu0 0.0
    %4517 = vmatpush1.msra.mxu0 %v3408
    %4518 = vmatprep.subr.mxu0 0.0
    %4519 = vmatpush1.msra.mxu0 0.0
    %4520 = vmatprep.subr.mxu0 0.0
    %4521 = vmatpush1.msra.mxu0 0.0
    %4522 = vmatprep.subr.mxu0 0.0
    %4523 = vmatpush1.msra.mxu0 0.0
    %4524 = vmatprep.subr.mxu0 0.0
    %4525 = vmatpush1.msra.mxu0 0.0
    %4526 = vmatprep.subr.mxu0 0.0
    %4527 = vmatpush1.msra.mxu0 0.0
    %4528 = vmatprep.subr.mxu0 0.0
    %4529 = vmatpush1.msra.mxu0 0.0
    %4530 = vmatprep.subr.mxu0 0.0
    %4531 = vmatpush1.msra.mxu0 0.0
    %4532 = vmatprep.subr.mxu0 0.0
    %4533 = vmatpush1.msra.mxu0 0.0
    %4534 = vmatprep.subr.mxu0 0.0
    %4535 = vmatpush1.msra.mxu0 0.0
    %4536 = vmatprep.subr.mxu0 0.0
    %4537 = vmatpush1.msra.mxu0 0.0
    %4538 = vmatprep.subr.mxu0 0.0
    %4539 = vmatpush1.msra.mxu0 0.0
    %4540 = vmatprep.subr.mxu0 0.0
    %4541 = vmatpush1.msra.mxu0 0.0
    %4542 = vmatprep.subr.mxu0 0.0
    %4543 = vmatpush1.msra.mxu0 0.0
    %4544 = vmatprep.subr.mxu0 0.0
    %4545 = vmatpush1.msra.mxu0 0.0
    %4546 = vmatprep.subr.mxu0 0.0
    %4547 = vmatpush1.msra.mxu0 0.0
    %4548 = vmatprep.subr.mxu0 0.0
    %4549 = vmatpush1.msra.mxu0 0.0
    %4550 = vmatprep.subr.mxu0 0.0
    %4551 = vmatpush1.msra.mxu0 0.0
    %4552 = vmatprep.subr.mxu0 0.0
    %4553 = vmatpush1.msra.mxu0 0.0
    %4554 = vmatprep.subr.mxu0 0.0
    %4555 = vmatpush1.msra.mxu0 0.0
    %4556 = vmatprep.subr.mxu0 0.0
    %4557 = vmatpush1.msra.mxu0 0.0
    %4558 = vmatprep.subr.mxu0 0.0
    %4559 = vmatpush1.msra.mxu0 0.0
    %4560 = vmatprep.subr.mxu0 0.0
    %4561 = vmatpush1.msra.mxu0 0.0
    %4562 = vmatprep.subr.mxu0 0.0
    %4563 = vmatpush1.msra.mxu0 0.0
    %4564 = vmatprep.subr.mxu0 0.0
    %4565 = vmatpush1.msra.mxu0 0.0
    %4566 = vmatprep.subr.mxu0 0.0
    %4567 = vmatpush1.msra.mxu0 0.0
    %4568 = vmatprep.subr.mxu0 0.0
    %4569 = vmatpush1.msra.mxu0 0.0
    %4570 = vmatprep.subr.mxu0 0.0
    %4571 = vmatpush1.msra.mxu0 0.0
    %4572 = vmatprep.subr.mxu0 0.0
    %4573 = vmatpush1.msra.mxu0 0.0
    %4574 = vmatprep.subr.mxu0 0.0
    %4575 = vmatpush1.msra.mxu0 0.0
    %4576 = vmatprep.subr.mxu0 0.0
    %4577 = vmatpush1.msra.mxu0 0.0
    %4578 = vmatprep.subr.mxu0 0.0
    %4579 = vmatpush1.msra.mxu0 0.0
    %4580 = vmatprep.mubr.f32.mxu0 0.0
    %4581 = vmatmul.mubr.f32.gmra.mrb[0].mxu0 %v4511
    %v4582 = vpop.f32.mrb[0].mxu0
    %v4583 = vadd.f32 0.0, %v4582
    %v4584 = vpop.f32.mrb[0].mxu0
    %4585 = vmatprep.mubr.f32.mxu0 0.0
    %4586 = vmatmul.mubr.f32.gmra.mrb[0].mxu0 %v4514
    %v4587 = vpop.f32.mrb[0].mxu0
    %v4588 = vadd.f32 0.0, %v4587
    %v4589 = vpop.f32.mrb[0].mxu0
    %4590 = vdwg.mxu0
    %v4591 = vadd.f32 %v4294, %v4583
    %v4592 = vadd.f32 %v4295, %v4588
    %v4594 = vlaneseq
    %v4595 = vshrl.u32 %v4594, 7
    %v4596 = vsub.s32 0, %v4595
    %v4597 = vrot.slane %v3410, %v4596
    %v4599 = vadd.f32 %v4591, %v4597
    %v4600 = vadd.f32 %v4592, %v4597
    %s4601 = scalar_lea.vmem %s18, 1
    %v4602 = vld [vmem:[%s4601] sm:$0x1]
    %s4603 = scalar_lea.vmem [#allocation12], 1
    %v4604 = vld [vmem:[%s4603] sm:$0x1]
    %v4605 = vadd.f32 %v4599, %v3308
    %v4606 = vadd.f32 %v4600, %v3309
    %v4607 = vsel %vm363, %v4605, 0.0
    %4608 = vadd.xlane.f32.xlu0 %v4607
    %v4609 = vpop.xlane.xlu0 %4608
    %v4610 = vsel %vm363, %v4606, 0.0
    %4611 = vadd.xlane.f32.xlu0 %v4610
    %v4612 = vpop.xlane.xlu0 %4611
    %v4613 = vmul.f32 %v4609, %v1595
    %v4614 = vmul.f32 %v4612, %v1595
    %v4615 = vsub.f32 %v4605, %v4613
    %v4616 = vsub.f32 %v4606, %v4614
    %v4617 = vmul.f32 %v4615, %v4615
    %v4618 = vmul.f32 %v4616, %v4616
    %v4619 = vsel %vm363, %v4617, 0.0
    %4620 = vadd.xlane.f32.xlu0 %v4619
    %v4621 = vpop.xlane.xlu0 %4620
    %v4622 = vsel %vm363, %v4618, 0.0
    %4623 = vadd.xlane.f32.xlu0 %v4622
    %v4624 = vpop.xlane.xlu0 %4623
    %v4625 = vmul.f32 %v4621, %v1595
    %v4626 = vmul.f32 %v4624, %v1595
    %v4627 = vadd.f32 %v4625, 1e-05
    %v4628 = vadd.f32 %v4626, 1e-05
    %v4629 = vrsqrt.pop %v4627
    %v4630 = vrsqrt.pop %v4628
    %v4631 = vmul.f32 %v4615, %v4629
    %v4632 = vmul.f32 %v4616, %v4630
    %v4634 = vlaneseq
    %v4635 = vshrl.u32 %v4634, 7
    %v4636 = vsub.s32 0, %v4635
    %v4637 = vrot.slane %v4602, %v4636
    %v4639 = vmul.f32 %v4631, %v4637
    %v4640 = vmul.f32 %v4632, %v4637
    %v4642 = vlaneseq
    %v4643 = vshrl.u32 %v4642, 7
    %v4644 = vsub.s32 0, %v4643
    %v4645 = vrot.slane %v4604, %v4644
    %v4647 = vadd.f32 %v4639, %v4645
    %v4648 = vadd.f32 %v4640, %v4645
    %s4649 = scalar_lea.vmem %s22, 32
    %v4650 = vld [vmem:[%s4649] sm:$0xff]
    %v4651 = vld [vmem:[%s4649 + $0x8] sm:$0xff]
    %v4652 = vld [vmem:[%s4649 + $0x10] sm:$0xff]
    %v4653 = vld [vmem:[%s4649 + $0x18] sm:$0xff]
    %s4654 = scalar_lea.vmem [#allocation15], 1
    %v4655 = vld [vmem:[%s4654] sm:$0x1]
    %v4657 = vlaneseq
    %v4658 = vshrl.u32 %v4657, 7
    %v4659 = vsub.s32 0, %v4658
    %v4660 = vrot.slane %v4655, %v4659
    %v4663 = vsel %vm363, %v4647, 0
    %v4666 = vsel %vm363, %v4648, 0
    %4668 = vmatprep.subr.mxu0 0.0
    %4669 = vmatpush1.msra.mxu0 %v4650
    %4670 = vmatprep.subr.mxu0 0.0
    %4671 = vmatpush1.msra.mxu0 %v4651
    %4672 = vmatprep.subr.mxu0 0.0
    %4673 = vmatpush1.msra.mxu0 %v4652
    %4674 = vmatprep.subr.mxu0 0.0
    %4675 = vmatpush1.msra.mxu0 %v4653
    %4676 = vmatprep.subr.mxu0 0.0
    %4677 = vmatpush1.msra.mxu0 0.0
    %4678 = vmatprep.subr.mxu0 0.0
    %4679 = vmatpush1.msra.mxu0 0.0
    %4680 = vmatprep.subr.mxu0 0.0
    %4681 = vmatpush1.msra.mxu0 0.0
    %4682 = vmatprep.subr.mxu0 0.0
    %4683 = vmatpush1.msra.mxu0 0.0
    %4684 = vmatprep.subr.mxu0 0.0
    %4685 = vmatpush1.msra.mxu0 0.0
    %4686 = vmatprep.subr.mxu0 0.0
    %4687 = vmatpush1.msra.mxu0 0.0
    %4688 = vmatprep.subr.mxu0 0.0
    %4689 = vmatpush1.msra.mxu0 0.0
    %4690 = vmatprep.subr.mxu0 0.0
    %4691 = vmatpush1.msra.mxu0 0.0
    %4692 = vmatprep.subr.mxu0 0.0
    %4693 = vmatpush1.msra.mxu0 0.0
    %4694 = vmatprep.subr.mxu0 0.0
    %4695 = vmatpush1.msra.mxu0 0.0
    %4696 = vmatprep.subr.mxu0 0.0
    %4697 = vmatpush1.msra.mxu0 0.0
    %4698 = vmatprep.subr.mxu0 0.0
    %4699 = vmatpush1.msra.mxu0 0.0
    %4700 = vmatprep.subr.mxu0 0.0
    %4701 = vmatpush1.msra.mxu0 0.0
    %4702 = vmatprep.subr.mxu0 0.0
    %4703 = vmatpush1.msra.mxu0 0.0
    %4704 = vmatprep.subr.mxu0 0.0
    %4705 = vmatpush1.msra.mxu0 0.0
    %4706 = vmatprep.subr.mxu0 0.0
    %4707 = vmatpush1.msra.mxu0 0.0
    %4708 = vmatprep.subr.mxu0 0.0
    %4709 = vmatpush1.msra.mxu0 0.0
    %4710 = vmatprep.subr.mxu0 0.0
    %4711 = vmatpush1.msra.mxu0 0.0
    %4712 = vmatprep.subr.mxu0 0.0
    %4713 = vmatpush1.msra.mxu0 0.0
    %4714 = vmatprep.subr.mxu0 0.0
    %4715 = vmatpush1.msra.mxu0 0.0
    %4716 = vmatprep.subr.mxu0 0.0
    %4717 = vmatpush1.msra.mxu0 0.0
    %4718 = vmatprep.subr.mxu0 0.0
    %4719 = vmatpush1.msra.mxu0 0.0
    %4720 = vmatprep.subr.mxu0 0.0
    %4721 = vmatpush1.msra.mxu0 0.0
    %4722 = vmatprep.subr.mxu0 0.0
    %4723 = vmatpush1.msra.mxu0 0.0
    %4724 = vmatprep.subr.mxu0 0.0
    %4725 = vmatpush1.msra.mxu0 0.0
    %4726 = vmatprep.subr.mxu0 0.0
    %4727 = vmatpush1.msra.mxu0 0.0
    %4728 = vmatprep.subr.mxu0 0.0
    %4729 = vmatpush1.msra.mxu0 0.0
    %4730 = vmatprep.subr.mxu0 0.0
    %4731 = vmatpush1.msra.mxu0 0.0
    %4732 = vmatprep.mubr.f32.mxu0 0.0
    %4733 = vmatmul.mubr.f32.gmra.mrb[0].mxu0 %v4663
    %v4734 = vpop.f32.mrb[0].mxu0
    %v4735 = vadd.f32 %v4660, %v4734
    %v4736 = vpop.f32.mrb[0].mxu0
    %4737 = vmatprep.mubr.f32.mxu0 0.0
    %4738 = vmatmul.mubr.f32.gmra.mrb[0].mxu0 %v4666
    %v4739 = vpop.f32.mrb[0].mxu0
    %v4740 = vadd.f32 %v4660, %v4739
    %v4741 = vpop.f32.mrb[0].mxu0
    %4742 = vdwg.mxu0
    %v4743 = vmax.f32 %v4735, 0.0
    %v4744 = vmax.f32 %v4740, 0.0
    %s4745 = scalar_lea.vmem %s24, 64
    %v4746 = vld [vmem:[%s4745] sm:$0xff]
    %v4747 = vld [vmem:[%s4745 + $0x8] sm:$0xff]
    %v4748 = vld [vmem:[%s4745 + $0x10] sm:$0xff]
    %v4749 = vld [vmem:[%s4745 + $0x18] sm:$0xff]
    %v4750 = vld [vmem:[%s4745 + $0x20] sm:$0xff]
    %v4751 = vld [vmem:[%s4745 + $0x28] sm:$0xff]
    %v4752 = vld [vmem:[%s4745 + $0x30] sm:$0xff]
    %v4753 = vld [vmem:[%s4745 + $0x38] sm:$0xff]
    %s4754 = scalar_lea.vmem [#allocation16], 1
    %v4755 = vld [vmem:[%s4754] sm:$0x1]
    %v4757 = vlaneseq
    %v4758 = vshrl.u32 %v4757, 7
    %v4759 = vsub.s32 0, %v4758
    %v4760 = vrot.slane %v4755, %v4759
    %v4763 = vsel %vm3182, %v4743, 0
    %v4766 = vsel %vm3182, %v4744, 0
    %4768 = vmatprep.subr.mxu0 0.0
    %4769 = vmatpush1.msra.mxu0 %v4746
    %4770 = vmatprep.subr.mxu0 0.0
    %4771 = vmatpush1.msra.mxu0 %v4747
    %4772 = vmatprep.subr.mxu0 0.0
    %4773 = vmatpush1.msra.mxu0 %v4748
    %4774 = vmatprep.subr.mxu0 0.0
    %4775 = vmatpush1.msra.mxu0 %v4749
    %4776 = vmatprep.subr.mxu0 0.0
    %4777 = vmatpush1.msra.mxu0 %v4750
    %4778 = vmatprep.subr.mxu0 0.0
    %4779 = vmatpush1.msra.mxu0 %v4751
    %4780 = vmatprep.subr.mxu0 0.0
    %4781 = vmatpush1.msra.mxu0 %v4752
    %4782 = vmatprep.subr.mxu0 0.0
    %4783 = vmatpush1.msra.mxu0 %v4753
    %4784 = vmatprep.subr.mxu0 0.0
    %4785 = vmatpush1.msra.mxu0 0.0
    %4786 = vmatprep.subr.mxu0 0.0
    %4787 = vmatpush1.msra.mxu0 0.0
    %4788 = vmatprep.subr.mxu0 0.0
    %4789 = vmatpush1.msra.mxu0 0.0
    %4790 = vmatprep.subr.mxu0 0.0
    %4791 = vmatpush1.msra.mxu0 0.0
    %4792 = vmatprep.subr.mxu0 0.0
    %4793 = vmatpush1.msra.mxu0 0.0
    %4794 = vmatprep.subr.mxu0 0.0
    %4795 = vmatpush1.msra.mxu0 0.0
    %4796 = vmatprep.subr.mxu0 0.0
    %4797 = vmatpush1.msra.mxu0 0.0
    %4798 = vmatprep.subr.mxu0 0.0
    %4799 = vmatpush1.msra.mxu0 0.0
    %4800 = vmatprep.subr.mxu0 0.0
    %4801 = vmatpush1.msra.mxu0 0.0
    %4802 = vmatprep.subr.mxu0 0.0
    %4803 = vmatpush1.msra.mxu0 0.0
    %4804 = vmatprep.subr.mxu0 0.0
    %4805 = vmatpush1.msra.mxu0 0.0
    %4806 = vmatprep.subr.mxu0 0.0
    %4807 = vmatpush1.msra.mxu0 0.0
    %4808 = vmatprep.subr.mxu0 0.0
    %4809 = vmatpush1.msra.mxu0 0.0
    %4810 = vmatprep.subr.mxu0 0.0
    %4811 = vmatpush1.msra.mxu0 0.0
    %4812 = vmatprep.subr.mxu0 0.0
    %4813 = vmatpush1.msra.mxu0 0.0
    %4814 = vmatprep.subr.mxu0 0.0
    %4815 = vmatpush1.msra.mxu0 0.0
    %4816 = vmatprep.subr.mxu0 0.0
    %4817 = vmatpush1.msra.mxu0 0.0
    %4818 = vmatprep.subr.mxu0 0.0
    %4819 = vmatpush1.msra.mxu0 0.0
    %4820 = vmatprep.subr.mxu0 0.0
    %4821 = vmatpush1.msra.mxu0 0.0
    %4822 = vmatprep.subr.mxu0 0.0
    %4823 = vmatpush1.msra.mxu0 0.0
    %4824 = vmatprep.subr.mxu0 0.0
    %4825 = vmatpush1.msra.mxu0 0.0
    %4826 = vmatprep.subr.mxu0 0.0
    %4827 = vmatpush1.msra.mxu0 0.0
    %4828 = vmatprep.subr.mxu0 0.0
    %4829 = vmatpush1.msra.mxu0 0.0
    %4830 = vmatprep.subr.mxu0 0.0
    %4831 = vmatpush1.msra.mxu0 0.0
    %4832 = vmatprep.mubr.f32.mxu0 0.0
    %4833 = vmatmul.mubr.f32.gmra.mrb[0].mxu0 %v4763
    %v4834 = vpop.f32.mrb[0].mxu0
    %v4835 = vadd.f32 %v4760, %v4834
    %v4836 = vpop.f32.mrb[0].mxu0
    %4837 = vmatprep.mubr.f32.mxu0 0.0
    %4838 = vmatmul.mubr.f32.gmra.mrb[0].mxu0 %v4766
    %v4839 = vpop.f32.mrb[0].mxu0
    %v4840 = vadd.f32 %v4760, %v4839
    %v4841 = vpop.f32.mrb[0].mxu0
    %4842 = vdwg.mxu0
    %s4843 = scalar_lea.vmem %s20, 1
    %v4844 = vld [vmem:[%s4843] sm:$0x1]
    %s4845 = scalar_lea.vmem [#allocation13], 1
    %v4846 = vld [vmem:[%s4845] sm:$0x1]
    %v4847 = vadd.f32 %v4835, %v4647
    %v4848 = vadd.f32 %v4840, %v4648
    %v4849 = vsel %vm363, %v4847, 0.0
    %4850 = vadd.xlane.f32.xlu0 %v4849
    %v4851 = vpop.xlane.xlu0 %4850
    %v4852 = vsel %vm363, %v4848, 0.0
    %4853 = vadd.xlane.f32.xlu0 %v4852
    %v4854 = vpop.xlane.xlu0 %4853
    %v4855 = vmul.f32 %v4851, %v1595
    %v4856 = vmul.f32 %v4854, %v1595
    %v4857 = vsub.f32 %v4847, %v4855
    %v4858 = vsub.f32 %v4848, %v4856
    %v4859 = vmul.f32 %v4857, %v4857
    %v4860 = vmul.f32 %v4858, %v4858
    %v4861 = vsel %vm363, %v4859, 0.0
    %4862 = vadd.xlane.f32.xlu0 %v4861
    %v4863 = vpop.xlane.xlu0 %4862
    %v4864 = vsel %vm363, %v4860, 0.0
    %4865 = vadd.xlane.f32.xlu0 %v4864
    %v4866 = vpop.xlane.xlu0 %4865
    %v4867 = vmul.f32 %v4863, %v1595
    %v4868 = vmul.f32 %v4866, %v1595
    %v4869 = vadd.f32 %v4867, 1e-05
    %v4870 = vadd.f32 %v4868, 1e-05
    %v4871 = vrsqrt.pop %v4869
    %v4872 = vrsqrt.pop %v4870
    %v4873 = vmul.f32 %v4857, %v4871
    %v4874 = vmul.f32 %v4858, %v4872
    %v4876 = vlaneseq
    %v4877 = vshrl.u32 %v4876, 7
    %v4878 = vsub.s32 0, %v4877
    %v4879 = vrot.slane %v4844, %v4878
    %v4881 = vmul.f32 %v4873, %v4879
    %v4882 = vmul.f32 %v4874, %v4879
    %v4884 = vlaneseq
    %v4885 = vshrl.u32 %v4884, 7
    %v4886 = vsub.s32 0, %v4885
    %v4887 = vrot.slane %v4846, %v4886
    %v4889 = vadd.f32 %v4881, %v4887
    %v4890 = vadd.f32 %v4882, %v4887
    %v4891 = vld [vmem:[#allocation18] sm:$0xff]
    %v4892 = vld [vmem:[#allocation18 + $0x8] sm:$0xff]
    %v4893 = vld [vmem:[#allocation18 + $0x10] sm:$0xff]
    %v4894 = vld [vmem:[#allocation18 + $0x18] sm:$0xff]
    %v4895 = vld [vmem:[#allocation19] sm:$0x1]
    %v4897 = vlaneseq
    %v4898 = vshrl.u32 %v4897, 7
    %v4899 = vsub.s32 0, %v4898
    %v4900 = vrot.slane %v4895, %v4899
    %v4903 = vsel %vm363, %v4889, 0
    %v4906 = vsel %vm363, %v4890, 0
    %4908 = vmatprep.subr.mxu0 0.0
    %4909 = vmatpush1.msra.mxu0 %v4891
    %4910 = vmatprep.subr.mxu0 0.0
    %4911 = vmatpush1.msra.mxu0 %v4892
    %4912 = vmatprep.subr.mxu0 0.0
    %4913 = vmatpush1.msra.mxu0 %v4893
    %4914 = vmatprep.subr.mxu0 0.0
    %4915 = vmatpush1.msra.mxu0 %v4894
    %4916 = vmatprep.subr.mxu0 0.0
    %4917 = vmatpush1.msra.mxu0 0.0
    %4918 = vmatprep.subr.mxu0 0.0
    %4919 = vmatpush1.msra.mxu0 0.0
    %4920 = vmatprep.subr.mxu0 0.0
    %4921 = vmatpush1.msra.mxu0 0.0
    %4922 = vmatprep.subr.mxu0 0.0
    %4923 = vmatpush1.msra.mxu0 0.0
    %4924 = vmatprep.subr.mxu0 0.0
    %4925 = vmatpush1.msra.mxu0 0.0
    %4926 = vmatprep.subr.mxu0 0.0
    %4927 = vmatpush1.msra.mxu0 0.0
    %4928 = vmatprep.subr.mxu0 0.0
    %4929 = vmatpush1.msra.mxu0 0.0
    %4930 = vmatprep.subr.mxu0 0.0
    %4931 = vmatpush1.msra.mxu0 0.0
    %4932 = vmatprep.subr.mxu0 0.0
    %4933 = vmatpush1.msra.mxu0 0.0
    %4934 = vmatprep.subr.mxu0 0.0
    %4935 = vmatpush1.msra.mxu0 0.0
    %4936 = vmatprep.subr.mxu0 0.0
    %4937 = vmatpush1.msra.mxu0 0.0
    %4938 = vmatprep.subr.mxu0 0.0
    %4939 = vmatpush1.msra.mxu0 0.0
    %4940 = vmatprep.subr.mxu0 0.0
    %4941 = vmatpush1.msra.mxu0 0.0
    %4942 = vmatprep.subr.mxu0 0.0
    %4943 = vmatpush1.msra.mxu0 0.0
    %4944 = vmatprep.subr.mxu0 0.0
    %4945 = vmatpush1.msra.mxu0 0.0
    %4946 = vmatprep.subr.mxu0 0.0
    %4947 = vmatpush1.msra.mxu0 0.0
    %4948 = vmatprep.subr.mxu0 0.0
    %4949 = vmatpush1.msra.mxu0 0.0
    %4950 = vmatprep.subr.mxu0 0.0
    %4951 = vmatpush1.msra.mxu0 0.0
    %4952 = vmatprep.subr.mxu0 0.0
    %4953 = vmatpush1.msra.mxu0 0.0
    %4954 = vmatprep.subr.mxu0 0.0
    %4955 = vmatpush1.msra.mxu0 0.0
    %4956 = vmatprep.subr.mxu0 0.0
    %4957 = vmatpush1.msra.mxu0 0.0
    %4958 = vmatprep.subr.mxu0 0.0
    %4959 = vmatpush1.msra.mxu0 0.0
    %4960 = vmatprep.subr.mxu0 0.0
    %4961 = vmatpush1.msra.mxu0 0.0
    %4962 = vmatprep.subr.mxu0 0.0
    %4963 = vmatpush1.msra.mxu0 0.0
    %4964 = vmatprep.subr.mxu0 0.0
    %4965 = vmatpush1.msra.mxu0 0.0
    %4966 = vmatprep.subr.mxu0 0.0
    %4967 = vmatpush1.msra.mxu0 0.0
    %4968 = vmatprep.subr.mxu0 0.0
    %4969 = vmatpush1.msra.mxu0 0.0
    %4970 = vmatprep.subr.mxu0 0.0
    %4971 = vmatpush1.msra.mxu0 0.0
    %4972 = vmatprep.mubr.f32.mxu0 0.0
    %4973 = vmatmul.mubr.f32.gmra.mrb[0].mxu0 %v4903
    %v4974 = vpop.f32.mrb[0].mxu0
    %v4975 = vadd.f32 %v4900, %v4974
    %v4976 = vpop.f32.mrb[0].mxu0
    %4977 = vmatprep.mubr.f32.mxu0 0.0
    %4978 = vmatmul.mubr.f32.gmra.mrb[0].mxu0 %v4906
    %v4979 = vpop.f32.mrb[0].mxu0
    %v4980 = vadd.f32 %v4900, %v4979
    %v4981 = vpop.f32.mrb[0].mxu0
    %4982 = vdwg.mxu0
    %4983 = vst [vmem:[%s28] sm:$0xff] %v4975
    %4984 = vst [vmem:[%s28 + $0x8] sm:$0xff] %v4980
    // Predicated region
    $region162: #{decoder_forward.1} parent=1 // pred_check
      _
    $region163: #{decoder_forward.1} parent=1 // pred_check_branch
      %4986 = sbr.rel (0) target = $region165
    $region164: #{decoder_forward.1} parent=1 // pred_region
      _
    $region165: #{decoder_forward.1} parent=1 // pred_fallthru
      _
    // Predicated region
    $region166: #{decoder_forward.1} parent=1 // pred_check
      _
    $region167: #{decoder_forward.1} parent=1 // pred_check_branch
      %4988 = sbr.rel (0) target = $region169
    $region168: #{decoder_forward.1} parent=1 // pred_region
      _
    $region169: #{decoder_forward.1} parent=1 // pred_fallthru
      _
    %4989 = vsyncpa [#allocation3], 1
    %4990 = vsyncpa [#allocation5], 1
    %4991 = vsyncpa [#allocation8], 1
    %4992 = vsyncpa [#allocation11], 1
    %4993 = vsyncpa [#allocation14], 1
    %4994 = vsyncpa [#allocation17], 1
    %4995 = vsyncpa [#allocation20], 1

</llo_original>
